<compile_context>
chip_gen: v7x
topology: tpu7x:2x2x1
jax: 0.10.0
libtpu: 0.0.40
codegen_flags: <defaults>
</compile_context>

<pallas_src>
from functools import partial

import jax
import jax.numpy as jnp
from jax.experimental import pallas as pl
from jax.experimental.pallas import tpu as pltpu


def _relu(x):
    return jnp.maximum(x, 0.0)


# ----------------------------------------------------------------------------
# Kernel: whole forward pass for one batch tile, all operands resident in VMEM.
# ----------------------------------------------------------------------------
def cnn_kernel(x_ref,              # (TB, C*28*28)  bf16 flattened NCHW image tile
               w1_ref, b1_ref,     # (C*28*28, 32) bf16 / (1, 32) f32
               w2_ref, b2_ref,     # (32, 32) f32     / (1, 32) f32
               w3_ref, b3_ref,     # (32, 64) f32     / (1, 64) f32
               w45_ref, b45_ref,   # (64, NCP) f32    / (1, NCP) f32  (fused Linear x Linear)
               o_ref):             # (TB, NCP) f32
    # conv1 (28x28 full-image conv == matmul), bf16 inputs, f32 accumulation.
    # Dropout -> identity (eval mode).
    h = _relu(jnp.dot(x_ref[...], w1_ref[...],
                      preferred_element_type=jnp.float32) + b1_ref[...])
    # conv2 (1x1 conv on 1x1 spatial == matmul) + ReLU.  Dropout -> identity.
    h = _relu(jnp.dot(h, w2_ref[...],
                      preferred_element_type=jnp.float32) + b2_ref[...])
    # conv3 (1x1 conv) + ReLU
    h = _relu(jnp.dot(h, w3_ref[...],
                      preferred_element_type=jnp.float32) + b3_ref[...])
    # flatten is a no-op (already (TB, 64)); the two Linear layers have no
    # activation between them, so they were folded into a single matmul.
    o_ref[...] = jnp.dot(h, w45_ref[...],
                         preferred_element_type=jnp.float32) + b45_ref[...]


# ----------------------------------------------------------------------------
# One-time parameter preparation (hoisted out of the per-call forward path).
# ----------------------------------------------------------------------------
def prepare_params(params):
    """Transpose weights to (K_in, K_out), fold the two Linear layers, cast the
    dominant conv1 weight to bf16, and pad the output dim to a lane-dense
    multiple of 128.  Call once; reuse the result for every forward."""
    (w1, b1, w2, b2, w3, b3, w4, b4, w5, b5) = params
    num_classes = w5.shape[0]

    w1p = w1.reshape(32, -1).T.astype(jnp.bfloat16)    # (C*784, 32) bf16
    b1p = b1.reshape(1, -1).astype(jnp.float32)
    w2p = w2.reshape(32, 32).T.astype(jnp.float32)     # 1x1 conv
    b2p = b2.reshape(1, -1).astype(jnp.float32)
    w3p = w3.reshape(64, 32).T.astype(jnp.float32)     # 1x1 conv
    b3p = b3.reshape(1, -1).astype(jnp.float32)

    # Fold Linear(64,20) and Linear(20,classes):  (h @ w4.T + b4) @ w5.T + b5
    #   = h @ (w4.T @ w5.T) + (b4 @ w5.T + b5)
    w45 = (w4.T @ w5.T).astype(jnp.float32)            # (64, num_classes)
    b45 = (b4 @ w5.T + b5).astype(jnp.float32)         # (num_classes,)

    # Pad logits dim to a multiple of 128 so output stores are lane-dense.
    pad = (-num_classes) % 128
    w45p = jnp.pad(w45, ((0, 0), (0, pad)))
    b45p = jnp.pad(b45, (0, pad)).reshape(1, -1)

    prepared = tuple(jax.device_put(a)
                     for a in (w1p, b1p, w2p, b2p, w3p, b3p, w45p, b45p))
    return prepared, num_classes


# ----------------------------------------------------------------------------
# Forward wrapper: batch-tiled, pipelined pallas_call.
# ----------------------------------------------------------------------------
def cnn_forward(x_nchw, prepared, num_classes, *, tb=128):
    """x_nchw: (B, C, 28, 28) float32.  Returns (B, num_classes) float32."""
    (w1p, b1p, w2p, b2p, w3p, b3p, w45p, b45p) = prepared
    B, C, H, W = x_nchw.shape
    k1 = C * H * W                       # 28*28*C, matches (O, C, kH, kW) flatten
    ncp = w45p.shape[1]                  # padded (lane-dense) logits width

    # Flatten NCHW row-major and cast to bf16 for the conv1 GEMM.
    x_flat = x_nchw.reshape(B, k1).astype(jnp.bfloat16)

    # Pad batch up to a multiple of the tile size (f32 sublane-friendly).
    bp = ((B + tb - 1) // tb) * tb
    if bp != B:
        x_flat = jnp.pad(x_flat, ((0, bp - B), (0, 0)))
    nb = bp // tb

    grid_spec = pltpu.PrefetchScalarGridSpec(
        num_scalar_prefetch=0,
        grid=(nb,),
        in_specs=[
            pl.BlockSpec((tb, k1), lambda i: (i, 0)),    # x: streamed per tile
            pl.BlockSpec((k1, 32), lambda i: (0, 0)),    # w1 (bf16, resident)
            pl.BlockSpec((1, 32), lambda i: (0, 0)),     # b1
            pl.BlockSpec((32, 32), lambda i: (0, 0)),    # w2
            pl.BlockSpec((1, 32), lambda i: (0, 0)),     # b2
            pl.BlockSpec((32, 64), lambda i: (0, 0)),    # w3
            pl.BlockSpec((1, 64), lambda i: (0, 0)),     # b3
            pl.BlockSpec((64, ncp), lambda i: (0, 0)),   # fused w4@w5
            pl.BlockSpec((1, ncp), lambda i: (0, 0)),    # fused bias
        ],
        out_specs=pl.BlockSpec((tb, ncp), lambda i: (i, 0)),
    )

    flops = 2 * bp * (k1 * 32 + 32 * 32 + 32 * 64 + 64 * ncp)
    bytes_accessed = (bp * k1 * 2                # x (bf16)
                      + k1 * 32 * 2              # w1 (bf16)
                      + (32 * 32 + 32 * 64 + 64 * ncp + 32 + 32 + 64 + ncp) * 4
                      + bp * ncp * 4)            # output (f32)

    out = pl.pallas_call(
        cnn_kernel,
        out_shape=jax.ShapeDtypeStruct((bp, ncp), jnp.float32),
        grid_spec=grid_spec,
        compiler_params=pltpu.CompilerParams(
            dimension_semantics=("parallel",)),   # shards batch across v7x TCs
        cost_estimate=pl.CostEstimate(
            flops=flops, transcendentals=0, bytes_accessed=bytes_accessed),
    )(x_flat, w1p, b1p, w2p, b2p, w3p, b3p, w45p, b45p)

    return out[:B, :num_classes]


# ----------------------------------------------------------------------------
# Params init (PyTorch-style) and pure-JAX reference.
# ----------------------------------------------------------------------------
def init_params(key, in_channels, output_classes):
    def uni(k, shape, fan_in):
        bound = 1.0 / (fan_in ** 0.5)
        return jax.random.uniform(k, shape, jnp.float32, -bound, bound)

    ks = jax.random.split(key, 10)
    fan1 = in_channels * 28 * 28
    w1 = uni(ks[0], (32, in_channels, 28, 28), fan1); b1 = uni(ks[1], (32,), fan1)
    w2 = uni(ks[2], (32, 32, 1, 1), 32);              b2 = uni(ks[3], (32,), 32)
    w3 = uni(ks[4], (64, 32, 1, 1), 32);              b3 = uni(ks[5], (64,), 32)
    w4 = uni(ks[6], (20, 64), 64);                    b4 = uni(ks[7], (20,), 64)
    w5 = uni(ks[8], (output_classes, 20), 20);        b5 = uni(ks[9], (output_classes,), 20)
    return (w1, b1, w2, b2, w3, b3, w4, b4, w5, b5)


def reference_forward(x_nchw, params):
    """Pure-JAX f32 reference of the PyTorch forward (eval mode, unfused)."""
    (w1, b1, w2, b2, w3, b3, w4, b4, w5, b5) = params
    B = x_nchw.shape[0]
    h = _relu(x_nchw.reshape(B, -1) @ w1.reshape(32, -1).T + b1)
    h = _relu(h @ w2.reshape(32, 32).T + b2)
    h = _relu(h @ w3.reshape(64, 32).T + b3)
    h = h @ w4.T + b4
    return h @ w5.T + b5


if __name__ == "__main__":
    # TODO(synk): Dropout is implemented as eval-mode identity (no RNG masking).
    B, C_IN, NUM_CLASSES = 256, 4, 10   # B >= tile(128) so the grid pipelines

    key = jax.random.PRNGKey(0)
    k_x, k_p = jax.random.split(key)
    x = jax.random.normal(k_x, (B, C_IN, 28, 28), jnp.float32)  # NCHW, 28x28 required
    params = init_params(k_p, C_IN, NUM_CLASSES)

    # One-time param preparation (transposes / folding / bf16 cast / padding).
    prepared, num_classes = prepare_params(params)

    fwd = jax.jit(partial(cnn_forward, num_classes=num_classes, tb=128))
    out = fwd(x, prepared)
    out = jax.block_until_ready(out)

    ref = reference_forward(x, params)
    assert out.shape == (B, NUM_CLASSES)
    # Tolerance loosened for the bf16 conv1 GEMM (f32 accumulation keeps the
    # error at the ~1e-3 level).
    assert jnp.allclose(out, ref, atol=2e-2, rtol=2e-2), "mismatch vs reference"

    print("KERNEL_OK")
</pallas_src>

<mosaic_0001>
module attributes {stable_mosaic.version = 11 : i64} {
  func.func @cnn_kernel(%arg0: i32, %arg1: memref<128x3136xbf16, #tpu.memory_space<vmem>>, %arg2: memref<3136x32xbf16, #tpu.memory_space<vmem>>, %arg3: memref<1x32xf32, #tpu.memory_space<vmem>>, %arg4: memref<32x32xf32, #tpu.memory_space<vmem>>, %arg5: memref<1x32xf32, #tpu.memory_space<vmem>>, %arg6: memref<32x64xf32, #tpu.memory_space<vmem>>, %arg7: memref<1x64xf32, #tpu.memory_space<vmem>>, %arg8: memref<64x128xf32, #tpu.memory_space<vmem>>, %arg9: memref<1x128xf32, #tpu.memory_space<vmem>>, %arg10: memref<128x128xf32, #tpu.memory_space<vmem>>) attributes {dimension_semantics = [#tpu.dimension_semantics<parallel>], iteration_bounds = array<i64: 2>, scalar_prefetch = 0 : i64, scratch_operands = 0 : i64, tpu.core_type = #tpu.core_type<tc>, window_params = [{transform_indices = @transform_0, window_bounds = array<i64: 128, 3136>}, {pipeline_mode = #tpu.pipeline_mode<synchronous>, transform_indices = @transform_1, window_bounds = array<i64: 3136, 32>}, {pipeline_mode = #tpu.pipeline_mode<synchronous>, transform_indices = @transform_2, window_bounds = array<i64: 1, 32>}, {pipeline_mode = #tpu.pipeline_mode<synchronous>, transform_indices = @transform_3, window_bounds = array<i64: 32, 32>}, {pipeline_mode = #tpu.pipeline_mode<synchronous>, transform_indices = @transform_4, window_bounds = array<i64: 1, 32>}, {pipeline_mode = #tpu.pipeline_mode<synchronous>, transform_indices = @transform_5, window_bounds = array<i64: 32, 64>}, {pipeline_mode = #tpu.pipeline_mode<synchronous>, transform_indices = @transform_6, window_bounds = array<i64: 1, 64>}, {pipeline_mode = #tpu.pipeline_mode<synchronous>, transform_indices = @transform_7, window_bounds = array<i64: 64, 128>}, {pipeline_mode = #tpu.pipeline_mode<synchronous>, transform_indices = @transform_8, window_bounds = array<i64: 1, 128>}, {transform_indices = @transform_9, window_bounds = array<i64: 128, 128>}]} {
    %c0 = arith.constant 0 : index
    %c0_0 = arith.constant 0 : index
    %0 = vector.load %arg1[%c0, %c0_0] : memref<128x3136xbf16, #tpu.memory_space<vmem>>, vector<128x3136xbf16>
    %c0_1 = arith.constant 0 : index
    %c0_2 = arith.constant 0 : index
    %1 = vector.load %arg2[%c0_1, %c0_2] : memref<3136x32xbf16, #tpu.memory_space<vmem>>, vector<3136x32xbf16>
    %cst = arith.constant dense<0.000000e+00> : vector<128x32xf32>
    %2 = tpu.matmul %0, %1, %cst {dimension_numbers = #tpu.dot_dimension_numbers<[1], [0], [0], [1], [0, 0, 1, 1], [], []>} : vector<128x3136xbf16>, vector<3136x32xbf16>, vector<128x32xf32> -> vector<128x32xf32>
    %c0_3 = arith.constant 0 : index
    %c0_4 = arith.constant 0 : index
    %3 = vector.load %arg3[%c0_3, %c0_4] : memref<1x32xf32, #tpu.memory_space<vmem>>, vector<1x32xf32>
    %4 = vector.broadcast %3 : vector<1x32xf32> to vector<128x32xf32>
    %5 = arith.addf %2, %4 : vector<128x32xf32>
    %cst_5 = arith.constant 0.000000e+00 : f32
    %6 = vector.broadcast %cst_5 : f32 to vector<128x32xf32>
    %7 = arith.maximumf %5, %6 : vector<128x32xf32>
    %c0_6 = arith.constant 0 : index
    %c0_7 = arith.constant 0 : index
    %8 = vector.load %arg4[%c0_6, %c0_7] : memref<32x32xf32, #tpu.memory_space<vmem>>, vector<32x32xf32>
    %cst_8 = arith.constant dense<0.000000e+00> : vector<128x32xf32>
    %9 = tpu.matmul %7, %8, %cst_8 {dimension_numbers = #tpu.dot_dimension_numbers<[1], [0], [0], [1], [0, 0, 1, 1], [], []>} : vector<128x32xf32>, vector<32x32xf32>, vector<128x32xf32> -> vector<128x32xf32>
    %c0_9 = arith.constant 0 : index
    %c0_10 = arith.constant 0 : index
    %10 = vector.load %arg5[%c0_9, %c0_10] : memref<1x32xf32, #tpu.memory_space<vmem>>, vector<1x32xf32>
    %11 = vector.broadcast %10 : vector<1x32xf32> to vector<128x32xf32>
    %12 = arith.addf %9, %11 : vector<128x32xf32>
    %cst_11 = arith.constant 0.000000e+00 : f32
    %13 = vector.broadcast %cst_11 : f32 to vector<128x32xf32>
    %14 = arith.maximumf %12, %13 : vector<128x32xf32>
    %c0_12 = arith.constant 0 : index
    %c0_13 = arith.constant 0 : index
    %15 = vector.load %arg6[%c0_12, %c0_13] : memref<32x64xf32, #tpu.memory_space<vmem>>, vector<32x64xf32>
    %cst_14 = arith.constant dense<0.000000e+00> : vector<128x64xf32>
    %16 = tpu.matmul %14, %15, %cst_14 {dimension_numbers = #tpu.dot_dimension_numbers<[1], [0], [0], [1], [0, 0, 1, 1], [], []>} : vector<128x32xf32>, vector<32x64xf32>, vector<128x64xf32> -> vector<128x64xf32>
    %c0_15 = arith.constant 0 : index
    %c0_16 = arith.constant 0 : index
    %17 = vector.load %arg7[%c0_15, %c0_16] : memref<1x64xf32, #tpu.memory_space<vmem>>, vector<1x64xf32>
    %18 = vector.broadcast %17 : vector<1x64xf32> to vector<128x64xf32>
    %19 = arith.addf %16, %18 : vector<128x64xf32>
    %cst_17 = arith.constant 0.000000e+00 : f32
    %20 = vector.broadcast %cst_17 : f32 to vector<128x64xf32>
    %21 = arith.maximumf %19, %20 : vector<128x64xf32>
    %c0_18 = arith.constant 0 : index
    %c0_19 = arith.constant 0 : index
    %22 = vector.load %arg8[%c0_18, %c0_19] : memref<64x128xf32, #tpu.memory_space<vmem>>, vector<64x128xf32>
    %cst_20 = arith.constant dense<0.000000e+00> : vector<128x128xf32>
    %23 = tpu.matmul %21, %22, %cst_20 {dimension_numbers = #tpu.dot_dimension_numbers<[1], [0], [0], [1], [0, 0, 1, 1], [], []>} : vector<128x64xf32>, vector<64x128xf32>, vector<128x128xf32> -> vector<128x128xf32>
    %c0_21 = arith.constant 0 : index
    %c0_22 = arith.constant 0 : index
    %24 = vector.load %arg9[%c0_21, %c0_22] : memref<1x128xf32, #tpu.memory_space<vmem>>, vector<1x128xf32>
    %25 = vector.broadcast %24 : vector<1x128xf32> to vector<128x128xf32>
    %26 = arith.addf %23, %25 : vector<128x128xf32>
    %c0_23 = arith.constant 0 : index
    %c0_24 = arith.constant 0 : index
    %27 = vector.load %arg10[%c0_23, %c0_24] : memref<128x128xf32, #tpu.memory_space<vmem>>, vector<128x128xf32>
    tpu.vector_store %arg10[%c0_23, %c0_24], %26 {strides = array<i32>} : memref<128x128xf32, #tpu.memory_space<vmem>>, vector<128x128xf32>,
    return
  }
  func.func @transform_0(%arg0: i32) -> (i32, i32) {
    %c0_i32 = arith.constant 0 : i32
    %c0_i32_0 = arith.constant 0 : i32
    return %arg0, %c0_i32 : i32, i32
  }
  func.func @transform_1(%arg0: i32) -> (i32, i32) {
    %c0_i32 = arith.constant 0 : i32
    %c0_i32_0 = arith.constant 0 : i32
    %c0_i32_1 = arith.constant 0 : i32
    return %c0_i32, %c0_i32_0 : i32, i32
  }
  func.func @transform_2(%arg0: i32) -> (i32, i32) {
    %c0_i32 = arith.constant 0 : i32
    %c0_i32_0 = arith.constant 0 : i32
    %c0_i32_1 = arith.constant 0 : i32
    return %c0_i32, %c0_i32_0 : i32, i32
  }
  func.func @transform_3(%arg0: i32) -> (i32, i32) {
    %c0_i32 = arith.constant 0 : i32
    %c0_i32_0 = arith.constant 0 : i32
    %c0_i32_1 = arith.constant 0 : i32
    return %c0_i32, %c0_i32_0 : i32, i32
  }
  func.func @transform_4(%arg0: i32) -> (i32, i32) {
    %c0_i32 = arith.constant 0 : i32
    %c0_i32_0 = arith.constant 0 : i32
    %c0_i32_1 = arith.constant 0 : i32
    return %c0_i32, %c0_i32_0 : i32, i32
  }
  func.func @transform_5(%arg0: i32) -> (i32, i32) {
    %c0_i32 = arith.constant 0 : i32
    %c0_i32_0 = arith.constant 0 : i32
    %c0_i32_1 = arith.constant 0 : i32
    return %c0_i32, %c0_i32_0 : i32, i32
  }
  func.func @transform_6(%arg0: i32) -> (i32, i32) {
    %c0_i32 = arith.constant 0 : i32
    %c0_i32_0 = arith.constant 0 : i32
    %c0_i32_1 = arith.constant 0 : i32
    return %c0_i32, %c0_i32_0 : i32, i32
  }
  func.func @transform_7(%arg0: i32) -> (i32, i32) {
    %c0_i32 = arith.constant 0 : i32
    %c0_i32_0 = arith.constant 0 : i32
    %c0_i32_1 = arith.constant 0 : i32
    return %c0_i32, %c0_i32_0 : i32, i32
  }
  func.func @transform_8(%arg0: i32) -> (i32, i32) {
    %c0_i32 = arith.constant 0 : i32
    %c0_i32_0 = arith.constant 0 : i32
    %c0_i32_1 = arith.constant 0 : i32
    return %c0_i32, %c0_i32_0 : i32, i32
  }
  func.func @transform_9(%arg0: i32) -> (i32, i32) {
    %c0_i32 = arith.constant 0 : i32
    %c0_i32_0 = arith.constant 0 : i32
    return %arg0, %c0_i32 : i32, i32
  }
}

</mosaic_0001>

<llo_original>
// kernel: cnn_forward.1
$region0: #{cnn_forward.1}
  #allocation0 [shape = 'u32[]', space=smem, size = 0x4, offset = 0x4, fixed_abs, tag = 'smem constant byte address 0x4 - core index']
  #allocation1 [shape = 'u32[144,128]{1,0:T(1,128)}', space=vmem, size = 0x12000, scoped, tag = 'internal scratch']
  %s0 = inlined_call_operand.vmem [shape: bf16[256,3136], index: 0, kind: input, shape index: {}]
  %s1 = inlined_call_operand.vmem [shape: bf16[3136,32], index: 1, kind: input, shape index: {}]
  %s2 = inlined_call_operand.vmem [shape: f32[1,32], index: 2, kind: input, shape index: {}]
  %s3 = inlined_call_operand.vmem [shape: f32[32,32], index: 3, kind: input, shape index: {}]
  %s4 = inlined_call_operand.vmem [shape: f32[1,32], index: 4, kind: input, shape index: {}]
  %s5 = inlined_call_operand.vmem [shape: f32[32,64], index: 5, kind: input, shape index: {}]
  %s6 = inlined_call_operand.vmem [shape: f32[1,64], index: 6, kind: input, shape index: {}]
  %s7 = inlined_call_operand.vmem [shape: f32[64,128], index: 7, kind: input, shape index: {}]
  %s8 = inlined_call_operand.vmem [shape: f32[1,128], index: 8, kind: input, shape index: {}]
  %s9 = inlined_call_operand.vmem [shape: f32[256,128], index: 9, kind: output, shape index: {}]
  %s10 = sld [smem:[#allocation0]]
  $region69: #{cnn_forward.1} parent=0
    _
  %s12 = ssub.s32 1, %s10
  %s13 = scalar_select 0, %s12, %s10
  loop: start=0, step=1, limit=4
  $region2: #{cnn_forward.1} parent=0 // loop_pre_header
    _
  $region3: #{cnn_forward.1} parent=0 // loop_header
    %s15 = sphi 0, %s19
    %p16 = scmp.ge.s32.totalorder %s15, 4
    %s25 = sphi 0, %s27
    %s28 = sphi 0, %s25
    %s29 = sphi 0, %s28
    %s45 = sphi 0, %s29
    %s49 = sphi 0, %s49
    %s51 = sphi 0, %s49
    %s52 = sphi 0, %s51
    %s66 = sphi 0, %s52
    %s70 = sphi 0, %s70
    %s72 = sphi 0, %s70
    %s73 = sphi 0, %s72
    %s87 = sphi 0, %s73
    %s91 = sphi 0, %s91
    %s93 = sphi 0, %s91
    %s94 = sphi 0, %s93
    %s108 = sphi 0, %s94
    %s112 = sphi 0, %s112
    %s114 = sphi 0, %s112
    %s115 = sphi 0, %s114
    %s129 = sphi 0, %s115
    %s133 = sphi 0, %s133
    %s135 = sphi 0, %s133
    %s136 = sphi 0, %s135
    %s150 = sphi 0, %s136
    %s154 = sphi 0, %s154
    %s156 = sphi 0, %s154
    %s157 = sphi 0, %s156
    %s171 = sphi 0, %s157
    %s175 = sphi 0, %s175
    %s177 = sphi 0, %s175
    %s178 = sphi 0, %s177
    %s192 = sphi 0, %s178
    %s196 = sphi 0, %s196
    %s198 = sphi 0, %s196
    %s199 = sphi 0, %s198
    %s213 = sphi 0, %s199
    %s219 = sphi 0, %s221
    %s222 = sphi 0, %s219
    %s223 = sphi 0, %s222
    %s239 = sphi 0, %s223
  $region4: #{cnn_forward.1} parent=0 // loop_header_branch
    %18 = sbr.rel (%p16) target = $region8
  $region5: #{cnn_forward.1} parent=0 // loop_body
    %s20 = ssub.s32 %s15, 1
    %s21 = ssub.s32 %s15, 2
    %s22 = sadd.s32 %s15, 1
    %s23 = ssub.s32 %s15, %s22
    %p24 = scmp.eq.s32.totalorder %s23, 0
    %s26 = sadd.s32 %s25, 1
    %s27 = scalar_select %p24, %s25, %s26
    %p30 = pneg %p24
    %p31 = scmp.eq.s32.totalorder %s15, 1
    %p32 = por %p30, %p31
    %p33 = scmp.ne.s32.totalorder %s25, %s28
    %p34 = scmp.eq.s32.totalorder %s15, 0
    %p35 = por %p33, %p34
    %p36 = scmp.ne.s32.totalorder %s25, %s28
    %p37 = scmp.eq.s32.totalorder %s20, 1
    %p38 = por %p36, %p37
    %p39 = scmp.ne.s32.totalorder %s28, %s29
    %p40 = scmp.eq.s32.totalorder %s20, 0
    %p41 = por %p39, %p40
    %p42 = scmp.ne.s32.totalorder %s28, %s29
    %p43 = scmp.eq.s32.totalorder %s21, 1
    %p44 = por %p42, %p43
    %p46 = scmp.ne.s32.totalorder %s29, %s45
    %p47 = scmp.eq.s32.totalorder %s21, 0
    %p48 = por %p46, %p47
    %s50 = sadd.s32 %s49, 1
    %p53 = scmp.eq.s32.totalorder %s15, 1
    %p54 = scmp.ne.s32.totalorder %s49, %s51
    %p55 = scmp.eq.s32.totalorder %s15, 0
    %p56 = por %p54, %p55
    %p57 = scmp.ne.s32.totalorder %s49, %s51
    %p58 = scmp.eq.s32.totalorder %s20, 1
    %p59 = por %p57, %p58
    %p60 = scmp.ne.s32.totalorder %s51, %s52
    %p61 = scmp.eq.s32.totalorder %s20, 0
    %p62 = por %p60, %p61
    %p63 = scmp.ne.s32.totalorder %s51, %s52
    %p64 = scmp.eq.s32.totalorder %s21, 1
    %p65 = por %p63, %p64
    %p67 = scmp.ne.s32.totalorder %s52, %s66
    %p68 = scmp.eq.s32.totalorder %s21, 0
    %p69 = por %p67, %p68
    %s71 = sadd.s32 %s70, 1
    %p74 = scmp.eq.s32.totalorder %s15, 1
    %p75 = scmp.ne.s32.totalorder %s70, %s72
    %p76 = scmp.eq.s32.totalorder %s15, 0
    %p77 = por %p75, %p76
    %p78 = scmp.ne.s32.totalorder %s70, %s72
    %p79 = scmp.eq.s32.totalorder %s20, 1
    %p80 = por %p78, %p79
    %p81 = scmp.ne.s32.totalorder %s72, %s73
    %p82 = scmp.eq.s32.totalorder %s20, 0
    %p83 = por %p81, %p82
    %p84 = scmp.ne.s32.totalorder %s72, %s73
    %p85 = scmp.eq.s32.totalorder %s21, 1
    %p86 = por %p84, %p85
    %p88 = scmp.ne.s32.totalorder %s73, %s87
    %p89 = scmp.eq.s32.totalorder %s21, 0
    %p90 = por %p88, %p89
    %s92 = sadd.s32 %s91, 1
    %p95 = scmp.eq.s32.totalorder %s15, 1
    %p96 = scmp.ne.s32.totalorder %s91, %s93
    %p97 = scmp.eq.s32.totalorder %s15, 0
    %p98 = por %p96, %p97
    %p99 = scmp.ne.s32.totalorder %s91, %s93
    %p100 = scmp.eq.s32.totalorder %s20, 1
    %p101 = por %p99, %p100
    %p102 = scmp.ne.s32.totalorder %s93, %s94
    %p103 = scmp.eq.s32.totalorder %s20, 0
    %p104 = por %p102, %p103
    %p105 = scmp.ne.s32.totalorder %s93, %s94
    %p106 = scmp.eq.s32.totalorder %s21, 1
    %p107 = por %p105, %p106
    %p109 = scmp.ne.s32.totalorder %s94, %s108
    %p110 = scmp.eq.s32.totalorder %s21, 0
    %p111 = por %p109, %p110
    %s113 = sadd.s32 %s112, 1
    %p116 = scmp.eq.s32.totalorder %s15, 1
    %p117 = scmp.ne.s32.totalorder %s112, %s114
    %p118 = scmp.eq.s32.totalorder %s15, 0
    %p119 = por %p117, %p118
    %p120 = scmp.ne.s32.totalorder %s112, %s114
    %p121 = scmp.eq.s32.totalorder %s20, 1
    %p122 = por %p120, %p121
    %p123 = scmp.ne.s32.totalorder %s114, %s115
    %p124 = scmp.eq.s32.totalorder %s20, 0
    %p125 = por %p123, %p124
    %p126 = scmp.ne.s32.totalorder %s114, %s115
    %p127 = scmp.eq.s32.totalorder %s21, 1
    %p128 = por %p126, %p127
    %p130 = scmp.ne.s32.totalorder %s115, %s129
    %p131 = scmp.eq.s32.totalorder %s21, 0
    %p132 = por %p130, %p131
    %s134 = sadd.s32 %s133, 1
    %p137 = scmp.eq.s32.totalorder %s15, 1
    %p138 = scmp.ne.s32.totalorder %s133, %s135
    %p139 = scmp.eq.s32.totalorder %s15, 0
    %p140 = por %p138, %p139
    %p141 = scmp.ne.s32.totalorder %s133, %s135
    %p142 = scmp.eq.s32.totalorder %s20, 1
    %p143 = por %p141, %p142
    %p144 = scmp.ne.s32.totalorder %s135, %s136
    %p145 = scmp.eq.s32.totalorder %s20, 0
    %p146 = por %p144, %p145
    %p147 = scmp.ne.s32.totalorder %s135, %s136
    %p148 = scmp.eq.s32.totalorder %s21, 1
    %p149 = por %p147, %p148
    %p151 = scmp.ne.s32.totalorder %s136, %s150
    %p152 = scmp.eq.s32.totalorder %s21, 0
    %p153 = por %p151, %p152
    %s155 = sadd.s32 %s154, 1
    %p158 = scmp.eq.s32.totalorder %s15, 1
    %p159 = scmp.ne.s32.totalorder %s154, %s156
    %p160 = scmp.eq.s32.totalorder %s15, 0
    %p161 = por %p159, %p160
    %p162 = scmp.ne.s32.totalorder %s154, %s156
    %p163 = scmp.eq.s32.totalorder %s20, 1
    %p164 = por %p162, %p163
    %p165 = scmp.ne.s32.totalorder %s156, %s157
    %p166 = scmp.eq.s32.totalorder %s20, 0
    %p167 = por %p165, %p166
    %p168 = scmp.ne.s32.totalorder %s156, %s157
    %p169 = scmp.eq.s32.totalorder %s21, 1
    %p170 = por %p168, %p169
    %p172 = scmp.ne.s32.totalorder %s157, %s171
    %p173 = scmp.eq.s32.totalorder %s21, 0
    %p174 = por %p172, %p173
    %s176 = sadd.s32 %s175, 1
    %p179 = scmp.eq.s32.totalorder %s15, 1
    %p180 = scmp.ne.s32.totalorder %s175, %s177
    %p181 = scmp.eq.s32.totalorder %s15, 0
    %p182 = por %p180, %p181
    %p183 = scmp.ne.s32.totalorder %s175, %s177
    %p184 = scmp.eq.s32.totalorder %s20, 1
    %p185 = por %p183, %p184
    %p186 = scmp.ne.s32.totalorder %s177, %s178
    %p187 = scmp.eq.s32.totalorder %s20, 0
    %p188 = por %p186, %p187
    %p189 = scmp.ne.s32.totalorder %s177, %s178
    %p190 = scmp.eq.s32.totalorder %s21, 1
    %p191 = por %p189, %p190
    %p193 = scmp.ne.s32.totalorder %s178, %s192
    %p194 = scmp.eq.s32.totalorder %s21, 0
    %p195 = por %p193, %p194
    %s197 = sadd.s32 %s196, 1
    %p200 = scmp.eq.s32.totalorder %s15, 1
    %p201 = scmp.ne.s32.totalorder %s196, %s198
    %p202 = scmp.eq.s32.totalorder %s15, 0
    %p203 = por %p201, %p202
    %p204 = scmp.ne.s32.totalorder %s196, %s198
    %p205 = scmp.eq.s32.totalorder %s20, 1
    %p206 = por %p204, %p205
    %p207 = scmp.ne.s32.totalorder %s198, %s199
    %p208 = scmp.eq.s32.totalorder %s20, 0
    %p209 = por %p207, %p208
    %p210 = scmp.ne.s32.totalorder %s198, %s199
    %p211 = scmp.eq.s32.totalorder %s21, 1
    %p212 = por %p210, %p211
    %p214 = scmp.ne.s32.totalorder %s199, %s213
    %p215 = scmp.eq.s32.totalorder %s21, 0
    %p216 = por %p214, %p215
    %s217 = ssub.s32 %s15, %s22
    %p218 = scmp.eq.s32.totalorder %s217, 0
    %s220 = sadd.s32 %s219, 1
    %s221 = scalar_select %p218, %s219, %s220
    %p224 = pneg %p218
    %p225 = scmp.eq.s32.totalorder %s15, 1
    %p226 = por %p224, %p225
    %p227 = scmp.ne.s32.totalorder %s219, %s222
    %p228 = scmp.eq.s32.totalorder %s15, 0
    %p229 = por %p227, %p228
    %p230 = scmp.ne.s32.totalorder %s219, %s222
    %p231 = scmp.eq.s32.totalorder %s20, 1
    %p232 = por %p230, %p231
    %p233 = scmp.ne.s32.totalorder %s222, %s223
    %p234 = scmp.eq.s32.totalorder %s20, 0
    %p235 = por %p233, %p234
    %p236 = scmp.ne.s32.totalorder %s222, %s223
    %p237 = scmp.eq.s32.totalorder %s21, 1
    %p238 = por %p236, %p237
    %p240 = scmp.ne.s32.totalorder %s223, %s239
    %p241 = scmp.eq.s32.totalorder %s21, 0
    %p242 = por %p240, %p241
    %p243 = scmp.le.s32.totalorder 1, %s15
    %p244 = scmp.lt.s32.totalorder %s15, 3
    %p245 = pnand %p243, %p244
    %p246 = pneg %p245
    // Predicated region
    $region9: #{cnn_forward.1} parent=5 // pred_check
      _
    $region10: #{cnn_forward.1} parent=5 // pred_check_branch
      %248 = sbr.rel (%p245) target = $region12
    $region11: #{cnn_forward.1} parent=5 // pred_region
      %s249 = ssub.s32 %s15, 1
      // Predicated region
      $region13: #{cnn_forward.1} parent=11 // pred_check
        %p250 = pneg %p62
      $region14: #{cnn_forward.1} parent=11 // pred_check_branch
        %252 = sbr.rel (%p250) target = $region16
      $region15: #{cnn_forward.1} parent=11 // pred_region
        _
      $region16: #{cnn_forward.1} parent=11 // pred_fallthru
        _
      // Predicated region
      $region17: #{cnn_forward.1} parent=11 // pred_check
        %p253 = pneg %p83
      $region18: #{cnn_forward.1} parent=11 // pred_check_branch
        %255 = sbr.rel (%p253) target = $region20
      $region19: #{cnn_forward.1} parent=11 // pred_region
        _
      $region20: #{cnn_forward.1} parent=11 // pred_fallthru
        _
      // Predicated region
      $region21: #{cnn_forward.1} parent=11 // pred_check
        %p256 = pneg %p104
      $region22: #{cnn_forward.1} parent=11 // pred_check_branch
        %258 = sbr.rel (%p256) target = $region24
      $region23: #{cnn_forward.1} parent=11 // pred_region
        _
      $region24: #{cnn_forward.1} parent=11 // pred_fallthru
        _
      // Predicated region
      $region25: #{cnn_forward.1} parent=11 // pred_check
        %p259 = pneg %p125
      $region26: #{cnn_forward.1} parent=11 // pred_check_branch
        %261 = sbr.rel (%p259) target = $region28
      $region27: #{cnn_forward.1} parent=11 // pred_region
        _
      $region28: #{cnn_forward.1} parent=11 // pred_fallthru
        _
      // Predicated region
      $region29: #{cnn_forward.1} parent=11 // pred_check
        %p262 = pneg %p146
      $region30: #{cnn_forward.1} parent=11 // pred_check_branch
        %264 = sbr.rel (%p262) target = $region32
      $region31: #{cnn_forward.1} parent=11 // pred_region
        _
      $region32: #{cnn_forward.1} parent=11 // pred_fallthru
        _
      // Predicated region
      $region33: #{cnn_forward.1} parent=11 // pred_check
        %p265 = pneg %p167
      $region34: #{cnn_forward.1} parent=11 // pred_check_branch
        %267 = sbr.rel (%p265) target = $region36
      $region35: #{cnn_forward.1} parent=11 // pred_region
        _
      $region36: #{cnn_forward.1} parent=11 // pred_fallthru
        _
      // Predicated region
      $region37: #{cnn_forward.1} parent=11 // pred_check
        %p268 = pneg %p188
      $region38: #{cnn_forward.1} parent=11 // pred_check_branch
        %270 = sbr.rel (%p268) target = $region40
      $region39: #{cnn_forward.1} parent=11 // pred_region
        _
      $region40: #{cnn_forward.1} parent=11 // pred_fallthru
        _
      // Predicated region
      $region41: #{cnn_forward.1} parent=11 // pred_check
        %p271 = pneg %p209
      $region42: #{cnn_forward.1} parent=11 // pred_check_branch
        %273 = sbr.rel (%p271) target = $region44
      $region43: #{cnn_forward.1} parent=11 // pred_region
        _
      $region44: #{cnn_forward.1} parent=11 // pred_fallthru
        _
    $region12: #{cnn_forward.1} parent=5 // pred_fallthru
      _
    %p274 = scmp.lt.s32.totalorder %s15, 2
    // Predicated region
    $region45: #{cnn_forward.1} parent=5 // pred_check
      %p275 = pneg %p274
    $region46: #{cnn_forward.1} parent=5 // pred_check_branch
      %277 = sbr.rel (%p275) target = $region48
    $region47: #{cnn_forward.1} parent=5 // pred_region
      // Predicated region
      $region49: #{cnn_forward.1} parent=47 // pred_check
        %p278 = pneg %p35
      $region50: #{cnn_forward.1} parent=47 // pred_check_branch
        %280 = sbr.rel (%p278) target = $region52
      $region51: #{cnn_forward.1} parent=47 // pred_region
        %s281 = smul.u32 16, %s15
        %p282 = scmp.lt.s32.totalorder %s281, 31
        %s283 = scalar_select %p282, %s281, 31
        %s284 = smul.addr %s283, 25
        %s285 = smul.addr %s284, 4
        %s286 = scalar_lea.vmem %s0, %s285
        %s287 = smul.u32 16, %s15
      $region52: #{cnn_forward.1} parent=47 // pred_fallthru
        _
    $region48: #{cnn_forward.1} parent=5 // pred_fallthru
      _
    %p288 = scmp.le.s32.totalorder 1, %s15
    %p289 = scmp.lt.s32.totalorder %s15, 3
    %p290 = pnand %p288, %p289
    %p291 = pneg %p290
    // Predicated region
    $region53: #{cnn_forward.1} parent=5 // pred_check
      _
    $region54: #{cnn_forward.1} parent=5 // pred_check_branch
      %293 = sbr.rel (%p290) target = $region56
    $region55: #{cnn_forward.1} parent=5 // pred_region
      %s294 = ssub.s32 %s15, 1
      %s295 = smul.u32 16, %s20
      %p296 = scmp.lt.s32.totalorder %s295, 31
      %s297 = scalar_select %p296, %s295, 31
      %s298 = smul.addr %s297, 25
      %s299 = smul.addr %s298, 4
      %s300 = scalar_lea.vmem %s0, %s299
      %p301 = pneg %p41
      %p302 = pneg %p38
      %p303 = pneg %p62
      %p304 = pneg %p59
      %p305 = pneg %p83
      %p306 = pneg %p80
      %p307 = pneg %p104
      %p308 = pneg %p101
      %p309 = pneg %p125
      %p310 = pneg %p122
      %p311 = pneg %p146
      %p312 = pneg %p143
      %p313 = pneg %p167
      %p314 = pneg %p164
      %p315 = pneg %p188
      %p316 = pneg %p185
      %p317 = pneg %p209
      %p318 = pneg %p206
      %p319 = pneg %p235
      %p320 = pneg %p232
      %s321 = smul.u32 16, %s20
      %p322 = scmp.lt.s32.totalorder %s321, 31
      %s323 = scalar_select %p322, %s321, 31
      %s324 = smul.addr %s323, 8
      %s325 = scalar_lea.vmem %s9, %s324
      %s326 = smul.u32 16, %s20
      %p327 = scmp.lt.s32.totalorder %s326, 31
      %s328 = scalar_select %p327, %s326, 31
      %s329 = smul.addr %s328, 25
      %s330 = smul.addr %s329, 4
      %s331 = scalar_lea.vmem %s0, %s330
      %s332 = smul.u32 16, %s20
      %s333 = smul.u32 16, %s20
      %p334 = scmp.lt.s32.totalorder %s333, 31
      %s335 = scalar_select %p334, %s333, 31
      %s336 = smul.addr %s335, 8
      %s337 = scalar_lea.vmem %s9, %s336
      %s338 = smul.u32 16, %s20
      %v340 = vld [vmem:[%s331] sm:$0xff]
      %v341 = vld [vmem:[%s331 + $0x8] sm:$0xff]
      %v342 = vld [vmem:[%s331 + $0x10] sm:$0xff]
      %v343 = vld [vmem:[%s331 + $0x18] sm:$0xff]
      %v344 = vld [vmem:[%s331 + $0x20] sm:$0xff]
      %v345 = vld [vmem:[%s331 + $0x28] sm:$0xff]
      %v346 = vld [vmem:[%s331 + $0x30] sm:$0xff]
      %v347 = vld [vmem:[%s331 + $0x38] sm:$0xff]
      %v348 = vld [vmem:[%s331 + $0x40] sm:$0xff]
      %v349 = vld [vmem:[%s331 + $0x48] sm:$0xff]
      %v350 = vld [vmem:[%s331 + $0x50] sm:$0xff]
      %v351 = vld [vmem:[%s331 + $0x58] sm:$0xff]
      %v352 = vld [vmem:[%s331 + $0x60] sm:$0xf]
      %v353 = vld [vmem:[%s331 + $0x64] sm:$0xff]
      %v354 = vld [vmem:[%s331 + $0x6c] sm:$0xff]
      %v355 = vld [vmem:[%s331 + $0x74] sm:$0xff]
      %v356 = vld [vmem:[%s331 + $0x7c] sm:$0xff]
      %v357 = vld [vmem:[%s331 + $0x84] sm:$0xff]
      %v358 = vld [vmem:[%s331 + $0x8c] sm:$0xff]
      %v359 = vld [vmem:[%s331 + $0x94] sm:$0xff]
      %v360 = vld [vmem:[%s331 + $0x9c] sm:$0xff]
      %v361 = vld [vmem:[%s331 + $0xa4] sm:$0xff]
      %v362 = vld [vmem:[%s331 + $0xac] sm:$0xff]
      %v363 = vld [vmem:[%s331 + $0xb4] sm:$0xff]
      %v364 = vld [vmem:[%s331 + $0xbc] sm:$0xff]
      %v365 = vld [vmem:[%s331 + $0xc4] sm:$0xf]
      %v366 = vld [vmem:[%s331 + $0xc8] sm:$0xff]
      %v367 = vld [vmem:[%s331 + $0xd0] sm:$0xff]
      %v368 = vld [vmem:[%s331 + $0xd8] sm:$0xff]
      %v369 = vld [vmem:[%s331 + $0xe0] sm:$0xff]
      %v370 = vld [vmem:[%s331 + $0xe8] sm:$0xff]
      %v371 = vld [vmem:[%s331 + $0xf0] sm:$0xff]
      %v372 = vld [vmem:[%s331 + $0xf8] sm:$0xff]
      %v373 = vld [vmem:[%s331 + $0x100] sm:$0xff]
      %v374 = vld [vmem:[%s331 + $0x108] sm:$0xff]
      %v375 = vld [vmem:[%s331 + $0x110] sm:$0xff]
      %v376 = vld [vmem:[%s331 + $0x118] sm:$0xff]
      %v377 = vld [vmem:[%s331 + $0x120] sm:$0xff]
      %v378 = vld [vmem:[%s331 + $0x128] sm:$0xf]
      %v379 = vld [vmem:[%s331 + $0x12c] sm:$0xff]
      %v380 = vld [vmem:[%s331 + $0x134] sm:$0xff]
      %v381 = vld [vmem:[%s331 + $0x13c] sm:$0xff]
      %v382 = vld [vmem:[%s331 + $0x144] sm:$0xff]
      %v383 = vld [vmem:[%s331 + $0x14c] sm:$0xff]
      %v384 = vld [vmem:[%s331 + $0x154] sm:$0xff]
      %v385 = vld [vmem:[%s331 + $0x15c] sm:$0xff]
      %v386 = vld [vmem:[%s331 + $0x164] sm:$0xff]
      %v387 = vld [vmem:[%s331 + $0x16c] sm:$0xff]
      %v388 = vld [vmem:[%s331 + $0x174] sm:$0xff]
      %v389 = vld [vmem:[%s331 + $0x17c] sm:$0xff]
      %v390 = vld [vmem:[%s331 + $0x184] sm:$0xff]
      %v391 = vld [vmem:[%s331 + $0x18c] sm:$0xf]
      %v392 = vld [vmem:[%s331 + $0x190] sm:$0xff]
      %v393 = vld [vmem:[%s331 + $0x198] sm:$0xff]
      %v394 = vld [vmem:[%s331 + $0x1a0] sm:$0xff]
      %v395 = vld [vmem:[%s331 + $0x1a8] sm:$0xff]
      %v396 = vld [vmem:[%s331 + $0x1b0] sm:$0xff]
      %v397 = vld [vmem:[%s331 + $0x1b8] sm:$0xff]
      %v398 = vld [vmem:[%s331 + $0x1c0] sm:$0xff]
      %v399 = vld [vmem:[%s331 + $0x1c8] sm:$0xff]
      %v400 = vld [vmem:[%s331 + $0x1d0] sm:$0xff]
      %v401 = vld [vmem:[%s331 + $0x1d8] sm:$0xff]
      %v402 = vld [vmem:[%s331 + $0x1e0] sm:$0xff]
      %v403 = vld [vmem:[%s331 + $0x1e8] sm:$0xff]
      %v404 = vld [vmem:[%s331 + $0x1f0] sm:$0xf]
      %v405 = vld [vmem:[%s331 + $0x1f4] sm:$0xff]
      %v406 = vld [vmem:[%s331 + $0x1fc] sm:$0xff]
      %v407 = vld [vmem:[%s331 + $0x204] sm:$0xff]
      %v408 = vld [vmem:[%s331 + $0x20c] sm:$0xff]
      %v409 = vld [vmem:[%s331 + $0x214] sm:$0xff]
      %v410 = vld [vmem:[%s331 + $0x21c] sm:$0xff]
      %v411 = vld [vmem:[%s331 + $0x224] sm:$0xff]
      %v412 = vld [vmem:[%s331 + $0x22c] sm:$0xff]
      %v413 = vld [vmem:[%s331 + $0x234] sm:$0xff]
      %v414 = vld [vmem:[%s331 + $0x23c] sm:$0xff]
      %v415 = vld [vmem:[%s331 + $0x244] sm:$0xff]
      %v416 = vld [vmem:[%s331 + $0x24c] sm:$0xff]
      %v417 = vld [vmem:[%s331 + $0x254] sm:$0xf]
      %v418 = vld [vmem:[%s331 + $0x258] sm:$0xff]
      %v419 = vld [vmem:[%s331 + $0x260] sm:$0xff]
      %v420 = vld [vmem:[%s331 + $0x268] sm:$0xff]
      %v421 = vld [vmem:[%s331 + $0x270] sm:$0xff]
      %v422 = vld [vmem:[%s331 + $0x278] sm:$0xff]
      %v423 = vld [vmem:[%s331 + $0x280] sm:$0xff]
      %v424 = vld [vmem:[%s331 + $0x288] sm:$0xff]
      %v425 = vld [vmem:[%s331 + $0x290] sm:$0xff]
      %v426 = vld [vmem:[%s331 + $0x298] sm:$0xff]
      %v427 = vld [vmem:[%s331 + $0x2a0] sm:$0xff]
      %v428 = vld [vmem:[%s331 + $0x2a8] sm:$0xff]
      %v429 = vld [vmem:[%s331 + $0x2b0] sm:$0xff]
      %v430 = vld [vmem:[%s331 + $0x2b8] sm:$0xf]
      %v431 = vld [vmem:[%s331 + $0x2bc] sm:$0xff]
      %v432 = vld [vmem:[%s331 + $0x2c4] sm:$0xff]
      %v433 = vld [vmem:[%s331 + $0x2cc] sm:$0xff]
      %v434 = vld [vmem:[%s331 + $0x2d4] sm:$0xff]
      %v435 = vld [vmem:[%s331 + $0x2dc] sm:$0xff]
      %v436 = vld [vmem:[%s331 + $0x2e4] sm:$0xff]
      %v437 = vld [vmem:[%s331 + $0x2ec] sm:$0xff]
      %v438 = vld [vmem:[%s331 + $0x2f4] sm:$0xff]
      %v439 = vld [vmem:[%s331 + $0x2fc] sm:$0xff]
      %v440 = vld [vmem:[%s331 + $0x304] sm:$0xff]
      %v441 = vld [vmem:[%s331 + $0x30c] sm:$0xff]
      %v442 = vld [vmem:[%s331 + $0x314] sm:$0xff]
      %v443 = vld [vmem:[%s331 + $0x31c] sm:$0xf]
      %v444 = vld [vmem:[%s331 + $0x320] sm:$0xff]
      %v445 = vld [vmem:[%s331 + $0x328] sm:$0xff]
      %v446 = vld [vmem:[%s331 + $0x330] sm:$0xff]
      %v447 = vld [vmem:[%s331 + $0x338] sm:$0xff]
      %v448 = vld [vmem:[%s331 + $0x340] sm:$0xff]
      %v449 = vld [vmem:[%s331 + $0x348] sm:$0xff]
      %v450 = vld [vmem:[%s331 + $0x350] sm:$0xff]
      %v451 = vld [vmem:[%s331 + $0x358] sm:$0xff]
      %v452 = vld [vmem:[%s331 + $0x360] sm:$0xff]
      %v453 = vld [vmem:[%s331 + $0x368] sm:$0xff]
      %v454 = vld [vmem:[%s331 + $0x370] sm:$0xff]
      %v455 = vld [vmem:[%s331 + $0x378] sm:$0xff]
      %v456 = vld [vmem:[%s331 + $0x380] sm:$0xf]
      %v457 = vld [vmem:[%s331 + $0x384] sm:$0xff]
      %v458 = vld [vmem:[%s331 + $0x38c] sm:$0xff]
      %v459 = vld [vmem:[%s331 + $0x394] sm:$0xff]
      %v460 = vld [vmem:[%s331 + $0x39c] sm:$0xff]
      %v461 = vld [vmem:[%s331 + $0x3a4] sm:$0xff]
      %v462 = vld [vmem:[%s331 + $0x3ac] sm:$0xff]
      %v463 = vld [vmem:[%s331 + $0x3b4] sm:$0xff]
      %v464 = vld [vmem:[%s331 + $0x3bc] sm:$0xff]
      %v465 = vld [vmem:[%s331 + $0x3c4] sm:$0xff]
      %v466 = vld [vmem:[%s331 + $0x3cc] sm:$0xff]
      %v467 = vld [vmem:[%s331 + $0x3d4] sm:$0xff]
      %v468 = vld [vmem:[%s331 + $0x3dc] sm:$0xff]
      %v469 = vld [vmem:[%s331 + $0x3e4] sm:$0xf]
      %v470 = vld [vmem:[%s331 + $0x3e8] sm:$0xff]
      %v471 = vld [vmem:[%s331 + $0x3f0] sm:$0xff]
      %v472 = vld [vmem:[%s331 + $0x3f8] sm:$0xff]
      %v473 = vld [vmem:[%s331 + $0x400] sm:$0xff]
      %v474 = vld [vmem:[%s331 + $0x408] sm:$0xff]
      %v475 = vld [vmem:[%s331 + $0x410] sm:$0xff]
      %v476 = vld [vmem:[%s331 + $0x418] sm:$0xff]
      %v477 = vld [vmem:[%s331 + $0x420] sm:$0xff]
      %v478 = vld [vmem:[%s331 + $0x428] sm:$0xff]
      %v479 = vld [vmem:[%s331 + $0x430] sm:$0xff]
      %v480 = vld [vmem:[%s331 + $0x438] sm:$0xff]
      %v481 = vld [vmem:[%s331 + $0x440] sm:$0xff]
      %v482 = vld [vmem:[%s331 + $0x448] sm:$0xf]
      %v483 = vld [vmem:[%s331 + $0x44c] sm:$0xff]
      %v484 = vld [vmem:[%s331 + $0x454] sm:$0xff]
      %v485 = vld [vmem:[%s331 + $0x45c] sm:$0xff]
      %v486 = vld [vmem:[%s331 + $0x464] sm:$0xff]
      %v487 = vld [vmem:[%s331 + $0x46c] sm:$0xff]
      %v488 = vld [vmem:[%s331 + $0x474] sm:$0xff]
      %v489 = vld [vmem:[%s331 + $0x47c] sm:$0xff]
      %v490 = vld [vmem:[%s331 + $0x484] sm:$0xff]
      %v491 = vld [vmem:[%s331 + $0x48c] sm:$0xff]
      %v492 = vld [vmem:[%s331 + $0x494] sm:$0xff]
      %v493 = vld [vmem:[%s331 + $0x49c] sm:$0xff]
      %v494 = vld [vmem:[%s331 + $0x4a4] sm:$0xff]
      %v495 = vld [vmem:[%s331 + $0x4ac] sm:$0xf]
      %v496 = vld [vmem:[%s331 + $0x4b0] sm:$0xff]
      %v497 = vld [vmem:[%s331 + $0x4b8] sm:$0xff]
      %v498 = vld [vmem:[%s331 + $0x4c0] sm:$0xff]
      %v499 = vld [vmem:[%s331 + $0x4c8] sm:$0xff]
      %v500 = vld [vmem:[%s331 + $0x4d0] sm:$0xff]
      %v501 = vld [vmem:[%s331 + $0x4d8] sm:$0xff]
      %v502 = vld [vmem:[%s331 + $0x4e0] sm:$0xff]
      %v503 = vld [vmem:[%s331 + $0x4e8] sm:$0xff]
      %v504 = vld [vmem:[%s331 + $0x4f0] sm:$0xff]
      %v505 = vld [vmem:[%s331 + $0x4f8] sm:$0xff]
      %v506 = vld [vmem:[%s331 + $0x500] sm:$0xff]
      %v507 = vld [vmem:[%s331 + $0x508] sm:$0xff]
      %v508 = vld [vmem:[%s331 + $0x510] sm:$0xf]
      %v509 = vld [vmem:[%s331 + $0x514] sm:$0xff]
      %v510 = vld [vmem:[%s331 + $0x51c] sm:$0xff]
      %v511 = vld [vmem:[%s331 + $0x524] sm:$0xff]
      %v512 = vld [vmem:[%s331 + $0x52c] sm:$0xff]
      %v513 = vld [vmem:[%s331 + $0x534] sm:$0xff]
      %v514 = vld [vmem:[%s331 + $0x53c] sm:$0xff]
      %v515 = vld [vmem:[%s331 + $0x544] sm:$0xff]
      %v516 = vld [vmem:[%s331 + $0x54c] sm:$0xff]
      %v517 = vld [vmem:[%s331 + $0x554] sm:$0xff]
      %v518 = vld [vmem:[%s331 + $0x55c] sm:$0xff]
      %v519 = vld [vmem:[%s331 + $0x564] sm:$0xff]
      %v520 = vld [vmem:[%s331 + $0x56c] sm:$0xff]
      %v521 = vld [vmem:[%s331 + $0x574] sm:$0xf]
      %v522 = vld [vmem:[%s331 + $0x578] sm:$0xff]
      %v523 = vld [vmem:[%s331 + $0x580] sm:$0xff]
      %v524 = vld [vmem:[%s331 + $0x588] sm:$0xff]
      %v525 = vld [vmem:[%s331 + $0x590] sm:$0xff]
      %v526 = vld [vmem:[%s331 + $0x598] sm:$0xff]
      %v527 = vld [vmem:[%s331 + $0x5a0] sm:$0xff]
      %v528 = vld [vmem:[%s331 + $0x5a8] sm:$0xff]
      %v529 = vld [vmem:[%s331 + $0x5b0] sm:$0xff]
      %v530 = vld [vmem:[%s331 + $0x5b8] sm:$0xff]
      %v531 = vld [vmem:[%s331 + $0x5c0] sm:$0xff]
      %v532 = vld [vmem:[%s331 + $0x5c8] sm:$0xff]
      %v533 = vld [vmem:[%s331 + $0x5d0] sm:$0xff]
      %v534 = vld [vmem:[%s331 + $0x5d8] sm:$0xf]
      %v535 = vld [vmem:[%s331 + $0x5dc] sm:$0xff]
      %v536 = vld [vmem:[%s331 + $0x5e4] sm:$0xff]
      %v537 = vld [vmem:[%s331 + $0x5ec] sm:$0xff]
      %v538 = vld [vmem:[%s331 + $0x5f4] sm:$0xff]
      %v539 = vld [vmem:[%s331 + $0x5fc] sm:$0xff]
      %v540 = vld [vmem:[%s331 + $0x604] sm:$0xff]
      %v541 = vld [vmem:[%s331 + $0x60c] sm:$0xff]
      %v542 = vld [vmem:[%s331 + $0x614] sm:$0xff]
      %v543 = vld [vmem:[%s331 + $0x61c] sm:$0xff]
      %v544 = vld [vmem:[%s331 + $0x624] sm:$0xff]
      %v545 = vld [vmem:[%s331 + $0x62c] sm:$0xff]
      %v546 = vld [vmem:[%s331 + $0x634] sm:$0xff]
      %v547 = vld [vmem:[%s331 + $0x63c] sm:$0xf]
      %v548 = vld [vmem:[%s1] sm:$0xf]
      %v549 = vld [vmem:[%s1 + $0x4] sm:$0xf]
      %v550 = vld [vmem:[%s1 + $0x8] sm:$0xf]
      %v551 = vld [vmem:[%s1 + $0xc] sm:$0xf]
      %v552 = vld [vmem:[%s1 + $0x10] sm:$0xf]
      %v553 = vld [vmem:[%s1 + $0x14] sm:$0xf]
      %v554 = vld [vmem:[%s1 + $0x18] sm:$0xf]
      %v555 = vld [vmem:[%s1 + $0x1c] sm:$0xf]
      %v556 = vld [vmem:[%s1 + $0x20] sm:$0xf]
      %v557 = vld [vmem:[%s1 + $0x24] sm:$0xf]
      %v558 = vld [vmem:[%s1 + $0x28] sm:$0xf]
      %v559 = vld [vmem:[%s1 + $0x2c] sm:$0xf]
      %v560 = vld [vmem:[%s1 + $0x30] sm:$0xf]
      %v561 = vld [vmem:[%s1 + $0x34] sm:$0xf]
      %v562 = vld [vmem:[%s1 + $0x38] sm:$0xf]
      %v563 = vld [vmem:[%s1 + $0x3c] sm:$0xf]
      %v564 = vld [vmem:[%s1 + $0x40] sm:$0xf]
      %v565 = vld [vmem:[%s1 + $0x44] sm:$0xf]
      %v566 = vld [vmem:[%s1 + $0x48] sm:$0xf]
      %v567 = vld [vmem:[%s1 + $0x4c] sm:$0xf]
      %v568 = vld [vmem:[%s1 + $0x50] sm:$0xf]
      %v569 = vld [vmem:[%s1 + $0x54] sm:$0xf]
      %v570 = vld [vmem:[%s1 + $0x58] sm:$0xf]
      %v571 = vld [vmem:[%s1 + $0x5c] sm:$0xf]
      %v572 = vld [vmem:[%s1 + $0x60] sm:$0xf]
      %v573 = vld [vmem:[%s1 + $0x64] sm:$0xf]
      %v574 = vld [vmem:[%s1 + $0x68] sm:$0xf]
      %v575 = vld [vmem:[%s1 + $0x6c] sm:$0xf]
      %v576 = vld [vmem:[%s1 + $0x70] sm:$0xf]
      %v577 = vld [vmem:[%s1 + $0x74] sm:$0xf]
      %v578 = vld [vmem:[%s1 + $0x78] sm:$0xf]
      %v579 = vld [vmem:[%s1 + $0x7c] sm:$0xf]
      %v580 = vld [vmem:[%s1 + $0x80] sm:$0xf]
      %v581 = vld [vmem:[%s1 + $0x84] sm:$0xf]
      %v582 = vld [vmem:[%s1 + $0x88] sm:$0xf]
      %v583 = vld [vmem:[%s1 + $0x8c] sm:$0xf]
      %v584 = vld [vmem:[%s1 + $0x90] sm:$0xf]
      %v585 = vld [vmem:[%s1 + $0x94] sm:$0xf]
      %v586 = vld [vmem:[%s1 + $0x98] sm:$0xf]
      %v587 = vld [vmem:[%s1 + $0x9c] sm:$0xf]
      %v588 = vld [vmem:[%s1 + $0xa0] sm:$0xf]
      %v589 = vld [vmem:[%s1 + $0xa4] sm:$0xf]
      %v590 = vld [vmem:[%s1 + $0xa8] sm:$0xf]
      %v591 = vld [vmem:[%s1 + $0xac] sm:$0xf]
      %v592 = vld [vmem:[%s1 + $0xb0] sm:$0xf]
      %v593 = vld [vmem:[%s1 + $0xb4] sm:$0xf]
      %v594 = vld [vmem:[%s1 + $0xb8] sm:$0xf]
      %v595 = vld [vmem:[%s1 + $0xbc] sm:$0xf]
      %v596 = vld [vmem:[%s1 + $0xc0] sm:$0xf]
      %v597 = vld [vmem:[%s1 + $0xc4] sm:$0xf]
      %v598 = vld [vmem:[%s1 + $0xc8] sm:$0xf]
      %v599 = vld [vmem:[%s1 + $0xcc] sm:$0xf]
      %v600 = vld [vmem:[%s1 + $0xd0] sm:$0xf]
      %v601 = vld [vmem:[%s1 + $0xd4] sm:$0xf]
      %v602 = vld [vmem:[%s1 + $0xd8] sm:$0xf]
      %v603 = vld [vmem:[%s1 + $0xdc] sm:$0xf]
      %v604 = vld [vmem:[%s1 + $0xe0] sm:$0xf]
      %v605 = vld [vmem:[%s1 + $0xe4] sm:$0xf]
      %v606 = vld [vmem:[%s1 + $0xe8] sm:$0xf]
      %v607 = vld [vmem:[%s1 + $0xec] sm:$0xf]
      %v608 = vld [vmem:[%s1 + $0xf0] sm:$0xf]
      %v609 = vld [vmem:[%s1 + $0xf4] sm:$0xf]
      %v610 = vld [vmem:[%s1 + $0xf8] sm:$0xf]
      %v611 = vld [vmem:[%s1 + $0xfc] sm:$0xf]
      %v612 = vld [vmem:[%s1 + $0x100] sm:$0xf]
      %v613 = vld [vmem:[%s1 + $0x104] sm:$0xf]
      %v614 = vld [vmem:[%s1 + $0x108] sm:$0xf]
      %v615 = vld [vmem:[%s1 + $0x10c] sm:$0xf]
      %v616 = vld [vmem:[%s1 + $0x110] sm:$0xf]
      %v617 = vld [vmem:[%s1 + $0x114] sm:$0xf]
      %v618 = vld [vmem:[%s1 + $0x118] sm:$0xf]
      %v619 = vld [vmem:[%s1 + $0x11c] sm:$0xf]
      %v620 = vld [vmem:[%s1 + $0x120] sm:$0xf]
      %v621 = vld [vmem:[%s1 + $0x124] sm:$0xf]
      %v622 = vld [vmem:[%s1 + $0x128] sm:$0xf]
      %v623 = vld [vmem:[%s1 + $0x12c] sm:$0xf]
      %v624 = vld [vmem:[%s1 + $0x130] sm:$0xf]
      %v625 = vld [vmem:[%s1 + $0x134] sm:$0xf]
      %v626 = vld [vmem:[%s1 + $0x138] sm:$0xf]
      %v627 = vld [vmem:[%s1 + $0x13c] sm:$0xf]
      %v628 = vld [vmem:[%s1 + $0x140] sm:$0xf]
      %v629 = vld [vmem:[%s1 + $0x144] sm:$0xf]
      %v630 = vld [vmem:[%s1 + $0x148] sm:$0xf]
      %v631 = vld [vmem:[%s1 + $0x14c] sm:$0xf]
      %v632 = vld [vmem:[%s1 + $0x150] sm:$0xf]
      %v633 = vld [vmem:[%s1 + $0x154] sm:$0xf]
      %v634 = vld [vmem:[%s1 + $0x158] sm:$0xf]
      %v635 = vld [vmem:[%s1 + $0x15c] sm:$0xf]
      %v636 = vld [vmem:[%s1 + $0x160] sm:$0xf]
      %v637 = vld [vmem:[%s1 + $0x164] sm:$0xf]
      %v638 = vld [vmem:[%s1 + $0x168] sm:$0xf]
      %v639 = vld [vmem:[%s1 + $0x16c] sm:$0xf]
      %v640 = vld [vmem:[%s1 + $0x170] sm:$0xf]
      %v641 = vld [vmem:[%s1 + $0x174] sm:$0xf]
      %v642 = vld [vmem:[%s1 + $0x178] sm:$0xf]
      %v643 = vld [vmem:[%s1 + $0x17c] sm:$0xf]
      %v644 = vld [vmem:[%s1 + $0x180] sm:$0xf]
      %v645 = vld [vmem:[%s1 + $0x184] sm:$0xf]
      %v646 = vld [vmem:[%s1 + $0x188] sm:$0xf]
      %v647 = vld [vmem:[%s1 + $0x18c] sm:$0xf]
      %v648 = vld [vmem:[%s1 + $0x190] sm:$0xf]
      %v649 = vld [vmem:[%s1 + $0x194] sm:$0xf]
      %v650 = vld [vmem:[%s1 + $0x198] sm:$0xf]
      %v651 = vld [vmem:[%s1 + $0x19c] sm:$0xf]
      %v652 = vld [vmem:[%s1 + $0x1a0] sm:$0xf]
      %v653 = vld [vmem:[%s1 + $0x1a4] sm:$0xf]
      %v654 = vld [vmem:[%s1 + $0x1a8] sm:$0xf]
      %v655 = vld [vmem:[%s1 + $0x1ac] sm:$0xf]
      %v656 = vld [vmem:[%s1 + $0x1b0] sm:$0xf]
      %v657 = vld [vmem:[%s1 + $0x1b4] sm:$0xf]
      %v658 = vld [vmem:[%s1 + $0x1b8] sm:$0xf]
      %v659 = vld [vmem:[%s1 + $0x1bc] sm:$0xf]
      %v660 = vld [vmem:[%s1 + $0x1c0] sm:$0xf]
      %v661 = vld [vmem:[%s1 + $0x1c4] sm:$0xf]
      %v662 = vld [vmem:[%s1 + $0x1c8] sm:$0xf]
      %v663 = vld [vmem:[%s1 + $0x1cc] sm:$0xf]
      %v664 = vld [vmem:[%s1 + $0x1d0] sm:$0xf]
      %v665 = vld [vmem:[%s1 + $0x1d4] sm:$0xf]
      %v666 = vld [vmem:[%s1 + $0x1d8] sm:$0xf]
      %v667 = vld [vmem:[%s1 + $0x1dc] sm:$0xf]
      %v668 = vld [vmem:[%s1 + $0x1e0] sm:$0xf]
      %v669 = vld [vmem:[%s1 + $0x1e4] sm:$0xf]
      %v670 = vld [vmem:[%s1 + $0x1e8] sm:$0xf]
      %v671 = vld [vmem:[%s1 + $0x1ec] sm:$0xf]
      %v672 = vld [vmem:[%s1 + $0x1f0] sm:$0xf]
      %v673 = vld [vmem:[%s1 + $0x1f4] sm:$0xf]
      %v674 = vld [vmem:[%s1 + $0x1f8] sm:$0xf]
      %v675 = vld [vmem:[%s1 + $0x1fc] sm:$0xf]
      %v676 = vld [vmem:[%s1 + $0x200] sm:$0xf]
      %v677 = vld [vmem:[%s1 + $0x204] sm:$0xf]
      %v678 = vld [vmem:[%s1 + $0x208] sm:$0xf]
      %v679 = vld [vmem:[%s1 + $0x20c] sm:$0xf]
      %v680 = vld [vmem:[%s1 + $0x210] sm:$0xf]
      %v681 = vld [vmem:[%s1 + $0x214] sm:$0xf]
      %v682 = vld [vmem:[%s1 + $0x218] sm:$0xf]
      %v683 = vld [vmem:[%s1 + $0x21c] sm:$0xf]
      %v684 = vld [vmem:[%s1 + $0x220] sm:$0xf]
      %v685 = vld [vmem:[%s1 + $0x224] sm:$0xf]
      %v686 = vld [vmem:[%s1 + $0x228] sm:$0xf]
      %v687 = vld [vmem:[%s1 + $0x22c] sm:$0xf]
      %v688 = vld [vmem:[%s1 + $0x230] sm:$0xf]
      %v689 = vld [vmem:[%s1 + $0x234] sm:$0xf]
      %v690 = vld [vmem:[%s1 + $0x238] sm:$0xf]
      %v691 = vld [vmem:[%s1 + $0x23c] sm:$0xf]
      %v692 = vld [vmem:[%s1 + $0x240] sm:$0xf]
      %v693 = vld [vmem:[%s1 + $0x244] sm:$0xf]
      %v694 = vld [vmem:[%s1 + $0x248] sm:$0xf]
      %v695 = vld [vmem:[%s1 + $0x24c] sm:$0xf]
      %v696 = vld [vmem:[%s1 + $0x250] sm:$0xf]
      %v697 = vld [vmem:[%s1 + $0x254] sm:$0xf]
      %v698 = vld [vmem:[%s1 + $0x258] sm:$0xf]
      %v699 = vld [vmem:[%s1 + $0x25c] sm:$0xf]
      %v700 = vld [vmem:[%s1 + $0x260] sm:$0xf]
      %v701 = vld [vmem:[%s1 + $0x264] sm:$0xf]
      %v702 = vld [vmem:[%s1 + $0x268] sm:$0xf]
      %v703 = vld [vmem:[%s1 + $0x26c] sm:$0xf]
      %v704 = vld [vmem:[%s1 + $0x270] sm:$0xf]
      %v705 = vld [vmem:[%s1 + $0x274] sm:$0xf]
      %v706 = vld [vmem:[%s1 + $0x278] sm:$0xf]
      %v707 = vld [vmem:[%s1 + $0x27c] sm:$0xf]
      %v708 = vld [vmem:[%s1 + $0x280] sm:$0xf]
      %v709 = vld [vmem:[%s1 + $0x284] sm:$0xf]
      %v710 = vld [vmem:[%s1 + $0x288] sm:$0xf]
      %v711 = vld [vmem:[%s1 + $0x28c] sm:$0xf]
      %v712 = vld [vmem:[%s1 + $0x290] sm:$0xf]
      %v713 = vld [vmem:[%s1 + $0x294] sm:$0xf]
      %v714 = vld [vmem:[%s1 + $0x298] sm:$0xf]
      %v715 = vld [vmem:[%s1 + $0x29c] sm:$0xf]
      %v716 = vld [vmem:[%s1 + $0x2a0] sm:$0xf]
      %v717 = vld [vmem:[%s1 + $0x2a4] sm:$0xf]
      %v718 = vld [vmem:[%s1 + $0x2a8] sm:$0xf]
      %v719 = vld [vmem:[%s1 + $0x2ac] sm:$0xf]
      %v720 = vld [vmem:[%s1 + $0x2b0] sm:$0xf]
      %v721 = vld [vmem:[%s1 + $0x2b4] sm:$0xf]
      %v722 = vld [vmem:[%s1 + $0x2b8] sm:$0xf]
      %v723 = vld [vmem:[%s1 + $0x2bc] sm:$0xf]
      %v724 = vld [vmem:[%s1 + $0x2c0] sm:$0xf]
      %v725 = vld [vmem:[%s1 + $0x2c4] sm:$0xf]
      %v726 = vld [vmem:[%s1 + $0x2c8] sm:$0xf]
      %v727 = vld [vmem:[%s1 + $0x2cc] sm:$0xf]
      %v728 = vld [vmem:[%s1 + $0x2d0] sm:$0xf]
      %v729 = vld [vmem:[%s1 + $0x2d4] sm:$0xf]
      %v730 = vld [vmem:[%s1 + $0x2d8] sm:$0xf]
      %v731 = vld [vmem:[%s1 + $0x2dc] sm:$0xf]
      %v732 = vld [vmem:[%s1 + $0x2e0] sm:$0xf]
      %v733 = vld [vmem:[%s1 + $0x2e4] sm:$0xf]
      %v734 = vld [vmem:[%s1 + $0x2e8] sm:$0xf]
      %v735 = vld [vmem:[%s1 + $0x2ec] sm:$0xf]
      %v736 = vld [vmem:[%s1 + $0x2f0] sm:$0xf]
      %v737 = vld [vmem:[%s1 + $0x2f4] sm:$0xf]
      %v738 = vld [vmem:[%s1 + $0x2f8] sm:$0xf]
      %v739 = vld [vmem:[%s1 + $0x2fc] sm:$0xf]
      %v740 = vld [vmem:[%s1 + $0x300] sm:$0xf]
      %v741 = vld [vmem:[%s1 + $0x304] sm:$0xf]
      %v742 = vld [vmem:[%s1 + $0x308] sm:$0xf]
      %v743 = vld [vmem:[%s1 + $0x30c] sm:$0xf]
      %v744 = vld [vmem:[%s1 + $0x310] sm:$0xf]
      %v745 = vld [vmem:[%s1 + $0x314] sm:$0xf]
      %v746 = vld [vmem:[%s1 + $0x318] sm:$0xf]
      %v747 = vld [vmem:[%s1 + $0x31c] sm:$0xf]
      %v748 = vld [vmem:[%s1 + $0x320] sm:$0xf]
      %v749 = vld [vmem:[%s1 + $0x324] sm:$0xf]
      %v750 = vld [vmem:[%s1 + $0x328] sm:$0xf]
      %v751 = vld [vmem:[%s1 + $0x32c] sm:$0xf]
      %v752 = vld [vmem:[%s1 + $0x330] sm:$0xf]
      %v753 = vld [vmem:[%s1 + $0x334] sm:$0xf]
      %v754 = vld [vmem:[%s1 + $0x338] sm:$0xf]
      %v755 = vld [vmem:[%s1 + $0x33c] sm:$0xf]
      %v756 = vld [vmem:[%s1 + $0x340] sm:$0xf]
      %v757 = vld [vmem:[%s1 + $0x344] sm:$0xf]
      %v758 = vld [vmem:[%s1 + $0x348] sm:$0xf]
      %v759 = vld [vmem:[%s1 + $0x34c] sm:$0xf]
      %v760 = vld [vmem:[%s1 + $0x350] sm:$0xf]
      %v761 = vld [vmem:[%s1 + $0x354] sm:$0xf]
      %v762 = vld [vmem:[%s1 + $0x358] sm:$0xf]
      %v763 = vld [vmem:[%s1 + $0x35c] sm:$0xf]
      %v764 = vld [vmem:[%s1 + $0x360] sm:$0xf]
      %v765 = vld [vmem:[%s1 + $0x364] sm:$0xf]
      %v766 = vld [vmem:[%s1 + $0x368] sm:$0xf]
      %v767 = vld [vmem:[%s1 + $0x36c] sm:$0xf]
      %v768 = vld [vmem:[%s1 + $0x370] sm:$0xf]
      %v769 = vld [vmem:[%s1 + $0x374] sm:$0xf]
      %v770 = vld [vmem:[%s1 + $0x378] sm:$0xf]
      %v771 = vld [vmem:[%s1 + $0x37c] sm:$0xf]
      %v772 = vld [vmem:[%s1 + $0x380] sm:$0xf]
      %v773 = vld [vmem:[%s1 + $0x384] sm:$0xf]
      %v774 = vld [vmem:[%s1 + $0x388] sm:$0xf]
      %v775 = vld [vmem:[%s1 + $0x38c] sm:$0xf]
      %v776 = vld [vmem:[%s1 + $0x390] sm:$0xf]
      %v777 = vld [vmem:[%s1 + $0x394] sm:$0xf]
      %v778 = vld [vmem:[%s1 + $0x398] sm:$0xf]
      %v779 = vld [vmem:[%s1 + $0x39c] sm:$0xf]
      %v780 = vld [vmem:[%s1 + $0x3a0] sm:$0xf]
      %v781 = vld [vmem:[%s1 + $0x3a4] sm:$0xf]
      %v782 = vld [vmem:[%s1 + $0x3a8] sm:$0xf]
      %v783 = vld [vmem:[%s1 + $0x3ac] sm:$0xf]
      %v784 = vld [vmem:[%s1 + $0x3b0] sm:$0xf]
      %v785 = vld [vmem:[%s1 + $0x3b4] sm:$0xf]
      %v786 = vld [vmem:[%s1 + $0x3b8] sm:$0xf]
      %v787 = vld [vmem:[%s1 + $0x3bc] sm:$0xf]
      %v788 = vld [vmem:[%s1 + $0x3c0] sm:$0xf]
      %v789 = vld [vmem:[%s1 + $0x3c4] sm:$0xf]
      %v790 = vld [vmem:[%s1 + $0x3c8] sm:$0xf]
      %v791 = vld [vmem:[%s1 + $0x3cc] sm:$0xf]
      %v792 = vld [vmem:[%s1 + $0x3d0] sm:$0xf]
      %v793 = vld [vmem:[%s1 + $0x3d4] sm:$0xf]
      %v794 = vld [vmem:[%s1 + $0x3d8] sm:$0xf]
      %v795 = vld [vmem:[%s1 + $0x3dc] sm:$0xf]
      %v796 = vld [vmem:[%s1 + $0x3e0] sm:$0xf]
      %v797 = vld [vmem:[%s1 + $0x3e4] sm:$0xf]
      %v798 = vld [vmem:[%s1 + $0x3e8] sm:$0xf]
      %v799 = vld [vmem:[%s1 + $0x3ec] sm:$0xf]
      %v800 = vld [vmem:[%s1 + $0x3f0] sm:$0xf]
      %v801 = vld [vmem:[%s1 + $0x3f4] sm:$0xf]
      %v802 = vld [vmem:[%s1 + $0x3f8] sm:$0xf]
      %v803 = vld [vmem:[%s1 + $0x3fc] sm:$0xf]
      %v804 = vld [vmem:[%s1 + $0x400] sm:$0xf]
      %v805 = vld [vmem:[%s1 + $0x404] sm:$0xf]
      %v806 = vld [vmem:[%s1 + $0x408] sm:$0xf]
      %v807 = vld [vmem:[%s1 + $0x40c] sm:$0xf]
      %v808 = vld [vmem:[%s1 + $0x410] sm:$0xf]
      %v809 = vld [vmem:[%s1 + $0x414] sm:$0xf]
      %v810 = vld [vmem:[%s1 + $0x418] sm:$0xf]
      %v811 = vld [vmem:[%s1 + $0x41c] sm:$0xf]
      %v812 = vld [vmem:[%s1 + $0x420] sm:$0xf]
      %v813 = vld [vmem:[%s1 + $0x424] sm:$0xf]
      %v814 = vld [vmem:[%s1 + $0x428] sm:$0xf]
      %v815 = vld [vmem:[%s1 + $0x42c] sm:$0xf]
      %v816 = vld [vmem:[%s1 + $0x430] sm:$0xf]
      %v817 = vld [vmem:[%s1 + $0x434] sm:$0xf]
      %v818 = vld [vmem:[%s1 + $0x438] sm:$0xf]
      %v819 = vld [vmem:[%s1 + $0x43c] sm:$0xf]
      %v820 = vld [vmem:[%s1 + $0x440] sm:$0xf]
      %v821 = vld [vmem:[%s1 + $0x444] sm:$0xf]
      %v822 = vld [vmem:[%s1 + $0x448] sm:$0xf]
      %v823 = vld [vmem:[%s1 + $0x44c] sm:$0xf]
      %v824 = vld [vmem:[%s1 + $0x450] sm:$0xf]
      %v825 = vld [vmem:[%s1 + $0x454] sm:$0xf]
      %v826 = vld [vmem:[%s1 + $0x458] sm:$0xf]
      %v827 = vld [vmem:[%s1 + $0x45c] sm:$0xf]
      %v828 = vld [vmem:[%s1 + $0x460] sm:$0xf]
      %v829 = vld [vmem:[%s1 + $0x464] sm:$0xf]
      %v830 = vld [vmem:[%s1 + $0x468] sm:$0xf]
      %v831 = vld [vmem:[%s1 + $0x46c] sm:$0xf]
      %v832 = vld [vmem:[%s1 + $0x470] sm:$0xf]
      %v833 = vld [vmem:[%s1 + $0x474] sm:$0xf]
      %v834 = vld [vmem:[%s1 + $0x478] sm:$0xf]
      %v835 = vld [vmem:[%s1 + $0x47c] sm:$0xf]
      %v836 = vld [vmem:[%s1 + $0x480] sm:$0xf]
      %v837 = vld [vmem:[%s1 + $0x484] sm:$0xf]
      %v838 = vld [vmem:[%s1 + $0x488] sm:$0xf]
      %v839 = vld [vmem:[%s1 + $0x48c] sm:$0xf]
      %v840 = vld [vmem:[%s1 + $0x490] sm:$0xf]
      %v841 = vld [vmem:[%s1 + $0x494] sm:$0xf]
      %v842 = vld [vmem:[%s1 + $0x498] sm:$0xf]
      %v843 = vld [vmem:[%s1 + $0x49c] sm:$0xf]
      %v844 = vld [vmem:[%s1 + $0x4a0] sm:$0xf]
      %v845 = vld [vmem:[%s1 + $0x4a4] sm:$0xf]
      %v846 = vld [vmem:[%s1 + $0x4a8] sm:$0xf]
      %v847 = vld [vmem:[%s1 + $0x4ac] sm:$0xf]
      %v848 = vld [vmem:[%s1 + $0x4b0] sm:$0xf]
      %v849 = vld [vmem:[%s1 + $0x4b4] sm:$0xf]
      %v850 = vld [vmem:[%s1 + $0x4b8] sm:$0xf]
      %v851 = vld [vmem:[%s1 + $0x4bc] sm:$0xf]
      %v852 = vld [vmem:[%s1 + $0x4c0] sm:$0xf]
      %v853 = vld [vmem:[%s1 + $0x4c4] sm:$0xf]
      %v854 = vld [vmem:[%s1 + $0x4c8] sm:$0xf]
      %v855 = vld [vmem:[%s1 + $0x4cc] sm:$0xf]
      %v856 = vld [vmem:[%s1 + $0x4d0] sm:$0xf]
      %v857 = vld [vmem:[%s1 + $0x4d4] sm:$0xf]
      %v858 = vld [vmem:[%s1 + $0x4d8] sm:$0xf]
      %v859 = vld [vmem:[%s1 + $0x4dc] sm:$0xf]
      %v860 = vld [vmem:[%s1 + $0x4e0] sm:$0xf]
      %v861 = vld [vmem:[%s1 + $0x4e4] sm:$0xf]
      %v862 = vld [vmem:[%s1 + $0x4e8] sm:$0xf]
      %v863 = vld [vmem:[%s1 + $0x4ec] sm:$0xf]
      %v864 = vld [vmem:[%s1 + $0x4f0] sm:$0xf]
      %v865 = vld [vmem:[%s1 + $0x4f4] sm:$0xf]
      %v866 = vld [vmem:[%s1 + $0x4f8] sm:$0xf]
      %v867 = vld [vmem:[%s1 + $0x4fc] sm:$0xf]
      %v868 = vld [vmem:[%s1 + $0x500] sm:$0xf]
      %v869 = vld [vmem:[%s1 + $0x504] sm:$0xf]
      %v870 = vld [vmem:[%s1 + $0x508] sm:$0xf]
      %v871 = vld [vmem:[%s1 + $0x50c] sm:$0xf]
      %v872 = vld [vmem:[%s1 + $0x510] sm:$0xf]
      %v873 = vld [vmem:[%s1 + $0x514] sm:$0xf]
      %v874 = vld [vmem:[%s1 + $0x518] sm:$0xf]
      %v875 = vld [vmem:[%s1 + $0x51c] sm:$0xf]
      %v876 = vld [vmem:[%s1 + $0x520] sm:$0xf]
      %v877 = vld [vmem:[%s1 + $0x524] sm:$0xf]
      %v878 = vld [vmem:[%s1 + $0x528] sm:$0xf]
      %v879 = vld [vmem:[%s1 + $0x52c] sm:$0xf]
      %v880 = vld [vmem:[%s1 + $0x530] sm:$0xf]
      %v881 = vld [vmem:[%s1 + $0x534] sm:$0xf]
      %v882 = vld [vmem:[%s1 + $0x538] sm:$0xf]
      %v883 = vld [vmem:[%s1 + $0x53c] sm:$0xf]
      %v884 = vld [vmem:[%s1 + $0x540] sm:$0xf]
      %v885 = vld [vmem:[%s1 + $0x544] sm:$0xf]
      %v886 = vld [vmem:[%s1 + $0x548] sm:$0xf]
      %v887 = vld [vmem:[%s1 + $0x54c] sm:$0xf]
      %v888 = vld [vmem:[%s1 + $0x550] sm:$0xf]
      %v889 = vld [vmem:[%s1 + $0x554] sm:$0xf]
      %v890 = vld [vmem:[%s1 + $0x558] sm:$0xf]
      %v891 = vld [vmem:[%s1 + $0x55c] sm:$0xf]
      %v892 = vld [vmem:[%s1 + $0x560] sm:$0xf]
      %v893 = vld [vmem:[%s1 + $0x564] sm:$0xf]
      %v894 = vld [vmem:[%s1 + $0x568] sm:$0xf]
      %v895 = vld [vmem:[%s1 + $0x56c] sm:$0xf]
      %v896 = vld [vmem:[%s1 + $0x570] sm:$0xf]
      %v897 = vld [vmem:[%s1 + $0x574] sm:$0xf]
      %v898 = vld [vmem:[%s1 + $0x578] sm:$0xf]
      %v899 = vld [vmem:[%s1 + $0x57c] sm:$0xf]
      %v900 = vld [vmem:[%s1 + $0x580] sm:$0xf]
      %v901 = vld [vmem:[%s1 + $0x584] sm:$0xf]
      %v902 = vld [vmem:[%s1 + $0x588] sm:$0xf]
      %v903 = vld [vmem:[%s1 + $0x58c] sm:$0xf]
      %v904 = vld [vmem:[%s1 + $0x590] sm:$0xf]
      %v905 = vld [vmem:[%s1 + $0x594] sm:$0xf]
      %v906 = vld [vmem:[%s1 + $0x598] sm:$0xf]
      %v907 = vld [vmem:[%s1 + $0x59c] sm:$0xf]
      %v908 = vld [vmem:[%s1 + $0x5a0] sm:$0xf]
      %v909 = vld [vmem:[%s1 + $0x5a4] sm:$0xf]
      %v910 = vld [vmem:[%s1 + $0x5a8] sm:$0xf]
      %v911 = vld [vmem:[%s1 + $0x5ac] sm:$0xf]
      %v912 = vld [vmem:[%s1 + $0x5b0] sm:$0xf]
      %v913 = vld [vmem:[%s1 + $0x5b4] sm:$0xf]
      %v914 = vld [vmem:[%s1 + $0x5b8] sm:$0xf]
      %v915 = vld [vmem:[%s1 + $0x5bc] sm:$0xf]
      %v916 = vld [vmem:[%s1 + $0x5c0] sm:$0xf]
      %v917 = vld [vmem:[%s1 + $0x5c4] sm:$0xf]
      %v918 = vld [vmem:[%s1 + $0x5c8] sm:$0xf]
      %v919 = vld [vmem:[%s1 + $0x5cc] sm:$0xf]
      %v920 = vld [vmem:[%s1 + $0x5d0] sm:$0xf]
      %v921 = vld [vmem:[%s1 + $0x5d4] sm:$0xf]
      %v922 = vld [vmem:[%s1 + $0x5d8] sm:$0xf]
      %v923 = vld [vmem:[%s1 + $0x5dc] sm:$0xf]
      %v924 = vld [vmem:[%s1 + $0x5e0] sm:$0xf]
      %v925 = vld [vmem:[%s1 + $0x5e4] sm:$0xf]
      %v926 = vld [vmem:[%s1 + $0x5e8] sm:$0xf]
      %v927 = vld [vmem:[%s1 + $0x5ec] sm:$0xf]
      %v928 = vld [vmem:[%s1 + $0x5f0] sm:$0xf]
      %v929 = vld [vmem:[%s1 + $0x5f4] sm:$0xf]
      %v930 = vld [vmem:[%s1 + $0x5f8] sm:$0xf]
      %v931 = vld [vmem:[%s1 + $0x5fc] sm:$0xf]
      %v932 = vld [vmem:[%s1 + $0x600] sm:$0xf]
      %v933 = vld [vmem:[%s1 + $0x604] sm:$0xf]
      %v934 = vld [vmem:[%s1 + $0x608] sm:$0xf]
      %v935 = vld [vmem:[%s1 + $0x60c] sm:$0xf]
      %v936 = vld [vmem:[%s1 + $0x610] sm:$0xf]
      %v937 = vld [vmem:[%s1 + $0x614] sm:$0xf]
      %v938 = vld [vmem:[%s1 + $0x618] sm:$0xf]
      %v939 = vld [vmem:[%s1 + $0x61c] sm:$0xf]
      %v940 = vld [vmem:[%s2] sm:$0x1]
      %v942 = vlaneseq
      %v943 = vshrl.u32 %v942, 7
      %v944 = vsub.s32 0, %v943
      %v945 = vrot.slane %v940, %v944
      %v1155 = vunpack.c.l.b16 %v340
      %v1156 = vunpack.c.h.b16 %v340
      %v1157 = vunpack.c.l.b16 %v341
      %v1158 = vunpack.c.h.b16 %v341
      %v1159 = vunpack.c.l.b16 %v342
      %v1160 = vunpack.c.h.b16 %v342
      %v1161 = vunpack.c.l.b16 %v343
      %v1162 = vunpack.c.h.b16 %v343
      %v1163 = vunpack.c.l.b16 %v344
      %v1164 = vunpack.c.h.b16 %v344
      %v1165 = vunpack.c.l.b16 %v345
      %v1166 = vunpack.c.h.b16 %v345
      %v1167 = vunpack.c.l.b16 %v346
      %v1168 = vunpack.c.h.b16 %v346
      %v1169 = vunpack.c.l.b16 %v347
      %v1170 = vunpack.c.h.b16 %v347
      %v1171 = vunpack.c.l.b16 %v348
      %v1172 = vunpack.c.h.b16 %v348
      %v1173 = vunpack.c.l.b16 %v349
      %v1174 = vunpack.c.h.b16 %v349
      %v1175 = vunpack.c.l.b16 %v350
      %v1176 = vunpack.c.h.b16 %v350
      %v1177 = vunpack.c.l.b16 %v351
      %v1178 = vunpack.c.h.b16 %v351
      %v1179 = vunpack.c.l.b16 %v352
      %v1180 = vunpack.c.l.b16 %v353
      %v1181 = vunpack.c.h.b16 %v353
      %v1182 = vunpack.c.l.b16 %v354
      %v1183 = vunpack.c.h.b16 %v354
      %v1184 = vunpack.c.l.b16 %v355
      %v1185 = vunpack.c.h.b16 %v355
      %v1186 = vunpack.c.l.b16 %v356
      %v1187 = vunpack.c.h.b16 %v356
      %v1188 = vunpack.c.l.b16 %v357
      %v1189 = vunpack.c.h.b16 %v357
      %v1190 = vunpack.c.l.b16 %v358
      %v1191 = vunpack.c.h.b16 %v358
      %v1192 = vunpack.c.l.b16 %v359
      %v1193 = vunpack.c.h.b16 %v359
      %v1194 = vunpack.c.l.b16 %v360
      %v1195 = vunpack.c.h.b16 %v360
      %v1196 = vunpack.c.l.b16 %v361
      %v1197 = vunpack.c.h.b16 %v361
      %v1198 = vunpack.c.l.b16 %v362
      %v1199 = vunpack.c.h.b16 %v362
      %v1200 = vunpack.c.l.b16 %v363
      %v1201 = vunpack.c.h.b16 %v363
      %v1202 = vunpack.c.l.b16 %v364
      %v1203 = vunpack.c.h.b16 %v364
      %v1204 = vunpack.c.l.b16 %v365
      %v1205 = vunpack.c.l.b16 %v366
      %v1206 = vunpack.c.h.b16 %v366
      %v1207 = vunpack.c.l.b16 %v367
      %v1208 = vunpack.c.h.b16 %v367
      %v1209 = vunpack.c.l.b16 %v368
      %v1210 = vunpack.c.h.b16 %v368
      %v1211 = vunpack.c.l.b16 %v369
      %v1212 = vunpack.c.h.b16 %v369
      %v1213 = vunpack.c.l.b16 %v370
      %v1214 = vunpack.c.h.b16 %v370
      %v1215 = vunpack.c.l.b16 %v371
      %v1216 = vunpack.c.h.b16 %v371
      %v1217 = vunpack.c.l.b16 %v372
      %v1218 = vunpack.c.h.b16 %v372
      %v1219 = vunpack.c.l.b16 %v373
      %v1220 = vunpack.c.h.b16 %v373
      %v1221 = vunpack.c.l.b16 %v374
      %v1222 = vunpack.c.h.b16 %v374
      %v1223 = vunpack.c.l.b16 %v375
      %v1224 = vunpack.c.h.b16 %v375
      %v1225 = vunpack.c.l.b16 %v376
      %v1226 = vunpack.c.h.b16 %v376
      %v1227 = vunpack.c.l.b16 %v377
      %v1228 = vunpack.c.h.b16 %v377
      %v1229 = vunpack.c.l.b16 %v378
      %v1230 = vunpack.c.l.b16 %v379
      %v1231 = vunpack.c.h.b16 %v379
      %v1232 = vunpack.c.l.b16 %v380
      %v1233 = vunpack.c.h.b16 %v380
      %v1234 = vunpack.c.l.b16 %v381
      %v1235 = vunpack.c.h.b16 %v381
      %v1236 = vunpack.c.l.b16 %v382
      %v1237 = vunpack.c.h.b16 %v382
      %v1238 = vunpack.c.l.b16 %v383
      %v1239 = vunpack.c.h.b16 %v383
      %v1240 = vunpack.c.l.b16 %v384
      %v1241 = vunpack.c.h.b16 %v384
      %v1242 = vunpack.c.l.b16 %v385
      %v1243 = vunpack.c.h.b16 %v385
      %v1244 = vunpack.c.l.b16 %v386
      %v1245 = vunpack.c.h.b16 %v386
      %v1246 = vunpack.c.l.b16 %v387
      %v1247 = vunpack.c.h.b16 %v387
      %v1248 = vunpack.c.l.b16 %v388
      %v1249 = vunpack.c.h.b16 %v388
      %v1250 = vunpack.c.l.b16 %v389
      %v1251 = vunpack.c.h.b16 %v389
      %v1252 = vunpack.c.l.b16 %v390
      %v1253 = vunpack.c.h.b16 %v390
      %v1254 = vunpack.c.l.b16 %v391
      %v1255 = vunpack.c.l.b16 %v392
      %v1256 = vunpack.c.h.b16 %v392
      %v1257 = vunpack.c.l.b16 %v393
      %v1258 = vunpack.c.h.b16 %v393
      %v1259 = vunpack.c.l.b16 %v394
      %v1260 = vunpack.c.h.b16 %v394
      %v1261 = vunpack.c.l.b16 %v395
      %v1262 = vunpack.c.h.b16 %v395
      %v1263 = vunpack.c.l.b16 %v396
      %v1264 = vunpack.c.h.b16 %v396
      %v1265 = vunpack.c.l.b16 %v397
      %v1266 = vunpack.c.h.b16 %v397
      %v1267 = vunpack.c.l.b16 %v398
      %v1268 = vunpack.c.h.b16 %v398
      %v1269 = vunpack.c.l.b16 %v399
      %v1270 = vunpack.c.h.b16 %v399
      %v1271 = vunpack.c.l.b16 %v400
      %v1272 = vunpack.c.h.b16 %v400
      %v1273 = vunpack.c.l.b16 %v401
      %v1274 = vunpack.c.h.b16 %v401
      %v1275 = vunpack.c.l.b16 %v402
      %v1276 = vunpack.c.h.b16 %v402
      %v1277 = vunpack.c.l.b16 %v403
      %v1278 = vunpack.c.h.b16 %v403
      %v1279 = vunpack.c.l.b16 %v404
      %v1280 = vunpack.c.l.b16 %v405
      %v1281 = vunpack.c.h.b16 %v405
      %v1282 = vunpack.c.l.b16 %v406
      %v1283 = vunpack.c.h.b16 %v406
      %v1284 = vunpack.c.l.b16 %v407
      %v1285 = vunpack.c.h.b16 %v407
      %v1286 = vunpack.c.l.b16 %v408
      %v1287 = vunpack.c.h.b16 %v408
      %v1288 = vunpack.c.l.b16 %v409
      %v1289 = vunpack.c.h.b16 %v409
      %v1290 = vunpack.c.l.b16 %v410
      %v1291 = vunpack.c.h.b16 %v410
      %v1292 = vunpack.c.l.b16 %v411
      %v1293 = vunpack.c.h.b16 %v411
      %v1294 = vunpack.c.l.b16 %v412
      %v1295 = vunpack.c.h.b16 %v412
      %v1296 = vunpack.c.l.b16 %v413
      %v1297 = vunpack.c.h.b16 %v413
      %v1298 = vunpack.c.l.b16 %v414
      %v1299 = vunpack.c.h.b16 %v414
      %v1300 = vunpack.c.l.b16 %v415
      %v1301 = vunpack.c.h.b16 %v415
      %v1302 = vunpack.c.l.b16 %v416
      %v1303 = vunpack.c.h.b16 %v416
      %v1304 = vunpack.c.l.b16 %v417
      %v1305 = vunpack.c.l.b16 %v418
      %v1306 = vunpack.c.h.b16 %v418
      %v1307 = vunpack.c.l.b16 %v419
      %v1308 = vunpack.c.h.b16 %v419
      %v1309 = vunpack.c.l.b16 %v420
      %v1310 = vunpack.c.h.b16 %v420
      %v1311 = vunpack.c.l.b16 %v421
      %v1312 = vunpack.c.h.b16 %v421
      %v1313 = vunpack.c.l.b16 %v422
      %v1314 = vunpack.c.h.b16 %v422
      %v1315 = vunpack.c.l.b16 %v423
      %v1316 = vunpack.c.h.b16 %v423
      %v1317 = vunpack.c.l.b16 %v424
      %v1318 = vunpack.c.h.b16 %v424
      %v1319 = vunpack.c.l.b16 %v425
      %v1320 = vunpack.c.h.b16 %v425
      %v1321 = vunpack.c.l.b16 %v426
      %v1322 = vunpack.c.h.b16 %v426
      %v1323 = vunpack.c.l.b16 %v427
      %v1324 = vunpack.c.h.b16 %v427
      %v1325 = vunpack.c.l.b16 %v428
      %v1326 = vunpack.c.h.b16 %v428
      %v1327 = vunpack.c.l.b16 %v429
      %v1328 = vunpack.c.h.b16 %v429
      %v1329 = vunpack.c.l.b16 %v430
      %v1330 = vunpack.c.l.b16 %v431
      %v1331 = vunpack.c.h.b16 %v431
      %v1332 = vunpack.c.l.b16 %v432
      %v1333 = vunpack.c.h.b16 %v432
      %v1334 = vunpack.c.l.b16 %v433
      %v1335 = vunpack.c.h.b16 %v433
      %v1336 = vunpack.c.l.b16 %v434
      %v1337 = vunpack.c.h.b16 %v434
      %v1338 = vunpack.c.l.b16 %v435
      %v1339 = vunpack.c.h.b16 %v435
      %v1340 = vunpack.c.l.b16 %v436
      %v1341 = vunpack.c.h.b16 %v436
      %v1342 = vunpack.c.l.b16 %v437
      %v1343 = vunpack.c.h.b16 %v437
      %v1344 = vunpack.c.l.b16 %v438
      %v1345 = vunpack.c.h.b16 %v438
      %v1346 = vunpack.c.l.b16 %v439
      %v1347 = vunpack.c.h.b16 %v439
      %v1348 = vunpack.c.l.b16 %v440
      %v1349 = vunpack.c.h.b16 %v440
      %v1350 = vunpack.c.l.b16 %v441
      %v1351 = vunpack.c.h.b16 %v441
      %v1352 = vunpack.c.l.b16 %v442
      %v1353 = vunpack.c.h.b16 %v442
      %v1354 = vunpack.c.l.b16 %v443
      %v1355 = vunpack.c.l.b16 %v444
      %v1356 = vunpack.c.h.b16 %v444
      %v1357 = vunpack.c.l.b16 %v445
      %v1358 = vunpack.c.h.b16 %v445
      %v1359 = vunpack.c.l.b16 %v446
      %v1360 = vunpack.c.h.b16 %v446
      %v1361 = vunpack.c.l.b16 %v447
      %v1362 = vunpack.c.h.b16 %v447
      %v1363 = vunpack.c.l.b16 %v448
      %v1364 = vunpack.c.h.b16 %v448
      %v1365 = vunpack.c.l.b16 %v449
      %v1366 = vunpack.c.h.b16 %v449
      %v1367 = vunpack.c.l.b16 %v450
      %v1368 = vunpack.c.h.b16 %v450
      %v1369 = vunpack.c.l.b16 %v451
      %v1370 = vunpack.c.h.b16 %v451
      %v1371 = vunpack.c.l.b16 %v452
      %v1372 = vunpack.c.h.b16 %v452
      %v1373 = vunpack.c.l.b16 %v453
      %v1374 = vunpack.c.h.b16 %v453
      %v1375 = vunpack.c.l.b16 %v454
      %v1376 = vunpack.c.h.b16 %v454
      %v1377 = vunpack.c.l.b16 %v455
      %v1378 = vunpack.c.h.b16 %v455
      %v1379 = vunpack.c.l.b16 %v456
      %v1380 = vunpack.c.l.b16 %v457
      %v1381 = vunpack.c.h.b16 %v457
      %v1382 = vunpack.c.l.b16 %v458
      %v1383 = vunpack.c.h.b16 %v458
      %v1384 = vunpack.c.l.b16 %v459
      %v1385 = vunpack.c.h.b16 %v459
      %v1386 = vunpack.c.l.b16 %v460
      %v1387 = vunpack.c.h.b16 %v460
      %v1388 = vunpack.c.l.b16 %v461
      %v1389 = vunpack.c.h.b16 %v461
      %v1390 = vunpack.c.l.b16 %v462
      %v1391 = vunpack.c.h.b16 %v462
      %v1392 = vunpack.c.l.b16 %v463
      %v1393 = vunpack.c.h.b16 %v463
      %v1394 = vunpack.c.l.b16 %v464
      %v1395 = vunpack.c.h.b16 %v464
      %v1396 = vunpack.c.l.b16 %v465
      %v1397 = vunpack.c.h.b16 %v465
      %v1398 = vunpack.c.l.b16 %v466
      %v1399 = vunpack.c.h.b16 %v466
      %v1400 = vunpack.c.l.b16 %v467
      %v1401 = vunpack.c.h.b16 %v467
      %v1402 = vunpack.c.l.b16 %v468
      %v1403 = vunpack.c.h.b16 %v468
      %v1404 = vunpack.c.l.b16 %v469
      %v1405 = vunpack.c.l.b16 %v470
      %v1406 = vunpack.c.h.b16 %v470
      %v1407 = vunpack.c.l.b16 %v471
      %v1408 = vunpack.c.h.b16 %v471
      %v1409 = vunpack.c.l.b16 %v472
      %v1410 = vunpack.c.h.b16 %v472
      %v1411 = vunpack.c.l.b16 %v473
      %v1412 = vunpack.c.h.b16 %v473
      %v1413 = vunpack.c.l.b16 %v474
      %v1414 = vunpack.c.h.b16 %v474
      %v1415 = vunpack.c.l.b16 %v475
      %v1416 = vunpack.c.h.b16 %v475
      %v1417 = vunpack.c.l.b16 %v476
      %v1418 = vunpack.c.h.b16 %v476
      %v1419 = vunpack.c.l.b16 %v477
      %v1420 = vunpack.c.h.b16 %v477
      %v1421 = vunpack.c.l.b16 %v478
      %v1422 = vunpack.c.h.b16 %v478
      %v1423 = vunpack.c.l.b16 %v479
      %v1424 = vunpack.c.h.b16 %v479
      %v1425 = vunpack.c.l.b16 %v480
      %v1426 = vunpack.c.h.b16 %v480
      %v1427 = vunpack.c.l.b16 %v481
      %v1428 = vunpack.c.h.b16 %v481
      %v1429 = vunpack.c.l.b16 %v482
      %v1430 = vunpack.c.l.b16 %v483
      %v1431 = vunpack.c.h.b16 %v483
      %v1432 = vunpack.c.l.b16 %v484
      %v1433 = vunpack.c.h.b16 %v484
      %v1434 = vunpack.c.l.b16 %v485
      %v1435 = vunpack.c.h.b16 %v485
      %v1436 = vunpack.c.l.b16 %v486
      %v1437 = vunpack.c.h.b16 %v486
      %v1438 = vunpack.c.l.b16 %v487
      %v1439 = vunpack.c.h.b16 %v487
      %v1440 = vunpack.c.l.b16 %v488
      %v1441 = vunpack.c.h.b16 %v488
      %v1442 = vunpack.c.l.b16 %v489
      %v1443 = vunpack.c.h.b16 %v489
      %v1444 = vunpack.c.l.b16 %v490
      %v1445 = vunpack.c.h.b16 %v490
      %v1446 = vunpack.c.l.b16 %v491
      %v1447 = vunpack.c.h.b16 %v491
      %v1448 = vunpack.c.l.b16 %v492
      %v1449 = vunpack.c.h.b16 %v492
      %v1450 = vunpack.c.l.b16 %v493
      %v1451 = vunpack.c.h.b16 %v493
      %v1452 = vunpack.c.l.b16 %v494
      %v1453 = vunpack.c.h.b16 %v494
      %v1454 = vunpack.c.l.b16 %v495
      %v1455 = vunpack.c.l.b16 %v496
      %v1456 = vunpack.c.h.b16 %v496
      %v1457 = vunpack.c.l.b16 %v497
      %v1458 = vunpack.c.h.b16 %v497
      %v1459 = vunpack.c.l.b16 %v498
      %v1460 = vunpack.c.h.b16 %v498
      %v1461 = vunpack.c.l.b16 %v499
      %v1462 = vunpack.c.h.b16 %v499
      %v1463 = vunpack.c.l.b16 %v500
      %v1464 = vunpack.c.h.b16 %v500
      %v1465 = vunpack.c.l.b16 %v501
      %v1466 = vunpack.c.h.b16 %v501
      %v1467 = vunpack.c.l.b16 %v502
      %v1468 = vunpack.c.h.b16 %v502
      %v1469 = vunpack.c.l.b16 %v503
      %v1470 = vunpack.c.h.b16 %v503
      %v1471 = vunpack.c.l.b16 %v504
      %v1472 = vunpack.c.h.b16 %v504
      %v1473 = vunpack.c.l.b16 %v505
      %v1474 = vunpack.c.h.b16 %v505
      %v1475 = vunpack.c.l.b16 %v506
      %v1476 = vunpack.c.h.b16 %v506
      %v1477 = vunpack.c.l.b16 %v507
      %v1478 = vunpack.c.h.b16 %v507
      %v1479 = vunpack.c.l.b16 %v508
      %v1480 = vunpack.c.l.b16 %v509
      %v1481 = vunpack.c.h.b16 %v509
      %v1482 = vunpack.c.l.b16 %v510
      %v1483 = vunpack.c.h.b16 %v510
      %v1484 = vunpack.c.l.b16 %v511
      %v1485 = vunpack.c.h.b16 %v511
      %v1486 = vunpack.c.l.b16 %v512
      %v1487 = vunpack.c.h.b16 %v512
      %v1488 = vunpack.c.l.b16 %v513
      %v1489 = vunpack.c.h.b16 %v513
      %v1490 = vunpack.c.l.b16 %v514
      %v1491 = vunpack.c.h.b16 %v514
      %v1492 = vunpack.c.l.b16 %v515
      %v1493 = vunpack.c.h.b16 %v515
      %v1494 = vunpack.c.l.b16 %v516
      %v1495 = vunpack.c.h.b16 %v516
      %v1496 = vunpack.c.l.b16 %v517
      %v1497 = vunpack.c.h.b16 %v517
      %v1498 = vunpack.c.l.b16 %v518
      %v1499 = vunpack.c.h.b16 %v518
      %v1500 = vunpack.c.l.b16 %v519
      %v1501 = vunpack.c.h.b16 %v519
      %v1502 = vunpack.c.l.b16 %v520
      %v1503 = vunpack.c.h.b16 %v520
      %v1504 = vunpack.c.l.b16 %v521
      %v1505 = vunpack.c.l.b16 %v522
      %v1506 = vunpack.c.h.b16 %v522
      %v1507 = vunpack.c.l.b16 %v523
      %v1508 = vunpack.c.h.b16 %v523
      %v1509 = vunpack.c.l.b16 %v524
      %v1510 = vunpack.c.h.b16 %v524
      %v1511 = vunpack.c.l.b16 %v525
      %v1512 = vunpack.c.h.b16 %v525
      %v1513 = vunpack.c.l.b16 %v526
      %v1514 = vunpack.c.h.b16 %v526
      %v1515 = vunpack.c.l.b16 %v527
      %v1516 = vunpack.c.h.b16 %v527
      %v1517 = vunpack.c.l.b16 %v528
      %v1518 = vunpack.c.h.b16 %v528
      %v1519 = vunpack.c.l.b16 %v529
      %v1520 = vunpack.c.h.b16 %v529
      %v1521 = vunpack.c.l.b16 %v530
      %v1522 = vunpack.c.h.b16 %v530
      %v1523 = vunpack.c.l.b16 %v531
      %v1524 = vunpack.c.h.b16 %v531
      %v1525 = vunpack.c.l.b16 %v532
      %v1526 = vunpack.c.h.b16 %v532
      %v1527 = vunpack.c.l.b16 %v533
      %v1528 = vunpack.c.h.b16 %v533
      %v1529 = vunpack.c.l.b16 %v534
      %v1530 = vunpack.c.l.b16 %v535
      %v1531 = vunpack.c.h.b16 %v535
      %v1532 = vunpack.c.l.b16 %v536
      %v1533 = vunpack.c.h.b16 %v536
      %v1534 = vunpack.c.l.b16 %v537
      %v1535 = vunpack.c.h.b16 %v537
      %v1536 = vunpack.c.l.b16 %v538
      %v1537 = vunpack.c.h.b16 %v538
      %v1538 = vunpack.c.l.b16 %v539
      %v1539 = vunpack.c.h.b16 %v539
      %v1540 = vunpack.c.l.b16 %v540
      %v1541 = vunpack.c.h.b16 %v540
      %v1542 = vunpack.c.l.b16 %v541
      %v1543 = vunpack.c.h.b16 %v541
      %v1544 = vunpack.c.l.b16 %v542
      %v1545 = vunpack.c.h.b16 %v542
      %v1546 = vunpack.c.l.b16 %v543
      %v1547 = vunpack.c.h.b16 %v543
      %v1548 = vunpack.c.l.b16 %v544
      %v1549 = vunpack.c.h.b16 %v544
      %v1550 = vunpack.c.l.b16 %v545
      %v1551 = vunpack.c.h.b16 %v545
      %v1552 = vunpack.c.l.b16 %v546
      %v1553 = vunpack.c.h.b16 %v546
      %v1554 = vunpack.c.l.b16 %v547
      %v1555 = vpack.c.b16 %v1180, %v1155
      %v1556 = vpack.c.b16 %v1181, %v1156
      %v1557 = vpack.c.b16 %v1182, %v1157
      %v1558 = vpack.c.b16 %v1183, %v1158
      %v1559 = vpack.c.b16 %v1184, %v1159
      %v1560 = vpack.c.b16 %v1185, %v1160
      %v1561 = vpack.c.b16 %v1186, %v1161
      %v1562 = vpack.c.b16 %v1187, %v1162
      %v1563 = vpack.c.b16 %v1188, %v1163
      %v1564 = vpack.c.b16 %v1189, %v1164
      %v1565 = vpack.c.b16 %v1190, %v1165
      %v1566 = vpack.c.b16 %v1191, %v1166
      %v1567 = vpack.c.b16 %v1192, %v1167
      %v1568 = vpack.c.b16 %v1193, %v1168
      %v1569 = vpack.c.b16 %v1194, %v1169
      %v1570 = vpack.c.b16 %v1195, %v1170
      %v1571 = vpack.c.b16 %v1196, %v1171
      %v1572 = vpack.c.b16 %v1197, %v1172
      %v1573 = vpack.c.b16 %v1198, %v1173
      %v1574 = vpack.c.b16 %v1199, %v1174
      %v1575 = vpack.c.b16 %v1200, %v1175
      %v1576 = vpack.c.b16 %v1201, %v1176
      %v1577 = vpack.c.b16 %v1202, %v1177
      %v1578 = vpack.c.b16 %v1203, %v1178
      %v1579 = vpack.c.b16 %v1204, %v1179
      %v1580 = vpack.c.b16 %v1230, %v1205
      %v1581 = vpack.c.b16 %v1231, %v1206
      %v1582 = vpack.c.b16 %v1232, %v1207
      %v1583 = vpack.c.b16 %v1233, %v1208
      %v1584 = vpack.c.b16 %v1234, %v1209
      %v1585 = vpack.c.b16 %v1235, %v1210
      %v1586 = vpack.c.b16 %v1236, %v1211
      %v1587 = vpack.c.b16 %v1237, %v1212
      %v1588 = vpack.c.b16 %v1238, %v1213
      %v1589 = vpack.c.b16 %v1239, %v1214
      %v1590 = vpack.c.b16 %v1240, %v1215
      %v1591 = vpack.c.b16 %v1241, %v1216
      %v1592 = vpack.c.b16 %v1242, %v1217
      %v1593 = vpack.c.b16 %v1243, %v1218
      %v1594 = vpack.c.b16 %v1244, %v1219
      %v1595 = vpack.c.b16 %v1245, %v1220
      %v1596 = vpack.c.b16 %v1246, %v1221
      %v1597 = vpack.c.b16 %v1247, %v1222
      %v1598 = vpack.c.b16 %v1248, %v1223
      %v1599 = vpack.c.b16 %v1249, %v1224
      %v1600 = vpack.c.b16 %v1250, %v1225
      %v1601 = vpack.c.b16 %v1251, %v1226
      %v1602 = vpack.c.b16 %v1252, %v1227
      %v1603 = vpack.c.b16 %v1253, %v1228
      %v1604 = vpack.c.b16 %v1254, %v1229
      %v1605 = vpack.c.b16 %v1280, %v1255
      %v1606 = vpack.c.b16 %v1281, %v1256
      %v1607 = vpack.c.b16 %v1282, %v1257
      %v1608 = vpack.c.b16 %v1283, %v1258
      %v1609 = vpack.c.b16 %v1284, %v1259
      %v1610 = vpack.c.b16 %v1285, %v1260
      %v1611 = vpack.c.b16 %v1286, %v1261
      %v1612 = vpack.c.b16 %v1287, %v1262
      %v1613 = vpack.c.b16 %v1288, %v1263
      %v1614 = vpack.c.b16 %v1289, %v1264
      %v1615 = vpack.c.b16 %v1290, %v1265
      %v1616 = vpack.c.b16 %v1291, %v1266
      %v1617 = vpack.c.b16 %v1292, %v1267
      %v1618 = vpack.c.b16 %v1293, %v1268
      %v1619 = vpack.c.b16 %v1294, %v1269
      %v1620 = vpack.c.b16 %v1295, %v1270
      %v1621 = vpack.c.b16 %v1296, %v1271
      %v1622 = vpack.c.b16 %v1297, %v1272
      %v1623 = vpack.c.b16 %v1298, %v1273
      %v1624 = vpack.c.b16 %v1299, %v1274
      %v1625 = vpack.c.b16 %v1300, %v1275
      %v1626 = vpack.c.b16 %v1301, %v1276
      %v1627 = vpack.c.b16 %v1302, %v1277
      %v1628 = vpack.c.b16 %v1303, %v1278
      %v1629 = vpack.c.b16 %v1304, %v1279
      %v1630 = vpack.c.b16 %v1330, %v1305
      %v1631 = vpack.c.b16 %v1331, %v1306
      %v1632 = vpack.c.b16 %v1332, %v1307
      %v1633 = vpack.c.b16 %v1333, %v1308
      %v1634 = vpack.c.b16 %v1334, %v1309
      %v1635 = vpack.c.b16 %v1335, %v1310
      %v1636 = vpack.c.b16 %v1336, %v1311
      %v1637 = vpack.c.b16 %v1337, %v1312
      %v1638 = vpack.c.b16 %v1338, %v1313
      %v1639 = vpack.c.b16 %v1339, %v1314
      %v1640 = vpack.c.b16 %v1340, %v1315
      %v1641 = vpack.c.b16 %v1341, %v1316
      %v1642 = vpack.c.b16 %v1342, %v1317
      %v1643 = vpack.c.b16 %v1343, %v1318
      %v1644 = vpack.c.b16 %v1344, %v1319
      %v1645 = vpack.c.b16 %v1345, %v1320
      %v1646 = vpack.c.b16 %v1346, %v1321
      %v1647 = vpack.c.b16 %v1347, %v1322
      %v1648 = vpack.c.b16 %v1348, %v1323
      %v1649 = vpack.c.b16 %v1349, %v1324
      %v1650 = vpack.c.b16 %v1350, %v1325
      %v1651 = vpack.c.b16 %v1351, %v1326
      %v1652 = vpack.c.b16 %v1352, %v1327
      %v1653 = vpack.c.b16 %v1353, %v1328
      %v1654 = vpack.c.b16 %v1354, %v1329
      %v1655 = vpack.c.b16 %v1380, %v1355
      %v1656 = vpack.c.b16 %v1381, %v1356
      %v1657 = vpack.c.b16 %v1382, %v1357
      %v1658 = vpack.c.b16 %v1383, %v1358
      %v1659 = vpack.c.b16 %v1384, %v1359
      %v1660 = vpack.c.b16 %v1385, %v1360
      %v1661 = vpack.c.b16 %v1386, %v1361
      %v1662 = vpack.c.b16 %v1387, %v1362
      %v1663 = vpack.c.b16 %v1388, %v1363
      %v1664 = vpack.c.b16 %v1389, %v1364
      %v1665 = vpack.c.b16 %v1390, %v1365
      %v1666 = vpack.c.b16 %v1391, %v1366
      %v1667 = vpack.c.b16 %v1392, %v1367
      %v1668 = vpack.c.b16 %v1393, %v1368
      %v1669 = vpack.c.b16 %v1394, %v1369
      %v1670 = vpack.c.b16 %v1395, %v1370
      %v1671 = vpack.c.b16 %v1396, %v1371
      %v1672 = vpack.c.b16 %v1397, %v1372
      %v1673 = vpack.c.b16 %v1398, %v1373
      %v1674 = vpack.c.b16 %v1399, %v1374
      %v1675 = vpack.c.b16 %v1400, %v1375
      %v1676 = vpack.c.b16 %v1401, %v1376
      %v1677 = vpack.c.b16 %v1402, %v1377
      %v1678 = vpack.c.b16 %v1403, %v1378
      %v1679 = vpack.c.b16 %v1404, %v1379
      %v1680 = vpack.c.b16 %v1430, %v1405
      %v1681 = vpack.c.b16 %v1431, %v1406
      %v1682 = vpack.c.b16 %v1432, %v1407
      %v1683 = vpack.c.b16 %v1433, %v1408
      %v1684 = vpack.c.b16 %v1434, %v1409
      %v1685 = vpack.c.b16 %v1435, %v1410
      %v1686 = vpack.c.b16 %v1436, %v1411
      %v1687 = vpack.c.b16 %v1437, %v1412
      %v1688 = vpack.c.b16 %v1438, %v1413
      %v1689 = vpack.c.b16 %v1439, %v1414
      %v1690 = vpack.c.b16 %v1440, %v1415
      %v1691 = vpack.c.b16 %v1441, %v1416
      %v1692 = vpack.c.b16 %v1442, %v1417
      %v1693 = vpack.c.b16 %v1443, %v1418
      %v1694 = vpack.c.b16 %v1444, %v1419
      %v1695 = vpack.c.b16 %v1445, %v1420
      %v1696 = vpack.c.b16 %v1446, %v1421
      %v1697 = vpack.c.b16 %v1447, %v1422
      %v1698 = vpack.c.b16 %v1448, %v1423
      %v1699 = vpack.c.b16 %v1449, %v1424
      %v1700 = vpack.c.b16 %v1450, %v1425
      %v1701 = vpack.c.b16 %v1451, %v1426
      %v1702 = vpack.c.b16 %v1452, %v1427
      %v1703 = vpack.c.b16 %v1453, %v1428
      %v1704 = vpack.c.b16 %v1454, %v1429
      %v1705 = vpack.c.b16 %v1480, %v1455
      %v1706 = vpack.c.b16 %v1481, %v1456
      %v1707 = vpack.c.b16 %v1482, %v1457
      %v1708 = vpack.c.b16 %v1483, %v1458
      %v1709 = vpack.c.b16 %v1484, %v1459
      %v1710 = vpack.c.b16 %v1485, %v1460
      %v1711 = vpack.c.b16 %v1486, %v1461
      %v1712 = vpack.c.b16 %v1487, %v1462
      %v1713 = vpack.c.b16 %v1488, %v1463
      %v1714 = vpack.c.b16 %v1489, %v1464
      %v1715 = vpack.c.b16 %v1490, %v1465
      %v1716 = vpack.c.b16 %v1491, %v1466
      %v1717 = vpack.c.b16 %v1492, %v1467
      %v1718 = vpack.c.b16 %v1493, %v1468
      %v1719 = vpack.c.b16 %v1494, %v1469
      %v1720 = vpack.c.b16 %v1495, %v1470
      %v1721 = vpack.c.b16 %v1496, %v1471
      %v1722 = vpack.c.b16 %v1497, %v1472
      %v1723 = vpack.c.b16 %v1498, %v1473
      %v1724 = vpack.c.b16 %v1499, %v1474
      %v1725 = vpack.c.b16 %v1500, %v1475
      %v1726 = vpack.c.b16 %v1501, %v1476
      %v1727 = vpack.c.b16 %v1502, %v1477
      %v1728 = vpack.c.b16 %v1503, %v1478
      %v1729 = vpack.c.b16 %v1504, %v1479
      %v1730 = vpack.c.b16 %v1530, %v1505
      %v1731 = vpack.c.b16 %v1531, %v1506
      %v1732 = vpack.c.b16 %v1532, %v1507
      %v1733 = vpack.c.b16 %v1533, %v1508
      %v1734 = vpack.c.b16 %v1534, %v1509
      %v1735 = vpack.c.b16 %v1535, %v1510
      %v1736 = vpack.c.b16 %v1536, %v1511
      %v1737 = vpack.c.b16 %v1537, %v1512
      %v1738 = vpack.c.b16 %v1538, %v1513
      %v1739 = vpack.c.b16 %v1539, %v1514
      %v1740 = vpack.c.b16 %v1540, %v1515
      %v1741 = vpack.c.b16 %v1541, %v1516
      %v1742 = vpack.c.b16 %v1542, %v1517
      %v1743 = vpack.c.b16 %v1543, %v1518
      %v1744 = vpack.c.b16 %v1544, %v1519
      %v1745 = vpack.c.b16 %v1545, %v1520
      %v1746 = vpack.c.b16 %v1546, %v1521
      %v1747 = vpack.c.b16 %v1547, %v1522
      %v1748 = vpack.c.b16 %v1548, %v1523
      %v1749 = vpack.c.b16 %v1549, %v1524
      %v1750 = vpack.c.b16 %v1550, %v1525
      %v1751 = vpack.c.b16 %v1551, %v1526
      %v1752 = vpack.c.b16 %v1552, %v1527
      %v1753 = vpack.c.b16 %v1553, %v1528
      %v1754 = vpack.c.b16 %v1554, %v1529
      %v2339 = vunpack.c.l.b16 %v548
      %v2340 = vunpack.c.l.b16 %v549
      %v2341 = vunpack.c.l.b16 %v550
      %v2342 = vunpack.c.l.b16 %v551
      %v2343 = vunpack.c.l.b16 %v552
      %v2344 = vunpack.c.l.b16 %v553
      %v2345 = vunpack.c.l.b16 %v554
      %v2346 = vunpack.c.l.b16 %v555
      %v2347 = vunpack.c.l.b16 %v556
      %v2348 = vunpack.c.l.b16 %v557
      %v2349 = vunpack.c.l.b16 %v558
      %v2350 = vunpack.c.l.b16 %v559
      %v2351 = vunpack.c.l.b16 %v560
      %v2352 = vunpack.c.l.b16 %v561
      %v2353 = vunpack.c.l.b16 %v562
      %v2354 = vunpack.c.l.b16 %v563
      %v2355 = vunpack.c.l.b16 %v564
      %v2356 = vunpack.c.l.b16 %v565
      %v2357 = vunpack.c.l.b16 %v566
      %v2358 = vunpack.c.l.b16 %v567
      %v2359 = vunpack.c.l.b16 %v568
      %v2360 = vunpack.c.l.b16 %v569
      %v2361 = vunpack.c.l.b16 %v570
      %v2362 = vunpack.c.l.b16 %v571
      %v2363 = vunpack.c.l.b16 %v572
      %v2364 = vunpack.c.l.b16 %v573
      %v2365 = vunpack.c.l.b16 %v574
      %v2366 = vunpack.c.l.b16 %v575
      %v2367 = vunpack.c.l.b16 %v576
      %v2368 = vunpack.c.l.b16 %v577
      %v2369 = vunpack.c.l.b16 %v578
      %v2370 = vunpack.c.l.b16 %v579
      %v2371 = vunpack.c.l.b16 %v580
      %v2372 = vunpack.c.l.b16 %v581
      %v2373 = vunpack.c.l.b16 %v582
      %v2374 = vunpack.c.l.b16 %v583
      %v2375 = vunpack.c.l.b16 %v584
      %v2376 = vunpack.c.l.b16 %v585
      %v2377 = vunpack.c.l.b16 %v586
      %v2378 = vunpack.c.l.b16 %v587
      %v2379 = vunpack.c.l.b16 %v588
      %v2380 = vunpack.c.l.b16 %v589
      %v2381 = vunpack.c.l.b16 %v590
      %v2382 = vunpack.c.l.b16 %v591
      %v2383 = vunpack.c.l.b16 %v592
      %v2384 = vunpack.c.l.b16 %v593
      %v2385 = vunpack.c.l.b16 %v594
      %v2386 = vunpack.c.l.b16 %v595
      %v2387 = vunpack.c.l.b16 %v596
      %v2388 = vunpack.c.l.b16 %v597
      %v2389 = vunpack.c.l.b16 %v598
      %v2390 = vunpack.c.l.b16 %v599
      %v2391 = vunpack.c.l.b16 %v600
      %v2392 = vunpack.c.l.b16 %v601
      %v2393 = vunpack.c.l.b16 %v602
      %v2394 = vunpack.c.l.b16 %v603
      %v2395 = vunpack.c.l.b16 %v604
      %v2396 = vunpack.c.l.b16 %v605
      %v2397 = vunpack.c.l.b16 %v606
      %v2398 = vunpack.c.l.b16 %v607
      %v2399 = vunpack.c.l.b16 %v608
      %v2400 = vunpack.c.l.b16 %v609
      %v2401 = vunpack.c.l.b16 %v610
      %v2402 = vunpack.c.l.b16 %v611
      %v2403 = vunpack.c.l.b16 %v612
      %v2404 = vunpack.c.l.b16 %v613
      %v2405 = vunpack.c.l.b16 %v614
      %v2406 = vunpack.c.l.b16 %v615
      %v2407 = vunpack.c.l.b16 %v616
      %v2408 = vunpack.c.l.b16 %v617
      %v2409 = vunpack.c.l.b16 %v618
      %v2410 = vunpack.c.l.b16 %v619
      %v2411 = vunpack.c.l.b16 %v620
      %v2412 = vunpack.c.l.b16 %v621
      %v2413 = vunpack.c.l.b16 %v622
      %v2414 = vunpack.c.l.b16 %v623
      %v2415 = vunpack.c.l.b16 %v624
      %v2416 = vunpack.c.l.b16 %v625
      %v2417 = vunpack.c.l.b16 %v626
      %v2418 = vunpack.c.l.b16 %v627
      %v2419 = vunpack.c.l.b16 %v628
      %v2420 = vunpack.c.l.b16 %v629
      %v2421 = vunpack.c.l.b16 %v630
      %v2422 = vunpack.c.l.b16 %v631
      %v2423 = vunpack.c.l.b16 %v632
      %v2424 = vunpack.c.l.b16 %v633
      %v2425 = vunpack.c.l.b16 %v634
      %v2426 = vunpack.c.l.b16 %v635
      %v2427 = vunpack.c.l.b16 %v636
      %v2428 = vunpack.c.l.b16 %v637
      %v2429 = vunpack.c.l.b16 %v638
      %v2430 = vunpack.c.l.b16 %v639
      %v2431 = vunpack.c.l.b16 %v640
      %v2432 = vunpack.c.l.b16 %v641
      %v2433 = vunpack.c.l.b16 %v642
      %v2434 = vunpack.c.l.b16 %v643
      %v2435 = vunpack.c.l.b16 %v644
      %v2436 = vunpack.c.l.b16 %v645
      %v2437 = vunpack.c.l.b16 %v646
      %v2438 = vunpack.c.l.b16 %v647
      %v2439 = vunpack.c.l.b16 %v648
      %v2440 = vunpack.c.l.b16 %v649
      %v2441 = vunpack.c.l.b16 %v650
      %v2442 = vunpack.c.l.b16 %v651
      %v2443 = vunpack.c.l.b16 %v652
      %v2444 = vunpack.c.l.b16 %v653
      %v2445 = vunpack.c.l.b16 %v654
      %v2446 = vunpack.c.l.b16 %v655
      %v2447 = vunpack.c.l.b16 %v656
      %v2448 = vunpack.c.l.b16 %v657
      %v2449 = vunpack.c.l.b16 %v658
      %v2450 = vunpack.c.l.b16 %v659
      %v2451 = vunpack.c.l.b16 %v660
      %v2452 = vunpack.c.l.b16 %v661
      %v2453 = vunpack.c.l.b16 %v662
      %v2454 = vunpack.c.l.b16 %v663
      %v2455 = vunpack.c.l.b16 %v664
      %v2456 = vunpack.c.l.b16 %v665
      %v2457 = vunpack.c.l.b16 %v666
      %v2458 = vunpack.c.l.b16 %v667
      %v2459 = vunpack.c.l.b16 %v668
      %v2460 = vunpack.c.l.b16 %v669
      %v2461 = vunpack.c.l.b16 %v670
      %v2462 = vunpack.c.l.b16 %v671
      %v2463 = vunpack.c.l.b16 %v672
      %v2464 = vunpack.c.l.b16 %v673
      %v2465 = vunpack.c.l.b16 %v674
      %v2466 = vunpack.c.l.b16 %v675
      %v2467 = vunpack.c.l.b16 %v676
      %v2468 = vunpack.c.l.b16 %v677
      %v2469 = vunpack.c.l.b16 %v678
      %v2470 = vunpack.c.l.b16 %v679
      %v2471 = vunpack.c.l.b16 %v680
      %v2472 = vunpack.c.l.b16 %v681
      %v2473 = vunpack.c.l.b16 %v682
      %v2474 = vunpack.c.l.b16 %v683
      %v2475 = vunpack.c.l.b16 %v684
      %v2476 = vunpack.c.l.b16 %v685
      %v2477 = vunpack.c.l.b16 %v686
      %v2478 = vunpack.c.l.b16 %v687
      %v2479 = vunpack.c.l.b16 %v688
      %v2480 = vunpack.c.l.b16 %v689
      %v2481 = vunpack.c.l.b16 %v690
      %v2482 = vunpack.c.l.b16 %v691
      %v2483 = vunpack.c.l.b16 %v692
      %v2484 = vunpack.c.l.b16 %v693
      %v2485 = vunpack.c.l.b16 %v694
      %v2486 = vunpack.c.l.b16 %v695
      %v2487 = vunpack.c.l.b16 %v696
      %v2488 = vunpack.c.l.b16 %v697
      %v2489 = vunpack.c.l.b16 %v698
      %v2490 = vunpack.c.l.b16 %v699
      %v2491 = vunpack.c.l.b16 %v700
      %v2492 = vunpack.c.l.b16 %v701
      %v2493 = vunpack.c.l.b16 %v702
      %v2494 = vunpack.c.l.b16 %v703
      %v2495 = vunpack.c.l.b16 %v704
      %v2496 = vunpack.c.l.b16 %v705
      %v2497 = vunpack.c.l.b16 %v706
      %v2498 = vunpack.c.l.b16 %v707
      %v2499 = vunpack.c.l.b16 %v708
      %v2500 = vunpack.c.l.b16 %v709
      %v2501 = vunpack.c.l.b16 %v710
      %v2502 = vunpack.c.l.b16 %v711
      %v2503 = vunpack.c.l.b16 %v712
      %v2504 = vunpack.c.l.b16 %v713
      %v2505 = vunpack.c.l.b16 %v714
      %v2506 = vunpack.c.l.b16 %v715
      %v2507 = vunpack.c.l.b16 %v716
      %v2508 = vunpack.c.l.b16 %v717
      %v2509 = vunpack.c.l.b16 %v718
      %v2510 = vunpack.c.l.b16 %v719
      %v2511 = vunpack.c.l.b16 %v720
      %v2512 = vunpack.c.l.b16 %v721
      %v2513 = vunpack.c.l.b16 %v722
      %v2514 = vunpack.c.l.b16 %v723
      %v2515 = vunpack.c.l.b16 %v724
      %v2516 = vunpack.c.l.b16 %v725
      %v2517 = vunpack.c.l.b16 %v726
      %v2518 = vunpack.c.l.b16 %v727
      %v2519 = vunpack.c.l.b16 %v728
      %v2520 = vunpack.c.l.b16 %v729
      %v2521 = vunpack.c.l.b16 %v730
      %v2522 = vunpack.c.l.b16 %v731
      %v2523 = vunpack.c.l.b16 %v732
      %v2524 = vunpack.c.l.b16 %v733
      %v2525 = vunpack.c.l.b16 %v734
      %v2526 = vunpack.c.l.b16 %v735
      %v2527 = vunpack.c.l.b16 %v736
      %v2528 = vunpack.c.l.b16 %v737
      %v2529 = vunpack.c.l.b16 %v738
      %v2530 = vunpack.c.l.b16 %v739
      %v2531 = vunpack.c.l.b16 %v740
      %v2532 = vunpack.c.l.b16 %v741
      %v2533 = vunpack.c.l.b16 %v742
      %v2534 = vunpack.c.l.b16 %v743
      %v2535 = vunpack.c.l.b16 %v744
      %v2536 = vunpack.c.l.b16 %v745
      %v2537 = vunpack.c.l.b16 %v746
      %v2538 = vunpack.c.l.b16 %v747
      %v2539 = vunpack.c.l.b16 %v748
      %v2540 = vunpack.c.l.b16 %v749
      %v2541 = vunpack.c.l.b16 %v750
      %v2542 = vunpack.c.l.b16 %v751
      %v2543 = vunpack.c.l.b16 %v752
      %v2544 = vunpack.c.l.b16 %v753
      %v2545 = vunpack.c.l.b16 %v754
      %v2546 = vunpack.c.l.b16 %v755
      %v2547 = vunpack.c.l.b16 %v756
      %v2548 = vunpack.c.l.b16 %v757
      %v2549 = vunpack.c.l.b16 %v758
      %v2550 = vunpack.c.l.b16 %v759
      %v2551 = vunpack.c.l.b16 %v760
      %v2552 = vunpack.c.l.b16 %v761
      %v2553 = vunpack.c.l.b16 %v762
      %v2554 = vunpack.c.l.b16 %v763
      %v2555 = vunpack.c.l.b16 %v764
      %v2556 = vunpack.c.l.b16 %v765
      %v2557 = vunpack.c.l.b16 %v766
      %v2558 = vunpack.c.l.b16 %v767
      %v2559 = vunpack.c.l.b16 %v768
      %v2560 = vunpack.c.l.b16 %v769
      %v2561 = vunpack.c.l.b16 %v770
      %v2562 = vunpack.c.l.b16 %v771
      %v2563 = vunpack.c.l.b16 %v772
      %v2564 = vunpack.c.l.b16 %v773
      %v2565 = vunpack.c.l.b16 %v774
      %v2566 = vunpack.c.l.b16 %v775
      %v2567 = vunpack.c.l.b16 %v776
      %v2568 = vunpack.c.l.b16 %v777
      %v2569 = vunpack.c.l.b16 %v778
      %v2570 = vunpack.c.l.b16 %v779
      %v2571 = vunpack.c.l.b16 %v780
      %v2572 = vunpack.c.l.b16 %v781
      %v2573 = vunpack.c.l.b16 %v782
      %v2574 = vunpack.c.l.b16 %v783
      %v2575 = vunpack.c.l.b16 %v784
      %v2576 = vunpack.c.l.b16 %v785
      %v2577 = vunpack.c.l.b16 %v786
      %v2578 = vunpack.c.l.b16 %v787
      %v2579 = vunpack.c.l.b16 %v788
      %v2580 = vunpack.c.l.b16 %v789
      %v2581 = vunpack.c.l.b16 %v790
      %v2582 = vunpack.c.l.b16 %v791
      %v2583 = vunpack.c.l.b16 %v792
      %v2584 = vunpack.c.l.b16 %v793
      %v2585 = vunpack.c.l.b16 %v794
      %v2586 = vunpack.c.l.b16 %v795
      %v2587 = vunpack.c.l.b16 %v796
      %v2588 = vunpack.c.l.b16 %v797
      %v2589 = vunpack.c.l.b16 %v798
      %v2590 = vunpack.c.l.b16 %v799
      %v2591 = vunpack.c.l.b16 %v800
      %v2592 = vunpack.c.l.b16 %v801
      %v2593 = vunpack.c.l.b16 %v802
      %v2594 = vunpack.c.l.b16 %v803
      %v2595 = vunpack.c.l.b16 %v804
      %v2596 = vunpack.c.l.b16 %v805
      %v2597 = vunpack.c.l.b16 %v806
      %v2598 = vunpack.c.l.b16 %v807
      %v2599 = vunpack.c.l.b16 %v808
      %v2600 = vunpack.c.l.b16 %v809
      %v2601 = vunpack.c.l.b16 %v810
      %v2602 = vunpack.c.l.b16 %v811
      %v2603 = vunpack.c.l.b16 %v812
      %v2604 = vunpack.c.l.b16 %v813
      %v2605 = vunpack.c.l.b16 %v814
      %v2606 = vunpack.c.l.b16 %v815
      %v2607 = vunpack.c.l.b16 %v816
      %v2608 = vunpack.c.l.b16 %v817
      %v2609 = vunpack.c.l.b16 %v818
      %v2610 = vunpack.c.l.b16 %v819
      %v2611 = vunpack.c.l.b16 %v820
      %v2612 = vunpack.c.l.b16 %v821
      %v2613 = vunpack.c.l.b16 %v822
      %v2614 = vunpack.c.l.b16 %v823
      %v2615 = vunpack.c.l.b16 %v824
      %v2616 = vunpack.c.l.b16 %v825
      %v2617 = vunpack.c.l.b16 %v826
      %v2618 = vunpack.c.l.b16 %v827
      %v2619 = vunpack.c.l.b16 %v828
      %v2620 = vunpack.c.l.b16 %v829
      %v2621 = vunpack.c.l.b16 %v830
      %v2622 = vunpack.c.l.b16 %v831
      %v2623 = vunpack.c.l.b16 %v832
      %v2624 = vunpack.c.l.b16 %v833
      %v2625 = vunpack.c.l.b16 %v834
      %v2626 = vunpack.c.l.b16 %v835
      %v2627 = vunpack.c.l.b16 %v836
      %v2628 = vunpack.c.l.b16 %v837
      %v2629 = vunpack.c.l.b16 %v838
      %v2630 = vunpack.c.l.b16 %v839
      %v2631 = vunpack.c.l.b16 %v840
      %v2632 = vunpack.c.l.b16 %v841
      %v2633 = vunpack.c.l.b16 %v842
      %v2634 = vunpack.c.l.b16 %v843
      %v2635 = vunpack.c.l.b16 %v844
      %v2636 = vunpack.c.l.b16 %v845
      %v2637 = vunpack.c.l.b16 %v846
      %v2638 = vunpack.c.l.b16 %v847
      %v2639 = vunpack.c.l.b16 %v848
      %v2640 = vunpack.c.l.b16 %v849
      %v2641 = vunpack.c.l.b16 %v850
      %v2642 = vunpack.c.l.b16 %v851
      %v2643 = vunpack.c.l.b16 %v852
      %v2644 = vunpack.c.l.b16 %v853
      %v2645 = vunpack.c.l.b16 %v854
      %v2646 = vunpack.c.l.b16 %v855
      %v2647 = vunpack.c.l.b16 %v856
      %v2648 = vunpack.c.l.b16 %v857
      %v2649 = vunpack.c.l.b16 %v858
      %v2650 = vunpack.c.l.b16 %v859
      %v2651 = vunpack.c.l.b16 %v860
      %v2652 = vunpack.c.l.b16 %v861
      %v2653 = vunpack.c.l.b16 %v862
      %v2654 = vunpack.c.l.b16 %v863
      %v2655 = vunpack.c.l.b16 %v864
      %v2656 = vunpack.c.l.b16 %v865
      %v2657 = vunpack.c.l.b16 %v866
      %v2658 = vunpack.c.l.b16 %v867
      %v2659 = vunpack.c.l.b16 %v868
      %v2660 = vunpack.c.l.b16 %v869
      %v2661 = vunpack.c.l.b16 %v870
      %v2662 = vunpack.c.l.b16 %v871
      %v2663 = vunpack.c.l.b16 %v872
      %v2664 = vunpack.c.l.b16 %v873
      %v2665 = vunpack.c.l.b16 %v874
      %v2666 = vunpack.c.l.b16 %v875
      %v2667 = vunpack.c.l.b16 %v876
      %v2668 = vunpack.c.l.b16 %v877
      %v2669 = vunpack.c.l.b16 %v878
      %v2670 = vunpack.c.l.b16 %v879
      %v2671 = vunpack.c.l.b16 %v880
      %v2672 = vunpack.c.l.b16 %v881
      %v2673 = vunpack.c.l.b16 %v882
      %v2674 = vunpack.c.l.b16 %v883
      %v2675 = vunpack.c.l.b16 %v884
      %v2676 = vunpack.c.l.b16 %v885
      %v2677 = vunpack.c.l.b16 %v886
      %v2678 = vunpack.c.l.b16 %v887
      %v2679 = vunpack.c.l.b16 %v888
      %v2680 = vunpack.c.l.b16 %v889
      %v2681 = vunpack.c.l.b16 %v890
      %v2682 = vunpack.c.l.b16 %v891
      %v2683 = vunpack.c.l.b16 %v892
      %v2684 = vunpack.c.l.b16 %v893
      %v2685 = vunpack.c.l.b16 %v894
      %v2686 = vunpack.c.l.b16 %v895
      %v2687 = vunpack.c.l.b16 %v896
      %v2688 = vunpack.c.l.b16 %v897
      %v2689 = vunpack.c.l.b16 %v898
      %v2690 = vunpack.c.l.b16 %v899
      %v2691 = vunpack.c.l.b16 %v900
      %v2692 = vunpack.c.l.b16 %v901
      %v2693 = vunpack.c.l.b16 %v902
      %v2694 = vunpack.c.l.b16 %v903
      %v2695 = vunpack.c.l.b16 %v904
      %v2696 = vunpack.c.l.b16 %v905
      %v2697 = vunpack.c.l.b16 %v906
      %v2698 = vunpack.c.l.b16 %v907
      %v2699 = vunpack.c.l.b16 %v908
      %v2700 = vunpack.c.l.b16 %v909
      %v2701 = vunpack.c.l.b16 %v910
      %v2702 = vunpack.c.l.b16 %v911
      %v2703 = vunpack.c.l.b16 %v912
      %v2704 = vunpack.c.l.b16 %v913
      %v2705 = vunpack.c.l.b16 %v914
      %v2706 = vunpack.c.l.b16 %v915
      %v2707 = vunpack.c.l.b16 %v916
      %v2708 = vunpack.c.l.b16 %v917
      %v2709 = vunpack.c.l.b16 %v918
      %v2710 = vunpack.c.l.b16 %v919
      %v2711 = vunpack.c.l.b16 %v920
      %v2712 = vunpack.c.l.b16 %v921
      %v2713 = vunpack.c.l.b16 %v922
      %v2714 = vunpack.c.l.b16 %v923
      %v2715 = vunpack.c.l.b16 %v924
      %v2716 = vunpack.c.l.b16 %v925
      %v2717 = vunpack.c.l.b16 %v926
      %v2718 = vunpack.c.l.b16 %v927
      %v2719 = vunpack.c.l.b16 %v928
      %v2720 = vunpack.c.l.b16 %v929
      %v2721 = vunpack.c.l.b16 %v930
      %v2722 = vunpack.c.l.b16 %v931
      %v2723 = vunpack.c.l.b16 %v932
      %v2724 = vunpack.c.l.b16 %v933
      %v2725 = vunpack.c.l.b16 %v934
      %v2726 = vunpack.c.l.b16 %v935
      %v2727 = vunpack.c.l.b16 %v936
      %v2728 = vunpack.c.l.b16 %v937
      %v2729 = vunpack.c.l.b16 %v938
      %v2730 = vunpack.c.l.b16 %v939
      %v2731 = vpack.c.b16 %v2340, %v2339
      %v2732 = vpack.c.b16 %v2342, %v2341
      %v2733 = vpack.c.b16 %v2344, %v2343
      %v2734 = vpack.c.b16 %v2346, %v2345
      %v2735 = vpack.c.b16 %v2348, %v2347
      %v2736 = vpack.c.b16 %v2350, %v2349
      %v2737 = vpack.c.b16 %v2352, %v2351
      %v2738 = vpack.c.b16 %v2354, %v2353
      %v2739 = vpack.c.b16 %v2356, %v2355
      %v2740 = vpack.c.b16 %v2358, %v2357
      %v2741 = vpack.c.b16 %v2360, %v2359
      %v2742 = vpack.c.b16 %v2362, %v2361
      %v2743 = vpack.c.b16 %v2364, %v2363
      %v2744 = vpack.c.b16 %v2366, %v2365
      %v2745 = vpack.c.b16 %v2368, %v2367
      %v2746 = vpack.c.b16 %v2370, %v2369
      %v2747 = vpack.c.b16 %v2372, %v2371
      %v2748 = vpack.c.b16 %v2374, %v2373
      %v2749 = vpack.c.b16 %v2376, %v2375
      %v2750 = vpack.c.b16 %v2378, %v2377
      %v2751 = vpack.c.b16 %v2380, %v2379
      %v2752 = vpack.c.b16 %v2382, %v2381
      %v2753 = vpack.c.b16 %v2384, %v2383
      %v2754 = vpack.c.b16 %v2386, %v2385
      %v2755 = vpack.c.b16 %v2388, %v2387
      %v2756 = vpack.c.b16 %v2390, %v2389
      %v2757 = vpack.c.b16 %v2392, %v2391
      %v2758 = vpack.c.b16 %v2394, %v2393
      %v2759 = vpack.c.b16 %v2396, %v2395
      %v2760 = vpack.c.b16 %v2398, %v2397
      %v2761 = vpack.c.b16 %v2400, %v2399
      %v2762 = vpack.c.b16 %v2402, %v2401
      %v2763 = vpack.c.b16 %v2404, %v2403
      %v2764 = vpack.c.b16 %v2406, %v2405
      %v2765 = vpack.c.b16 %v2408, %v2407
      %v2766 = vpack.c.b16 %v2410, %v2409
      %v2767 = vpack.c.b16 %v2412, %v2411
      %v2768 = vpack.c.b16 %v2414, %v2413
      %v2769 = vpack.c.b16 %v2416, %v2415
      %v2770 = vpack.c.b16 %v2418, %v2417
      %v2771 = vpack.c.b16 %v2420, %v2419
      %v2772 = vpack.c.b16 %v2422, %v2421
      %v2773 = vpack.c.b16 %v2424, %v2423
      %v2774 = vpack.c.b16 %v2426, %v2425
      %v2775 = vpack.c.b16 %v2428, %v2427
      %v2776 = vpack.c.b16 %v2430, %v2429
      %v2777 = vpack.c.b16 %v2432, %v2431
      %v2778 = vpack.c.b16 %v2434, %v2433
      %v2779 = vpack.c.b16 %v2436, %v2435
      %v2780 = vpack.c.b16 %v2438, %v2437
      %v2781 = vpack.c.b16 %v2440, %v2439
      %v2782 = vpack.c.b16 %v2442, %v2441
      %v2783 = vpack.c.b16 %v2444, %v2443
      %v2784 = vpack.c.b16 %v2446, %v2445
      %v2785 = vpack.c.b16 %v2448, %v2447
      %v2786 = vpack.c.b16 %v2450, %v2449
      %v2787 = vpack.c.b16 %v2452, %v2451
      %v2788 = vpack.c.b16 %v2454, %v2453
      %v2789 = vpack.c.b16 %v2456, %v2455
      %v2790 = vpack.c.b16 %v2458, %v2457
      %v2791 = vpack.c.b16 %v2460, %v2459
      %v2792 = vpack.c.b16 %v2462, %v2461
      %v2793 = vpack.c.b16 %v2464, %v2463
      %v2794 = vpack.c.b16 %v2466, %v2465
      %v2795 = vpack.c.b16 %v2468, %v2467
      %v2796 = vpack.c.b16 %v2470, %v2469
      %v2797 = vpack.c.b16 %v2472, %v2471
      %v2798 = vpack.c.b16 %v2474, %v2473
      %v2799 = vpack.c.b16 %v2476, %v2475
      %v2800 = vpack.c.b16 %v2478, %v2477
      %v2801 = vpack.c.b16 %v2480, %v2479
      %v2802 = vpack.c.b16 %v2482, %v2481
      %v2803 = vpack.c.b16 %v2484, %v2483
      %v2804 = vpack.c.b16 %v2486, %v2485
      %v2805 = vpack.c.b16 %v2488, %v2487
      %v2806 = vpack.c.b16 %v2490, %v2489
      %v2807 = vpack.c.b16 %v2492, %v2491
      %v2808 = vpack.c.b16 %v2494, %v2493
      %v2809 = vpack.c.b16 %v2496, %v2495
      %v2810 = vpack.c.b16 %v2498, %v2497
      %v2811 = vpack.c.b16 %v2500, %v2499
      %v2812 = vpack.c.b16 %v2502, %v2501
      %v2813 = vpack.c.b16 %v2504, %v2503
      %v2814 = vpack.c.b16 %v2506, %v2505
      %v2815 = vpack.c.b16 %v2508, %v2507
      %v2816 = vpack.c.b16 %v2510, %v2509
      %v2817 = vpack.c.b16 %v2512, %v2511
      %v2818 = vpack.c.b16 %v2514, %v2513
      %v2819 = vpack.c.b16 %v2516, %v2515
      %v2820 = vpack.c.b16 %v2518, %v2517
      %v2821 = vpack.c.b16 %v2520, %v2519
      %v2822 = vpack.c.b16 %v2522, %v2521
      %v2823 = vpack.c.b16 %v2524, %v2523
      %v2824 = vpack.c.b16 %v2526, %v2525
      %v2825 = vpack.c.b16 %v2528, %v2527
      %v2826 = vpack.c.b16 %v2530, %v2529
      %v2827 = vpack.c.b16 %v2532, %v2531
      %v2828 = vpack.c.b16 %v2534, %v2533
      %v2829 = vpack.c.b16 %v2536, %v2535
      %v2830 = vpack.c.b16 %v2538, %v2537
      %v2831 = vpack.c.b16 %v2540, %v2539
      %v2832 = vpack.c.b16 %v2542, %v2541
      %v2833 = vpack.c.b16 %v2544, %v2543
      %v2834 = vpack.c.b16 %v2546, %v2545
      %v2835 = vpack.c.b16 %v2548, %v2547
      %v2836 = vpack.c.b16 %v2550, %v2549
      %v2837 = vpack.c.b16 %v2552, %v2551
      %v2838 = vpack.c.b16 %v2554, %v2553
      %v2839 = vpack.c.b16 %v2556, %v2555
      %v2840 = vpack.c.b16 %v2558, %v2557
      %v2841 = vpack.c.b16 %v2560, %v2559
      %v2842 = vpack.c.b16 %v2562, %v2561
      %v2843 = vpack.c.b16 %v2564, %v2563
      %v2844 = vpack.c.b16 %v2566, %v2565
      %v2845 = vpack.c.b16 %v2568, %v2567
      %v2846 = vpack.c.b16 %v2570, %v2569
      %v2847 = vpack.c.b16 %v2572, %v2571
      %v2848 = vpack.c.b16 %v2574, %v2573
      %v2849 = vpack.c.b16 %v2576, %v2575
      %v2850 = vpack.c.b16 %v2578, %v2577
      %v2851 = vpack.c.b16 %v2580, %v2579
      %v2852 = vpack.c.b16 %v2582, %v2581
      %v2853 = vpack.c.b16 %v2584, %v2583
      %v2854 = vpack.c.b16 %v2586, %v2585
      %v2855 = vpack.c.b16 %v2588, %v2587
      %v2856 = vpack.c.b16 %v2590, %v2589
      %v2857 = vpack.c.b16 %v2592, %v2591
      %v2858 = vpack.c.b16 %v2594, %v2593
      %v2859 = vpack.c.b16 %v2596, %v2595
      %v2860 = vpack.c.b16 %v2598, %v2597
      %v2861 = vpack.c.b16 %v2600, %v2599
      %v2862 = vpack.c.b16 %v2602, %v2601
      %v2863 = vpack.c.b16 %v2604, %v2603
      %v2864 = vpack.c.b16 %v2606, %v2605
      %v2865 = vpack.c.b16 %v2608, %v2607
      %v2866 = vpack.c.b16 %v2610, %v2609
      %v2867 = vpack.c.b16 %v2612, %v2611
      %v2868 = vpack.c.b16 %v2614, %v2613
      %v2869 = vpack.c.b16 %v2616, %v2615
      %v2870 = vpack.c.b16 %v2618, %v2617
      %v2871 = vpack.c.b16 %v2620, %v2619
      %v2872 = vpack.c.b16 %v2622, %v2621
      %v2873 = vpack.c.b16 %v2624, %v2623
      %v2874 = vpack.c.b16 %v2626, %v2625
      %v2875 = vpack.c.b16 %v2628, %v2627
      %v2876 = vpack.c.b16 %v2630, %v2629
      %v2877 = vpack.c.b16 %v2632, %v2631
      %v2878 = vpack.c.b16 %v2634, %v2633
      %v2879 = vpack.c.b16 %v2636, %v2635
      %v2880 = vpack.c.b16 %v2638, %v2637
      %v2881 = vpack.c.b16 %v2640, %v2639
      %v2882 = vpack.c.b16 %v2642, %v2641
      %v2883 = vpack.c.b16 %v2644, %v2643
      %v2884 = vpack.c.b16 %v2646, %v2645
      %v2885 = vpack.c.b16 %v2648, %v2647
      %v2886 = vpack.c.b16 %v2650, %v2649
      %v2887 = vpack.c.b16 %v2652, %v2651
      %v2888 = vpack.c.b16 %v2654, %v2653
      %v2889 = vpack.c.b16 %v2656, %v2655
      %v2890 = vpack.c.b16 %v2658, %v2657
      %v2891 = vpack.c.b16 %v2660, %v2659
      %v2892 = vpack.c.b16 %v2662, %v2661
      %v2893 = vpack.c.b16 %v2664, %v2663
      %v2894 = vpack.c.b16 %v2666, %v2665
      %v2895 = vpack.c.b16 %v2668, %v2667
      %v2896 = vpack.c.b16 %v2670, %v2669
      %v2897 = vpack.c.b16 %v2672, %v2671
      %v2898 = vpack.c.b16 %v2674, %v2673
      %v2899 = vpack.c.b16 %v2676, %v2675
      %v2900 = vpack.c.b16 %v2678, %v2677
      %v2901 = vpack.c.b16 %v2680, %v2679
      %v2902 = vpack.c.b16 %v2682, %v2681
      %v2903 = vpack.c.b16 %v2684, %v2683
      %v2904 = vpack.c.b16 %v2686, %v2685
      %v2905 = vpack.c.b16 %v2688, %v2687
      %v2906 = vpack.c.b16 %v2690, %v2689
      %v2907 = vpack.c.b16 %v2692, %v2691
      %v2908 = vpack.c.b16 %v2694, %v2693
      %v2909 = vpack.c.b16 %v2696, %v2695
      %v2910 = vpack.c.b16 %v2698, %v2697
      %v2911 = vpack.c.b16 %v2700, %v2699
      %v2912 = vpack.c.b16 %v2702, %v2701
      %v2913 = vpack.c.b16 %v2704, %v2703
      %v2914 = vpack.c.b16 %v2706, %v2705
      %v2915 = vpack.c.b16 %v2708, %v2707
      %v2916 = vpack.c.b16 %v2710, %v2709
      %v2917 = vpack.c.b16 %v2712, %v2711
      %v2918 = vpack.c.b16 %v2714, %v2713
      %v2919 = vpack.c.b16 %v2716, %v2715
      %v2920 = vpack.c.b16 %v2718, %v2717
      %v2921 = vpack.c.b16 %v2720, %v2719
      %v2922 = vpack.c.b16 %v2722, %v2721
      %v2923 = vpack.c.b16 %v2724, %v2723
      %v2924 = vpack.c.b16 %v2726, %v2725
      %v2925 = vpack.c.b16 %v2728, %v2727
      %v2926 = vpack.c.b16 %v2730, %v2729
      %vm3123 = vcmask 523264
      %v3125 = vsel %vm3123, %v1579, 0
      %v3128 = vsel %vm3123, %v1604, 0
      %v3131 = vsel %vm3123, %v1629, 0
      %v3134 = vsel %vm3123, %v1654, 0
      %v3137 = vsel %vm3123, %v1679, 0
      %v3140 = vsel %vm3123, %v1704, 0
      %v3143 = vsel %vm3123, %v1729, 0
      %v3146 = vsel %vm3123, %v1754, 0
      %3148 = vmatprep.subr.bf16.mxu0 0
      %3149 = vmatpush1.bf16.msra.mxu0 %v2731
      %3150 = vmatprep.subr.bf16.mxu0 0
      %3151 = vmatpush1.bf16.msra.mxu0 %v2732
      %3152 = vmatprep.subr.bf16.mxu0 0
      %3153 = vmatpush1.bf16.msra.mxu0 %v2733
      %3154 = vmatprep.subr.bf16.mxu0 0
      %3155 = vmatpush1.bf16.msra.mxu0 %v2734
      %3156 = vmatprep.subr.bf16.mxu0 0
      %3157 = vmatpush1.bf16.msra.mxu0 %v2735
      %3158 = vmatprep.subr.bf16.mxu0 0
      %3159 = vmatpush1.bf16.msra.mxu0 %v2736
      %3160 = vmatprep.subr.bf16.mxu0 0
      %3161 = vmatpush1.bf16.msra.mxu0 %v2737
      %3162 = vmatprep.subr.bf16.mxu0 0
      %3163 = vmatpush1.bf16.msra.mxu0 %v2738
      %3164 = vmatprep.subr.bf16.mxu0 0
      %3165 = vmatpush1.bf16.msra.mxu0 %v2739
      %3166 = vmatprep.subr.bf16.mxu0 0
      %3167 = vmatpush1.bf16.msra.mxu0 %v2740
      %3168 = vmatprep.subr.bf16.mxu0 0
      %3169 = vmatpush1.bf16.msra.mxu0 %v2741
      %3170 = vmatprep.subr.bf16.mxu0 0
      %3171 = vmatpush1.bf16.msra.mxu0 %v2742
      %3172 = vmatprep.subr.bf16.mxu0 0
      %3173 = vmatpush1.bf16.msra.mxu0 %v2743
      %3174 = vmatprep.subr.bf16.mxu0 0
      %3175 = vmatpush1.bf16.msra.mxu0 %v2744
      %3176 = vmatprep.subr.bf16.mxu0 0
      %3177 = vmatpush1.bf16.msra.mxu0 %v2745
      %3178 = vmatprep.subr.bf16.mxu0 0
      %3179 = vmatpush1.bf16.msra.mxu0 %v2746
      %3180 = vmatprep.mubr.bf16.mxu0 %v1556
      %3181 = vmatmul.mubr.bf16.gmra.mrb[0].mxu0 %v1555
      %v3182 = vpop.f32.mrb[0].mxu0
      %v3183 = vadd.f32 %v945, %v3182
      %v3184 = vpop.f32.mrb[0].mxu0
      %v3185 = vpop.f32.mrb[0].mxu0
      %v3186 = vadd.f32 %v945, %v3185
      %v3187 = vpop.f32.mrb[0].mxu0
      %3188 = vmatprep.mubr.bf16.mxu0 %v1581
      %3189 = vmatmul.mubr.bf16.gmra.mrb[0].mxu0 %v1580
      %v3190 = vpop.f32.mrb[0].mxu0
      %v3191 = vadd.f32 %v945, %v3190
      %v3192 = vpop.f32.mrb[0].mxu0
      %v3193 = vpop.f32.mrb[0].mxu0
      %v3194 = vadd.f32 %v945, %v3193
      %v3195 = vpop.f32.mrb[0].mxu0
      %3196 = vmatprep.mubr.bf16.mxu0 %v1606
      %3197 = vmatmul.mubr.bf16.gmra.mrb[0].mxu0 %v1605
      %v3198 = vpop.f32.mrb[0].mxu0
      %v3199 = vadd.f32 %v945, %v3198
      %v3200 = vpop.f32.mrb[0].mxu0
      %v3201 = vpop.f32.mrb[0].mxu0
      %v3202 = vadd.f32 %v945, %v3201
      %v3203 = vpop.f32.mrb[0].mxu0
      %3204 = vmatprep.mubr.bf16.mxu0 %v1631
      %3205 = vmatmul.mubr.bf16.gmra.mrb[0].mxu0 %v1630
      %v3206 = vpop.f32.mrb[0].mxu0
      %v3207 = vadd.f32 %v945, %v3206
      %v3208 = vpop.f32.mrb[0].mxu0
      %v3209 = vpop.f32.mrb[0].mxu0
      %v3210 = vadd.f32 %v945, %v3209
      %v3211 = vpop.f32.mrb[0].mxu0
      %3212 = vmatprep.mubr.bf16.mxu0 %v1656
      %3213 = vmatmul.mubr.bf16.gmra.mrb[0].mxu0 %v1655
      %v3214 = vpop.f32.mrb[0].mxu0
      %v3215 = vadd.f32 %v945, %v3214
      %v3216 = vpop.f32.mrb[0].mxu0
      %v3217 = vpop.f32.mrb[0].mxu0
      %v3218 = vadd.f32 %v945, %v3217
      %v3219 = vpop.f32.mrb[0].mxu0
      %3220 = vmatprep.mubr.bf16.mxu0 %v1681
      %3221 = vmatmul.mubr.bf16.gmra.mrb[0].mxu0 %v1680
      %v3222 = vpop.f32.mrb[0].mxu0
      %v3223 = vadd.f32 %v945, %v3222
      %v3224 = vpop.f32.mrb[0].mxu0
      %v3225 = vpop.f32.mrb[0].mxu0
      %v3226 = vadd.f32 %v945, %v3225
      %v3227 = vpop.f32.mrb[0].mxu0
      %3228 = vmatprep.mubr.bf16.mxu0 %v1706
      %3229 = vmatmul.mubr.bf16.gmra.mrb[0].mxu0 %v1705
      %v3230 = vpop.f32.mrb[0].mxu0
      %v3231 = vadd.f32 %v945, %v3230
      %v3232 = vpop.f32.mrb[0].mxu0
      %v3233 = vpop.f32.mrb[0].mxu0
      %v3234 = vadd.f32 %v945, %v3233
      %v3235 = vpop.f32.mrb[0].mxu0
      %3236 = vmatprep.mubr.bf16.mxu0 %v1731
      %3237 = vmatmul.mubr.bf16.gmra.mrb[0].mxu0 %v1730
      %v3238 = vpop.f32.mrb[0].mxu0
      %v3239 = vadd.f32 %v945, %v3238
      %v3240 = vpop.f32.mrb[0].mxu0
      %v3241 = vpop.f32.mrb[0].mxu0
      %v3242 = vadd.f32 %v945, %v3241
      %v3243 = vpop.f32.mrb[0].mxu0
      %3244 = vdwg.mxu0
      %3245 = vmatprep.subr.bf16.mxu0 0
      %3246 = vmatpush1.bf16.msra.mxu0 %v2747
      %3247 = vmatprep.subr.bf16.mxu0 0
      %3248 = vmatpush1.bf16.msra.mxu0 %v2748
      %3249 = vmatprep.subr.bf16.mxu0 0
      %3250 = vmatpush1.bf16.msra.mxu0 %v2749
      %3251 = vmatprep.subr.bf16.mxu0 0
      %3252 = vmatpush1.bf16.msra.mxu0 %v2750
      %3253 = vmatprep.subr.bf16.mxu0 0
      %3254 = vmatpush1.bf16.msra.mxu0 %v2751
      %3255 = vmatprep.subr.bf16.mxu0 0
      %3256 = vmatpush1.bf16.msra.mxu0 %v2752
      %3257 = vmatprep.subr.bf16.mxu0 0
      %3258 = vmatpush1.bf16.msra.mxu0 %v2753
      %3259 = vmatprep.subr.bf16.mxu0 0
      %3260 = vmatpush1.bf16.msra.mxu0 %v2754
      %3261 = vmatprep.subr.bf16.mxu0 0
      %3262 = vmatpush1.bf16.msra.mxu0 %v2755
      %3263 = vmatprep.subr.bf16.mxu0 0
      %3264 = vmatpush1.bf16.msra.mxu0 %v2756
      %3265 = vmatprep.subr.bf16.mxu0 0
      %3266 = vmatpush1.bf16.msra.mxu0 %v2757
      %3267 = vmatprep.subr.bf16.mxu0 0
      %3268 = vmatpush1.bf16.msra.mxu0 %v2758
      %3269 = vmatprep.subr.bf16.mxu0 0
      %3270 = vmatpush1.bf16.msra.mxu0 %v2759
      %3271 = vmatprep.subr.bf16.mxu0 0
      %3272 = vmatpush1.bf16.msra.mxu0 %v2760
      %3273 = vmatprep.subr.bf16.mxu0 0
      %3274 = vmatpush1.bf16.msra.mxu0 %v2761
      %3275 = vmatprep.subr.bf16.mxu0 0
      %3276 = vmatpush1.bf16.msra.mxu0 %v2762
      %3277 = vmatprep.mubr.bf16.mxu0 %v1558
      %3278 = vmatmul.mubr.bf16.gmra.mrb[0].mxu0 %v1557
      %v3279 = vpop.f32.mrb[0].mxu0
      %v3280 = vadd.f32 %v3183, %v3279
      %v3281 = vpop.f32.mrb[0].mxu0
      %v3282 = vpop.f32.mrb[0].mxu0
      %v3283 = vadd.f32 %v3186, %v3282
      %v3284 = vpop.f32.mrb[0].mxu0
      %3285 = vmatprep.mubr.bf16.mxu0 %v1583
      %3286 = vmatmul.mubr.bf16.gmra.mrb[0].mxu0 %v1582
      %v3287 = vpop.f32.mrb[0].mxu0
      %v3288 = vadd.f32 %v3191, %v3287
      %v3289 = vpop.f32.mrb[0].mxu0
      %v3290 = vpop.f32.mrb[0].mxu0
      %v3291 = vadd.f32 %v3194, %v3290
      %v3292 = vpop.f32.mrb[0].mxu0
      %3293 = vmatprep.mubr.bf16.mxu0 %v1608
      %3294 = vmatmul.mubr.bf16.gmra.mrb[0].mxu0 %v1607
      %v3295 = vpop.f32.mrb[0].mxu0
      %v3296 = vadd.f32 %v3199, %v3295
      %v3297 = vpop.f32.mrb[0].mxu0
      %v3298 = vpop.f32.mrb[0].mxu0
      %v3299 = vadd.f32 %v3202, %v3298
      %v3300 = vpop.f32.mrb[0].mxu0
      %3301 = vmatprep.mubr.bf16.mxu0 %v1633
      %3302 = vmatmul.mubr.bf16.gmra.mrb[0].mxu0 %v1632
      %v3303 = vpop.f32.mrb[0].mxu0
      %v3304 = vadd.f32 %v3207, %v3303
      %v3305 = vpop.f32.mrb[0].mxu0
      %v3306 = vpop.f32.mrb[0].mxu0
      %v3307 = vadd.f32 %v3210, %v3306
      %v3308 = vpop.f32.mrb[0].mxu0
      %3309 = vmatprep.mubr.bf16.mxu0 %v1658
      %3310 = vmatmul.mubr.bf16.gmra.mrb[0].mxu0 %v1657
      %v3311 = vpop.f32.mrb[0].mxu0
      %v3312 = vadd.f32 %v3215, %v3311
      %v3313 = vpop.f32.mrb[0].mxu0
      %v3314 = vpop.f32.mrb[0].mxu0
      %v3315 = vadd.f32 %v3218, %v3314
      %v3316 = vpop.f32.mrb[0].mxu0
      %3317 = vmatprep.mubr.bf16.mxu0 %v1683
      %3318 = vmatmul.mubr.bf16.gmra.mrb[0].mxu0 %v1682
      %v3319 = vpop.f32.mrb[0].mxu0
      %v3320 = vadd.f32 %v3223, %v3319
      %v3321 = vpop.f32.mrb[0].mxu0
      %v3322 = vpop.f32.mrb[0].mxu0
      %v3323 = vadd.f32 %v3226, %v3322
      %v3324 = vpop.f32.mrb[0].mxu0
      %3325 = vmatprep.mubr.bf16.mxu0 %v1708
      %3326 = vmatmul.mubr.bf16.gmra.mrb[0].mxu0 %v1707
      %v3327 = vpop.f32.mrb[0].mxu0
      %v3328 = vadd.f32 %v3231, %v3327
      %v3329 = vpop.f32.mrb[0].mxu0
      %v3330 = vpop.f32.mrb[0].mxu0
      %v3331 = vadd.f32 %v3234, %v3330
      %v3332 = vpop.f32.mrb[0].mxu0
      %3333 = vmatprep.mubr.bf16.mxu0 %v1733
      %3334 = vmatmul.mubr.bf16.gmra.mrb[0].mxu0 %v1732
      %v3335 = vpop.f32.mrb[0].mxu0
      %v3336 = vadd.f32 %v3239, %v3335
      %v3337 = vpop.f32.mrb[0].mxu0
      %v3338 = vpop.f32.mrb[0].mxu0
      %v3339 = vadd.f32 %v3242, %v3338
      %v3340 = vpop.f32.mrb[0].mxu0
      %3341 = vdwg.mxu0
      %3342 = vmatprep.subr.bf16.mxu0 0
      %3343 = vmatpush1.bf16.msra.mxu0 %v2763
      %3344 = vmatprep.subr.bf16.mxu0 0
      %3345 = vmatpush1.bf16.msra.mxu0 %v2764
      %3346 = vmatprep.subr.bf16.mxu0 0
      %3347 = vmatpush1.bf16.msra.mxu0 %v2765
      %3348 = vmatprep.subr.bf16.mxu0 0
      %3349 = vmatpush1.bf16.msra.mxu0 %v2766
      %3350 = vmatprep.subr.bf16.mxu0 0
      %3351 = vmatpush1.bf16.msra.mxu0 %v2767
      %3352 = vmatprep.subr.bf16.mxu0 0
      %3353 = vmatpush1.bf16.msra.mxu0 %v2768
      %3354 = vmatprep.subr.bf16.mxu0 0
      %3355 = vmatpush1.bf16.msra.mxu0 %v2769
      %3356 = vmatprep.subr.bf16.mxu0 0
      %3357 = vmatpush1.bf16.msra.mxu0 %v2770
      %3358 = vmatprep.subr.bf16.mxu0 0
      %3359 = vmatpush1.bf16.msra.mxu0 %v2771
      %3360 = vmatprep.subr.bf16.mxu0 0
      %3361 = vmatpush1.bf16.msra.mxu0 %v2772
      %3362 = vmatprep.subr.bf16.mxu0 0
      %3363 = vmatpush1.bf16.msra.mxu0 %v2773
      %3364 = vmatprep.subr.bf16.mxu0 0
      %3365 = vmatpush1.bf16.msra.mxu0 %v2774
      %3366 = vmatprep.subr.bf16.mxu0 0
      %3367 = vmatpush1.bf16.msra.mxu0 %v2775
      %3368 = vmatprep.subr.bf16.mxu0 0
      %3369 = vmatpush1.bf16.msra.mxu0 %v2776
      %3370 = vmatprep.subr.bf16.mxu0 0
      %3371 = vmatpush1.bf16.msra.mxu0 %v2777
      %3372 = vmatprep.subr.bf16.mxu0 0
      %3373 = vmatpush1.bf16.msra.mxu0 %v2778
      %3374 = vmatprep.mubr.bf16.mxu0 %v1560
      %3375 = vmatmul.mubr.bf16.gmra.mrb[0].mxu0 %v1559
      %v3376 = vpop.f32.mrb[0].mxu0
      %v3377 = vadd.f32 %v3280, %v3376
      %v3378 = vpop.f32.mrb[0].mxu0
      %v3379 = vpop.f32.mrb[0].mxu0
      %v3380 = vadd.f32 %v3283, %v3379
      %v3381 = vpop.f32.mrb[0].mxu0
      %3382 = vmatprep.mubr.bf16.mxu0 %v1585
      %3383 = vmatmul.mubr.bf16.gmra.mrb[0].mxu0 %v1584
      %v3384 = vpop.f32.mrb[0].mxu0
      %v3385 = vadd.f32 %v3288, %v3384
      %v3386 = vpop.f32.mrb[0].mxu0
      %v3387 = vpop.f32.mrb[0].mxu0
      %v3388 = vadd.f32 %v3291, %v3387
      %v3389 = vpop.f32.mrb[0].mxu0
      %3390 = vmatprep.mubr.bf16.mxu0 %v1610
      %3391 = vmatmul.mubr.bf16.gmra.mrb[0].mxu0 %v1609
      %v3392 = vpop.f32.mrb[0].mxu0
      %v3393 = vadd.f32 %v3296, %v3392
      %v3394 = vpop.f32.mrb[0].mxu0
      %v3395 = vpop.f32.mrb[0].mxu0
      %v3396 = vadd.f32 %v3299, %v3395
      %v3397 = vpop.f32.mrb[0].mxu0
      %3398 = vmatprep.mubr.bf16.mxu0 %v1635
      %3399 = vmatmul.mubr.bf16.gmra.mrb[0].mxu0 %v1634
      %v3400 = vpop.f32.mrb[0].mxu0
      %v3401 = vadd.f32 %v3304, %v3400
      %v3402 = vpop.f32.mrb[0].mxu0
      %v3403 = vpop.f32.mrb[0].mxu0
      %v3404 = vadd.f32 %v3307, %v3403
      %v3405 = vpop.f32.mrb[0].mxu0
      %3406 = vmatprep.mubr.bf16.mxu0 %v1660
      %3407 = vmatmul.mubr.bf16.gmra.mrb[0].mxu0 %v1659
      %v3408 = vpop.f32.mrb[0].mxu0
      %v3409 = vadd.f32 %v3312, %v3408
      %v3410 = vpop.f32.mrb[0].mxu0
      %v3411 = vpop.f32.mrb[0].mxu0
      %v3412 = vadd.f32 %v3315, %v3411
      %v3413 = vpop.f32.mrb[0].mxu0
      %3414 = vmatprep.mubr.bf16.mxu0 %v1685
      %3415 = vmatmul.mubr.bf16.gmra.mrb[0].mxu0 %v1684
      %v3416 = vpop.f32.mrb[0].mxu0
      %v3417 = vadd.f32 %v3320, %v3416
      %v3418 = vpop.f32.mrb[0].mxu0
      %v3419 = vpop.f32.mrb[0].mxu0
      %v3420 = vadd.f32 %v3323, %v3419
      %v3421 = vpop.f32.mrb[0].mxu0
      %3422 = vmatprep.mubr.bf16.mxu0 %v1710
      %3423 = vmatmul.mubr.bf16.gmra.mrb[0].mxu0 %v1709
      %v3424 = vpop.f32.mrb[0].mxu0
      %v3425 = vadd.f32 %v3328, %v3424
      %v3426 = vpop.f32.mrb[0].mxu0
      %v3427 = vpop.f32.mrb[0].mxu0
      %v3428 = vadd.f32 %v3331, %v3427
      %v3429 = vpop.f32.mrb[0].mxu0
      %3430 = vmatprep.mubr.bf16.mxu0 %v1735
      %3431 = vmatmul.mubr.bf16.gmra.mrb[0].mxu0 %v1734
      %v3432 = vpop.f32.mrb[0].mxu0
      %v3433 = vadd.f32 %v3336, %v3432
      %v3434 = vpop.f32.mrb[0].mxu0
      %v3435 = vpop.f32.mrb[0].mxu0
      %v3436 = vadd.f32 %v3339, %v3435
      %v3437 = vpop.f32.mrb[0].mxu0
      %3438 = vdwg.mxu0
      %3439 = vmatprep.subr.bf16.mxu0 0
      %3440 = vmatpush1.bf16.msra.mxu0 %v2779
      %3441 = vmatprep.subr.bf16.mxu0 0
      %3442 = vmatpush1.bf16.msra.mxu0 %v2780
      %3443 = vmatprep.subr.bf16.mxu0 0
      %3444 = vmatpush1.bf16.msra.mxu0 %v2781
      %3445 = vmatprep.subr.bf16.mxu0 0
      %3446 = vmatpush1.bf16.msra.mxu0 %v2782
      %3447 = vmatprep.subr.bf16.mxu0 0
      %3448 = vmatpush1.bf16.msra.mxu0 %v2783
      %3449 = vmatprep.subr.bf16.mxu0 0
      %3450 = vmatpush1.bf16.msra.mxu0 %v2784
      %3451 = vmatprep.subr.bf16.mxu0 0
      %3452 = vmatpush1.bf16.msra.mxu0 %v2785
      %3453 = vmatprep.subr.bf16.mxu0 0
      %3454 = vmatpush1.bf16.msra.mxu0 %v2786
      %3455 = vmatprep.subr.bf16.mxu0 0
      %3456 = vmatpush1.bf16.msra.mxu0 %v2787
      %3457 = vmatprep.subr.bf16.mxu0 0
      %3458 = vmatpush1.bf16.msra.mxu0 %v2788
      %3459 = vmatprep.subr.bf16.mxu0 0
      %3460 = vmatpush1.bf16.msra.mxu0 %v2789
      %3461 = vmatprep.subr.bf16.mxu0 0
      %3462 = vmatpush1.bf16.msra.mxu0 %v2790
      %3463 = vmatprep.subr.bf16.mxu0 0
      %3464 = vmatpush1.bf16.msra.mxu0 %v2791
      %3465 = vmatprep.subr.bf16.mxu0 0
      %3466 = vmatpush1.bf16.msra.mxu0 %v2792
      %3467 = vmatprep.subr.bf16.mxu0 0
      %3468 = vmatpush1.bf16.msra.mxu0 %v2793
      %3469 = vmatprep.subr.bf16.mxu0 0
      %3470 = vmatpush1.bf16.msra.mxu0 %v2794
      %3471 = vmatprep.mubr.bf16.mxu0 %v1562
      %3472 = vmatmul.mubr.bf16.gmra.mrb[0].mxu0 %v1561
      %v3473 = vpop.f32.mrb[0].mxu0
      %v3474 = vadd.f32 %v3377, %v3473
      %v3475 = vpop.f32.mrb[0].mxu0
      %v3476 = vpop.f32.mrb[0].mxu0
      %v3477 = vadd.f32 %v3380, %v3476
      %v3478 = vpop.f32.mrb[0].mxu0
      %3479 = vmatprep.mubr.bf16.mxu0 %v1587
      %3480 = vmatmul.mubr.bf16.gmra.mrb[0].mxu0 %v1586
      %v3481 = vpop.f32.mrb[0].mxu0
      %v3482 = vadd.f32 %v3385, %v3481
      %v3483 = vpop.f32.mrb[0].mxu0
      %v3484 = vpop.f32.mrb[0].mxu0
      %v3485 = vadd.f32 %v3388, %v3484
      %v3486 = vpop.f32.mrb[0].mxu0
      %3487 = vmatprep.mubr.bf16.mxu0 %v1612
      %3488 = vmatmul.mubr.bf16.gmra.mrb[0].mxu0 %v1611
      %v3489 = vpop.f32.mrb[0].mxu0
      %v3490 = vadd.f32 %v3393, %v3489
      %v3491 = vpop.f32.mrb[0].mxu0
      %v3492 = vpop.f32.mrb[0].mxu0
      %v3493 = vadd.f32 %v3396, %v3492
      %v3494 = vpop.f32.mrb[0].mxu0
      %3495 = vmatprep.mubr.bf16.mxu0 %v1637
      %3496 = vmatmul.mubr.bf16.gmra.mrb[0].mxu0 %v1636
      %v3497 = vpop.f32.mrb[0].mxu0
      %v3498 = vadd.f32 %v3401, %v3497
      %v3499 = vpop.f32.mrb[0].mxu0
      %v3500 = vpop.f32.mrb[0].mxu0
      %v3501 = vadd.f32 %v3404, %v3500
      %v3502 = vpop.f32.mrb[0].mxu0
      %3503 = vmatprep.mubr.bf16.mxu0 %v1662
      %3504 = vmatmul.mubr.bf16.gmra.mrb[0].mxu0 %v1661
      %v3505 = vpop.f32.mrb[0].mxu0
      %v3506 = vadd.f32 %v3409, %v3505
      %v3507 = vpop.f32.mrb[0].mxu0
      %v3508 = vpop.f32.mrb[0].mxu0
      %v3509 = vadd.f32 %v3412, %v3508
      %v3510 = vpop.f32.mrb[0].mxu0
      %3511 = vmatprep.mubr.bf16.mxu0 %v1687
      %3512 = vmatmul.mubr.bf16.gmra.mrb[0].mxu0 %v1686
      %v3513 = vpop.f32.mrb[0].mxu0
      %v3514 = vadd.f32 %v3417, %v3513
      %v3515 = vpop.f32.mrb[0].mxu0
      %v3516 = vpop.f32.mrb[0].mxu0
      %v3517 = vadd.f32 %v3420, %v3516
      %v3518 = vpop.f32.mrb[0].mxu0
      %3519 = vmatprep.mubr.bf16.mxu0 %v1712
      %3520 = vmatmul.mubr.bf16.gmra.mrb[0].mxu0 %v1711
      %v3521 = vpop.f32.mrb[0].mxu0
      %v3522 = vadd.f32 %v3425, %v3521
      %v3523 = vpop.f32.mrb[0].mxu0
      %v3524 = vpop.f32.mrb[0].mxu0
      %v3525 = vadd.f32 %v3428, %v3524
      %v3526 = vpop.f32.mrb[0].mxu0
      %3527 = vmatprep.mubr.bf16.mxu0 %v1737
      %3528 = vmatmul.mubr.bf16.gmra.mrb[0].mxu0 %v1736
      %v3529 = vpop.f32.mrb[0].mxu0
      %v3530 = vadd.f32 %v3433, %v3529
      %v3531 = vpop.f32.mrb[0].mxu0
      %v3532 = vpop.f32.mrb[0].mxu0
      %v3533 = vadd.f32 %v3436, %v3532
      %v3534 = vpop.f32.mrb[0].mxu0
      %3535 = vdwg.mxu0
      %3536 = vmatprep.subr.bf16.mxu0 0
      %3537 = vmatpush1.bf16.msra.mxu0 %v2795
      %3538 = vmatprep.subr.bf16.mxu0 0
      %3539 = vmatpush1.bf16.msra.mxu0 %v2796
      %3540 = vmatprep.subr.bf16.mxu0 0
      %3541 = vmatpush1.bf16.msra.mxu0 %v2797
      %3542 = vmatprep.subr.bf16.mxu0 0
      %3543 = vmatpush1.bf16.msra.mxu0 %v2798
      %3544 = vmatprep.subr.bf16.mxu0 0
      %3545 = vmatpush1.bf16.msra.mxu0 %v2799
      %3546 = vmatprep.subr.bf16.mxu0 0
      %3547 = vmatpush1.bf16.msra.mxu0 %v2800
      %3548 = vmatprep.subr.bf16.mxu0 0
      %3549 = vmatpush1.bf16.msra.mxu0 %v2801
      %3550 = vmatprep.subr.bf16.mxu0 0
      %3551 = vmatpush1.bf16.msra.mxu0 %v2802
      %3552 = vmatprep.subr.bf16.mxu0 0
      %3553 = vmatpush1.bf16.msra.mxu0 %v2803
      %3554 = vmatprep.subr.bf16.mxu0 0
      %3555 = vmatpush1.bf16.msra.mxu0 %v2804
      %3556 = vmatprep.subr.bf16.mxu0 0
      %3557 = vmatpush1.bf16.msra.mxu0 %v2805
      %3558 = vmatprep.subr.bf16.mxu0 0
      %3559 = vmatpush1.bf16.msra.mxu0 %v2806
      %3560 = vmatprep.subr.bf16.mxu0 0
      %3561 = vmatpush1.bf16.msra.mxu0 %v2807
      %3562 = vmatprep.subr.bf16.mxu0 0
      %3563 = vmatpush1.bf16.msra.mxu0 %v2808
      %3564 = vmatprep.subr.bf16.mxu0 0
      %3565 = vmatpush1.bf16.msra.mxu0 %v2809
      %3566 = vmatprep.subr.bf16.mxu0 0
      %3567 = vmatpush1.bf16.msra.mxu0 %v2810
      %3568 = vmatprep.mubr.bf16.mxu0 %v1564
      %3569 = vmatmul.mubr.bf16.gmra.mrb[0].mxu0 %v1563
      %v3570 = vpop.f32.mrb[0].mxu0
      %v3571 = vadd.f32 %v3474, %v3570
      %v3572 = vpop.f32.mrb[0].mxu0
      %v3573 = vpop.f32.mrb[0].mxu0
      %v3574 = vadd.f32 %v3477, %v3573
      %v3575 = vpop.f32.mrb[0].mxu0
      %3576 = vmatprep.mubr.bf16.mxu0 %v1589
      %3577 = vmatmul.mubr.bf16.gmra.mrb[0].mxu0 %v1588
      %v3578 = vpop.f32.mrb[0].mxu0
      %v3579 = vadd.f32 %v3482, %v3578
      %v3580 = vpop.f32.mrb[0].mxu0
      %v3581 = vpop.f32.mrb[0].mxu0
      %v3582 = vadd.f32 %v3485, %v3581
      %v3583 = vpop.f32.mrb[0].mxu0
      %3584 = vmatprep.mubr.bf16.mxu0 %v1614
      %3585 = vmatmul.mubr.bf16.gmra.mrb[0].mxu0 %v1613
      %v3586 = vpop.f32.mrb[0].mxu0
      %v3587 = vadd.f32 %v3490, %v3586
      %v3588 = vpop.f32.mrb[0].mxu0
      %v3589 = vpop.f32.mrb[0].mxu0
      %v3590 = vadd.f32 %v3493, %v3589
      %v3591 = vpop.f32.mrb[0].mxu0
      %3592 = vmatprep.mubr.bf16.mxu0 %v1639
      %3593 = vmatmul.mubr.bf16.gmra.mrb[0].mxu0 %v1638
      %v3594 = vpop.f32.mrb[0].mxu0
      %v3595 = vadd.f32 %v3498, %v3594
      %v3596 = vpop.f32.mrb[0].mxu0
      %v3597 = vpop.f32.mrb[0].mxu0
      %v3598 = vadd.f32 %v3501, %v3597
      %v3599 = vpop.f32.mrb[0].mxu0
      %3600 = vmatprep.mubr.bf16.mxu0 %v1664
      %3601 = vmatmul.mubr.bf16.gmra.mrb[0].mxu0 %v1663
      %v3602 = vpop.f32.mrb[0].mxu0
      %v3603 = vadd.f32 %v3506, %v3602
      %v3604 = vpop.f32.mrb[0].mxu0
      %v3605 = vpop.f32.mrb[0].mxu0
      %v3606 = vadd.f32 %v3509, %v3605
      %v3607 = vpop.f32.mrb[0].mxu0
      %3608 = vmatprep.mubr.bf16.mxu0 %v1689
      %3609 = vmatmul.mubr.bf16.gmra.mrb[0].mxu0 %v1688
      %v3610 = vpop.f32.mrb[0].mxu0
      %v3611 = vadd.f32 %v3514, %v3610
      %v3612 = vpop.f32.mrb[0].mxu0
      %v3613 = vpop.f32.mrb[0].mxu0
      %v3614 = vadd.f32 %v3517, %v3613
      %v3615 = vpop.f32.mrb[0].mxu0
      %3616 = vmatprep.mubr.bf16.mxu0 %v1714
      %3617 = vmatmul.mubr.bf16.gmra.mrb[0].mxu0 %v1713
      %v3618 = vpop.f32.mrb[0].mxu0
      %v3619 = vadd.f32 %v3522, %v3618
      %v3620 = vpop.f32.mrb[0].mxu0
      %v3621 = vpop.f32.mrb[0].mxu0
      %v3622 = vadd.f32 %v3525, %v3621
      %v3623 = vpop.f32.mrb[0].mxu0
      %3624 = vmatprep.mubr.bf16.mxu0 %v1739
      %3625 = vmatmul.mubr.bf16.gmra.mrb[0].mxu0 %v1738
      %v3626 = vpop.f32.mrb[0].mxu0
      %v3627 = vadd.f32 %v3530, %v3626
      %v3628 = vpop.f32.mrb[0].mxu0
      %v3629 = vpop.f32.mrb[0].mxu0
      %v3630 = vadd.f32 %v3533, %v3629
      %v3631 = vpop.f32.mrb[0].mxu0
      %3632 = vdwg.mxu0
      %3633 = vmatprep.subr.bf16.mxu0 0
      %3634 = vmatpush1.bf16.msra.mxu0 %v2811
      %3635 = vmatprep.subr.bf16.mxu0 0
      %3636 = vmatpush1.bf16.msra.mxu0 %v2812
      %3637 = vmatprep.subr.bf16.mxu0 0
      %3638 = vmatpush1.bf16.msra.mxu0 %v2813
      %3639 = vmatprep.subr.bf16.mxu0 0
      %3640 = vmatpush1.bf16.msra.mxu0 %v2814
      %3641 = vmatprep.subr.bf16.mxu0 0
      %3642 = vmatpush1.bf16.msra.mxu0 %v2815
      %3643 = vmatprep.subr.bf16.mxu0 0
      %3644 = vmatpush1.bf16.msra.mxu0 %v2816
      %3645 = vmatprep.subr.bf16.mxu0 0
      %3646 = vmatpush1.bf16.msra.mxu0 %v2817
      %3647 = vmatprep.subr.bf16.mxu0 0
      %3648 = vmatpush1.bf16.msra.mxu0 %v2818
      %3649 = vmatprep.subr.bf16.mxu0 0
      %3650 = vmatpush1.bf16.msra.mxu0 %v2819
      %3651 = vmatprep.subr.bf16.mxu0 0
      %3652 = vmatpush1.bf16.msra.mxu0 %v2820
      %3653 = vmatprep.subr.bf16.mxu0 0
      %3654 = vmatpush1.bf16.msra.mxu0 %v2821
      %3655 = vmatprep.subr.bf16.mxu0 0
      %3656 = vmatpush1.bf16.msra.mxu0 %v2822
      %3657 = vmatprep.subr.bf16.mxu0 0
      %3658 = vmatpush1.bf16.msra.mxu0 %v2823
      %3659 = vmatprep.subr.bf16.mxu0 0
      %3660 = vmatpush1.bf16.msra.mxu0 %v2824
      %3661 = vmatprep.subr.bf16.mxu0 0
      %3662 = vmatpush1.bf16.msra.mxu0 %v2825
      %3663 = vmatprep.subr.bf16.mxu0 0
      %3664 = vmatpush1.bf16.msra.mxu0 %v2826
      %3665 = vmatprep.mubr.bf16.mxu0 %v1566
      %3666 = vmatmul.mubr.bf16.gmra.mrb[0].mxu0 %v1565
      %v3667 = vpop.f32.mrb[0].mxu0
      %v3668 = vadd.f32 %v3571, %v3667
      %v3669 = vpop.f32.mrb[0].mxu0
      %v3670 = vpop.f32.mrb[0].mxu0
      %v3671 = vadd.f32 %v3574, %v3670
      %v3672 = vpop.f32.mrb[0].mxu0
      %3673 = vmatprep.mubr.bf16.mxu0 %v1591
      %3674 = vmatmul.mubr.bf16.gmra.mrb[0].mxu0 %v1590
      %v3675 = vpop.f32.mrb[0].mxu0
      %v3676 = vadd.f32 %v3579, %v3675
      %v3677 = vpop.f32.mrb[0].mxu0
      %v3678 = vpop.f32.mrb[0].mxu0
      %v3679 = vadd.f32 %v3582, %v3678
      %v3680 = vpop.f32.mrb[0].mxu0
      %3681 = vmatprep.mubr.bf16.mxu0 %v1616
      %3682 = vmatmul.mubr.bf16.gmra.mrb[0].mxu0 %v1615
      %v3683 = vpop.f32.mrb[0].mxu0
      %v3684 = vadd.f32 %v3587, %v3683
      %v3685 = vpop.f32.mrb[0].mxu0
      %v3686 = vpop.f32.mrb[0].mxu0
      %v3687 = vadd.f32 %v3590, %v3686
      %v3688 = vpop.f32.mrb[0].mxu0
      %3689 = vmatprep.mubr.bf16.mxu0 %v1641
      %3690 = vmatmul.mubr.bf16.gmra.mrb[0].mxu0 %v1640
      %v3691 = vpop.f32.mrb[0].mxu0
      %v3692 = vadd.f32 %v3595, %v3691
      %v3693 = vpop.f32.mrb[0].mxu0
      %v3694 = vpop.f32.mrb[0].mxu0
      %v3695 = vadd.f32 %v3598, %v3694
      %v3696 = vpop.f32.mrb[0].mxu0
      %3697 = vmatprep.mubr.bf16.mxu0 %v1666
      %3698 = vmatmul.mubr.bf16.gmra.mrb[0].mxu0 %v1665
      %v3699 = vpop.f32.mrb[0].mxu0
      %v3700 = vadd.f32 %v3603, %v3699
      %v3701 = vpop.f32.mrb[0].mxu0
      %v3702 = vpop.f32.mrb[0].mxu0
      %v3703 = vadd.f32 %v3606, %v3702
      %v3704 = vpop.f32.mrb[0].mxu0
      %3705 = vmatprep.mubr.bf16.mxu0 %v1691
      %3706 = vmatmul.mubr.bf16.gmra.mrb[0].mxu0 %v1690
      %v3707 = vpop.f32.mrb[0].mxu0
      %v3708 = vadd.f32 %v3611, %v3707
      %v3709 = vpop.f32.mrb[0].mxu0
      %v3710 = vpop.f32.mrb[0].mxu0
      %v3711 = vadd.f32 %v3614, %v3710
      %v3712 = vpop.f32.mrb[0].mxu0
      %3713 = vmatprep.mubr.bf16.mxu0 %v1716
      %3714 = vmatmul.mubr.bf16.gmra.mrb[0].mxu0 %v1715
      %v3715 = vpop.f32.mrb[0].mxu0
      %v3716 = vadd.f32 %v3619, %v3715
      %v3717 = vpop.f32.mrb[0].mxu0
      %v3718 = vpop.f32.mrb[0].mxu0
      %v3719 = vadd.f32 %v3622, %v3718
      %v3720 = vpop.f32.mrb[0].mxu0
      %3721 = vmatprep.mubr.bf16.mxu0 %v1741
      %3722 = vmatmul.mubr.bf16.gmra.mrb[0].mxu0 %v1740
      %v3723 = vpop.f32.mrb[0].mxu0
      %v3724 = vadd.f32 %v3627, %v3723
      %v3725 = vpop.f32.mrb[0].mxu0
      %v3726 = vpop.f32.mrb[0].mxu0
      %v3727 = vadd.f32 %v3630, %v3726
      %v3728 = vpop.f32.mrb[0].mxu0
      %3729 = vdwg.mxu0
      %3730 = vmatprep.subr.bf16.mxu0 0
      %3731 = vmatpush1.bf16.msra.mxu0 %v2827
      %3732 = vmatprep.subr.bf16.mxu0 0
      %3733 = vmatpush1.bf16.msra.mxu0 %v2828
      %3734 = vmatprep.subr.bf16.mxu0 0
      %3735 = vmatpush1.bf16.msra.mxu0 %v2829
      %3736 = vmatprep.subr.bf16.mxu0 0
      %3737 = vmatpush1.bf16.msra.mxu0 %v2830
      %3738 = vmatprep.subr.bf16.mxu0 0
      %3739 = vmatpush1.bf16.msra.mxu0 %v2831
      %3740 = vmatprep.subr.bf16.mxu0 0
      %3741 = vmatpush1.bf16.msra.mxu0 %v2832
      %3742 = vmatprep.subr.bf16.mxu0 0
      %3743 = vmatpush1.bf16.msra.mxu0 %v2833
      %3744 = vmatprep.subr.bf16.mxu0 0
      %3745 = vmatpush1.bf16.msra.mxu0 %v2834
      %3746 = vmatprep.subr.bf16.mxu0 0
      %3747 = vmatpush1.bf16.msra.mxu0 %v2835
      %3748 = vmatprep.subr.bf16.mxu0 0
      %3749 = vmatpush1.bf16.msra.mxu0 %v2836
      %3750 = vmatprep.subr.bf16.mxu0 0
      %3751 = vmatpush1.bf16.msra.mxu0 %v2837
      %3752 = vmatprep.subr.bf16.mxu0 0
      %3753 = vmatpush1.bf16.msra.mxu0 %v2838
      %3754 = vmatprep.subr.bf16.mxu0 0
      %3755 = vmatpush1.bf16.msra.mxu0 %v2839
      %3756 = vmatprep.subr.bf16.mxu0 0
      %3757 = vmatpush1.bf16.msra.mxu0 %v2840
      %3758 = vmatprep.subr.bf16.mxu0 0
      %3759 = vmatpush1.bf16.msra.mxu0 %v2841
      %3760 = vmatprep.subr.bf16.mxu0 0
      %3761 = vmatpush1.bf16.msra.mxu0 %v2842
      %3762 = vmatprep.mubr.bf16.mxu0 %v1568
      %3763 = vmatmul.mubr.bf16.gmra.mrb[0].mxu0 %v1567
      %v3764 = vpop.f32.mrb[0].mxu0
      %v3765 = vadd.f32 %v3668, %v3764
      %v3766 = vpop.f32.mrb[0].mxu0
      %v3767 = vpop.f32.mrb[0].mxu0
      %v3768 = vadd.f32 %v3671, %v3767
      %v3769 = vpop.f32.mrb[0].mxu0
      %3770 = vmatprep.mubr.bf16.mxu0 %v1593
      %3771 = vmatmul.mubr.bf16.gmra.mrb[0].mxu0 %v1592
      %v3772 = vpop.f32.mrb[0].mxu0
      %v3773 = vadd.f32 %v3676, %v3772
      %v3774 = vpop.f32.mrb[0].mxu0
      %v3775 = vpop.f32.mrb[0].mxu0
      %v3776 = vadd.f32 %v3679, %v3775
      %v3777 = vpop.f32.mrb[0].mxu0
      %3778 = vmatprep.mubr.bf16.mxu0 %v1618
      %3779 = vmatmul.mubr.bf16.gmra.mrb[0].mxu0 %v1617
      %v3780 = vpop.f32.mrb[0].mxu0
      %v3781 = vadd.f32 %v3684, %v3780
      %v3782 = vpop.f32.mrb[0].mxu0
      %v3783 = vpop.f32.mrb[0].mxu0
      %v3784 = vadd.f32 %v3687, %v3783
      %v3785 = vpop.f32.mrb[0].mxu0
      %3786 = vmatprep.mubr.bf16.mxu0 %v1643
      %3787 = vmatmul.mubr.bf16.gmra.mrb[0].mxu0 %v1642
      %v3788 = vpop.f32.mrb[0].mxu0
      %v3789 = vadd.f32 %v3692, %v3788
      %v3790 = vpop.f32.mrb[0].mxu0
      %v3791 = vpop.f32.mrb[0].mxu0
      %v3792 = vadd.f32 %v3695, %v3791
      %v3793 = vpop.f32.mrb[0].mxu0
      %3794 = vmatprep.mubr.bf16.mxu0 %v1668
      %3795 = vmatmul.mubr.bf16.gmra.mrb[0].mxu0 %v1667
      %v3796 = vpop.f32.mrb[0].mxu0
      %v3797 = vadd.f32 %v3700, %v3796
      %v3798 = vpop.f32.mrb[0].mxu0
      %v3799 = vpop.f32.mrb[0].mxu0
      %v3800 = vadd.f32 %v3703, %v3799
      %v3801 = vpop.f32.mrb[0].mxu0
      %3802 = vmatprep.mubr.bf16.mxu0 %v1693
      %3803 = vmatmul.mubr.bf16.gmra.mrb[0].mxu0 %v1692
      %v3804 = vpop.f32.mrb[0].mxu0
      %v3805 = vadd.f32 %v3708, %v3804
      %v3806 = vpop.f32.mrb[0].mxu0
      %v3807 = vpop.f32.mrb[0].mxu0
      %v3808 = vadd.f32 %v3711, %v3807
      %v3809 = vpop.f32.mrb[0].mxu0
      %3810 = vmatprep.mubr.bf16.mxu0 %v1718
      %3811 = vmatmul.mubr.bf16.gmra.mrb[0].mxu0 %v1717
      %v3812 = vpop.f32.mrb[0].mxu0
      %v3813 = vadd.f32 %v3716, %v3812
      %v3814 = vpop.f32.mrb[0].mxu0
      %v3815 = vpop.f32.mrb[0].mxu0
      %v3816 = vadd.f32 %v3719, %v3815
      %v3817 = vpop.f32.mrb[0].mxu0
      %3818 = vmatprep.mubr.bf16.mxu0 %v1743
      %3819 = vmatmul.mubr.bf16.gmra.mrb[0].mxu0 %v1742
      %v3820 = vpop.f32.mrb[0].mxu0
      %v3821 = vadd.f32 %v3724, %v3820
      %v3822 = vpop.f32.mrb[0].mxu0
      %v3823 = vpop.f32.mrb[0].mxu0
      %v3824 = vadd.f32 %v3727, %v3823
      %v3825 = vpop.f32.mrb[0].mxu0
      %3826 = vdwg.mxu0
      %3827 = vmatprep.subr.bf16.mxu0 0
      %3828 = vmatpush1.bf16.msra.mxu0 %v2843
      %3829 = vmatprep.subr.bf16.mxu0 0
      %3830 = vmatpush1.bf16.msra.mxu0 %v2844
      %3831 = vmatprep.subr.bf16.mxu0 0
      %3832 = vmatpush1.bf16.msra.mxu0 %v2845
      %3833 = vmatprep.subr.bf16.mxu0 0
      %3834 = vmatpush1.bf16.msra.mxu0 %v2846
      %3835 = vmatprep.subr.bf16.mxu0 0
      %3836 = vmatpush1.bf16.msra.mxu0 %v2847
      %3837 = vmatprep.subr.bf16.mxu0 0
      %3838 = vmatpush1.bf16.msra.mxu0 %v2848
      %3839 = vmatprep.subr.bf16.mxu0 0
      %3840 = vmatpush1.bf16.msra.mxu0 %v2849
      %3841 = vmatprep.subr.bf16.mxu0 0
      %3842 = vmatpush1.bf16.msra.mxu0 %v2850
      %3843 = vmatprep.subr.bf16.mxu0 0
      %3844 = vmatpush1.bf16.msra.mxu0 %v2851
      %3845 = vmatprep.subr.bf16.mxu0 0
      %3846 = vmatpush1.bf16.msra.mxu0 %v2852
      %3847 = vmatprep.subr.bf16.mxu0 0
      %3848 = vmatpush1.bf16.msra.mxu0 %v2853
      %3849 = vmatprep.subr.bf16.mxu0 0
      %3850 = vmatpush1.bf16.msra.mxu0 %v2854
      %3851 = vmatprep.subr.bf16.mxu0 0
      %3852 = vmatpush1.bf16.msra.mxu0 %v2855
      %3853 = vmatprep.subr.bf16.mxu0 0
      %3854 = vmatpush1.bf16.msra.mxu0 %v2856
      %3855 = vmatprep.subr.bf16.mxu0 0
      %3856 = vmatpush1.bf16.msra.mxu0 %v2857
      %3857 = vmatprep.subr.bf16.mxu0 0
      %3858 = vmatpush1.bf16.msra.mxu0 %v2858
      %3859 = vmatprep.mubr.bf16.mxu0 %v1570
      %3860 = vmatmul.mubr.bf16.gmra.mrb[0].mxu0 %v1569
      %v3861 = vpop.f32.mrb[0].mxu0
      %v3862 = vadd.f32 %v3765, %v3861
      %v3863 = vpop.f32.mrb[0].mxu0
      %v3864 = vpop.f32.mrb[0].mxu0
      %v3865 = vadd.f32 %v3768, %v3864
      %v3866 = vpop.f32.mrb[0].mxu0
      %3867 = vmatprep.mubr.bf16.mxu0 %v1595
      %3868 = vmatmul.mubr.bf16.gmra.mrb[0].mxu0 %v1594
      %v3869 = vpop.f32.mrb[0].mxu0
      %v3870 = vadd.f32 %v3773, %v3869
      %v3871 = vpop.f32.mrb[0].mxu0
      %v3872 = vpop.f32.mrb[0].mxu0
      %v3873 = vadd.f32 %v3776, %v3872
      %v3874 = vpop.f32.mrb[0].mxu0
      %3875 = vmatprep.mubr.bf16.mxu0 %v1620
      %3876 = vmatmul.mubr.bf16.gmra.mrb[0].mxu0 %v1619
      %v3877 = vpop.f32.mrb[0].mxu0
      %v3878 = vadd.f32 %v3781, %v3877
      %v3879 = vpop.f32.mrb[0].mxu0
      %v3880 = vpop.f32.mrb[0].mxu0
      %v3881 = vadd.f32 %v3784, %v3880
      %v3882 = vpop.f32.mrb[0].mxu0
      %3883 = vmatprep.mubr.bf16.mxu0 %v1645
      %3884 = vmatmul.mubr.bf16.gmra.mrb[0].mxu0 %v1644
      %v3885 = vpop.f32.mrb[0].mxu0
      %v3886 = vadd.f32 %v3789, %v3885
      %v3887 = vpop.f32.mrb[0].mxu0
      %v3888 = vpop.f32.mrb[0].mxu0
      %v3889 = vadd.f32 %v3792, %v3888
      %v3890 = vpop.f32.mrb[0].mxu0
      %3891 = vmatprep.mubr.bf16.mxu0 %v1670
      %3892 = vmatmul.mubr.bf16.gmra.mrb[0].mxu0 %v1669
      %v3893 = vpop.f32.mrb[0].mxu0
      %v3894 = vadd.f32 %v3797, %v3893
      %v3895 = vpop.f32.mrb[0].mxu0
      %v3896 = vpop.f32.mrb[0].mxu0
      %v3897 = vadd.f32 %v3800, %v3896
      %v3898 = vpop.f32.mrb[0].mxu0
      %3899 = vmatprep.mubr.bf16.mxu0 %v1695
      %3900 = vmatmul.mubr.bf16.gmra.mrb[0].mxu0 %v1694
      %v3901 = vpop.f32.mrb[0].mxu0
      %v3902 = vadd.f32 %v3805, %v3901
      %v3903 = vpop.f32.mrb[0].mxu0
      %v3904 = vpop.f32.mrb[0].mxu0
      %v3905 = vadd.f32 %v3808, %v3904
      %v3906 = vpop.f32.mrb[0].mxu0
      %3907 = vmatprep.mubr.bf16.mxu0 %v1720
      %3908 = vmatmul.mubr.bf16.gmra.mrb[0].mxu0 %v1719
      %v3909 = vpop.f32.mrb[0].mxu0
      %v3910 = vadd.f32 %v3813, %v3909
      %v3911 = vpop.f32.mrb[0].mxu0
      %v3912 = vpop.f32.mrb[0].mxu0
      %v3913 = vadd.f32 %v3816, %v3912
      %v3914 = vpop.f32.mrb[0].mxu0
      %3915 = vmatprep.mubr.bf16.mxu0 %v1745
      %3916 = vmatmul.mubr.bf16.gmra.mrb[0].mxu0 %v1744
      %v3917 = vpop.f32.mrb[0].mxu0
      %v3918 = vadd.f32 %v3821, %v3917
      %v3919 = vpop.f32.mrb[0].mxu0
      %v3920 = vpop.f32.mrb[0].mxu0
      %v3921 = vadd.f32 %v3824, %v3920
      %v3922 = vpop.f32.mrb[0].mxu0
      %3923 = vdwg.mxu0
      %3924 = vmatprep.subr.bf16.mxu0 0
      %3925 = vmatpush1.bf16.msra.mxu0 %v2859
      %3926 = vmatprep.subr.bf16.mxu0 0
      %3927 = vmatpush1.bf16.msra.mxu0 %v2860
      %3928 = vmatprep.subr.bf16.mxu0 0
      %3929 = vmatpush1.bf16.msra.mxu0 %v2861
      %3930 = vmatprep.subr.bf16.mxu0 0
      %3931 = vmatpush1.bf16.msra.mxu0 %v2862
      %3932 = vmatprep.subr.bf16.mxu0 0
      %3933 = vmatpush1.bf16.msra.mxu0 %v2863
      %3934 = vmatprep.subr.bf16.mxu0 0
      %3935 = vmatpush1.bf16.msra.mxu0 %v2864
      %3936 = vmatprep.subr.bf16.mxu0 0
      %3937 = vmatpush1.bf16.msra.mxu0 %v2865
      %3938 = vmatprep.subr.bf16.mxu0 0
      %3939 = vmatpush1.bf16.msra.mxu0 %v2866
      %3940 = vmatprep.subr.bf16.mxu0 0
      %3941 = vmatpush1.bf16.msra.mxu0 %v2867
      %3942 = vmatprep.subr.bf16.mxu0 0
      %3943 = vmatpush1.bf16.msra.mxu0 %v2868
      %3944 = vmatprep.subr.bf16.mxu0 0
      %3945 = vmatpush1.bf16.msra.mxu0 %v2869
      %3946 = vmatprep.subr.bf16.mxu0 0
      %3947 = vmatpush1.bf16.msra.mxu0 %v2870
      %3948 = vmatprep.subr.bf16.mxu0 0
      %3949 = vmatpush1.bf16.msra.mxu0 %v2871
      %3950 = vmatprep.subr.bf16.mxu0 0
      %3951 = vmatpush1.bf16.msra.mxu0 %v2872
      %3952 = vmatprep.subr.bf16.mxu0 0
      %3953 = vmatpush1.bf16.msra.mxu0 %v2873
      %3954 = vmatprep.subr.bf16.mxu0 0
      %3955 = vmatpush1.bf16.msra.mxu0 %v2874
      %3956 = vmatprep.mubr.bf16.mxu0 %v1572
      %3957 = vmatmul.mubr.bf16.gmra.mrb[0].mxu0 %v1571
      %v3958 = vpop.f32.mrb[0].mxu0
      %v3959 = vadd.f32 %v3862, %v3958
      %v3960 = vpop.f32.mrb[0].mxu0
      %v3961 = vpop.f32.mrb[0].mxu0
      %v3962 = vadd.f32 %v3865, %v3961
      %v3963 = vpop.f32.mrb[0].mxu0
      %3964 = vmatprep.mubr.bf16.mxu0 %v1597
      %3965 = vmatmul.mubr.bf16.gmra.mrb[0].mxu0 %v1596
      %v3966 = vpop.f32.mrb[0].mxu0
      %v3967 = vadd.f32 %v3870, %v3966
      %v3968 = vpop.f32.mrb[0].mxu0
      %v3969 = vpop.f32.mrb[0].mxu0
      %v3970 = vadd.f32 %v3873, %v3969
      %v3971 = vpop.f32.mrb[0].mxu0
      %3972 = vmatprep.mubr.bf16.mxu0 %v1622
      %3973 = vmatmul.mubr.bf16.gmra.mrb[0].mxu0 %v1621
      %v3974 = vpop.f32.mrb[0].mxu0
      %v3975 = vadd.f32 %v3878, %v3974
      %v3976 = vpop.f32.mrb[0].mxu0
      %v3977 = vpop.f32.mrb[0].mxu0
      %v3978 = vadd.f32 %v3881, %v3977
      %v3979 = vpop.f32.mrb[0].mxu0
      %3980 = vmatprep.mubr.bf16.mxu0 %v1647
      %3981 = vmatmul.mubr.bf16.gmra.mrb[0].mxu0 %v1646
      %v3982 = vpop.f32.mrb[0].mxu0
      %v3983 = vadd.f32 %v3886, %v3982
      %v3984 = vpop.f32.mrb[0].mxu0
      %v3985 = vpop.f32.mrb[0].mxu0
      %v3986 = vadd.f32 %v3889, %v3985
      %v3987 = vpop.f32.mrb[0].mxu0
      %3988 = vmatprep.mubr.bf16.mxu0 %v1672
      %3989 = vmatmul.mubr.bf16.gmra.mrb[0].mxu0 %v1671
      %v3990 = vpop.f32.mrb[0].mxu0
      %v3991 = vadd.f32 %v3894, %v3990
      %v3992 = vpop.f32.mrb[0].mxu0
      %v3993 = vpop.f32.mrb[0].mxu0
      %v3994 = vadd.f32 %v3897, %v3993
      %v3995 = vpop.f32.mrb[0].mxu0
      %3996 = vmatprep.mubr.bf16.mxu0 %v1697
      %3997 = vmatmul.mubr.bf16.gmra.mrb[0].mxu0 %v1696
      %v3998 = vpop.f32.mrb[0].mxu0
      %v3999 = vadd.f32 %v3902, %v3998
      %v4000 = vpop.f32.mrb[0].mxu0
      %v4001 = vpop.f32.mrb[0].mxu0
      %v4002 = vadd.f32 %v3905, %v4001
      %v4003 = vpop.f32.mrb[0].mxu0
      %4004 = vmatprep.mubr.bf16.mxu0 %v1722
      %4005 = vmatmul.mubr.bf16.gmra.mrb[0].mxu0 %v1721
      %v4006 = vpop.f32.mrb[0].mxu0
      %v4007 = vadd.f32 %v3910, %v4006
      %v4008 = vpop.f32.mrb[0].mxu0
      %v4009 = vpop.f32.mrb[0].mxu0
      %v4010 = vadd.f32 %v3913, %v4009
      %v4011 = vpop.f32.mrb[0].mxu0
      %4012 = vmatprep.mubr.bf16.mxu0 %v1747
      %4013 = vmatmul.mubr.bf16.gmra.mrb[0].mxu0 %v1746
      %v4014 = vpop.f32.mrb[0].mxu0
      %v4015 = vadd.f32 %v3918, %v4014
      %v4016 = vpop.f32.mrb[0].mxu0
      %v4017 = vpop.f32.mrb[0].mxu0
      %v4018 = vadd.f32 %v3921, %v4017
      %v4019 = vpop.f32.mrb[0].mxu0
      %4020 = vdwg.mxu0
      %4021 = vmatprep.subr.bf16.mxu0 0
      %4022 = vmatpush1.bf16.msra.mxu0 %v2875
      %4023 = vmatprep.subr.bf16.mxu0 0
      %4024 = vmatpush1.bf16.msra.mxu0 %v2876
      %4025 = vmatprep.subr.bf16.mxu0 0
      %4026 = vmatpush1.bf16.msra.mxu0 %v2877
      %4027 = vmatprep.subr.bf16.mxu0 0
      %4028 = vmatpush1.bf16.msra.mxu0 %v2878
      %4029 = vmatprep.subr.bf16.mxu0 0
      %4030 = vmatpush1.bf16.msra.mxu0 %v2879
      %4031 = vmatprep.subr.bf16.mxu0 0
      %4032 = vmatpush1.bf16.msra.mxu0 %v2880
      %4033 = vmatprep.subr.bf16.mxu0 0
      %4034 = vmatpush1.bf16.msra.mxu0 %v2881
      %4035 = vmatprep.subr.bf16.mxu0 0
      %4036 = vmatpush1.bf16.msra.mxu0 %v2882
      %4037 = vmatprep.subr.bf16.mxu0 0
      %4038 = vmatpush1.bf16.msra.mxu0 %v2883
      %4039 = vmatprep.subr.bf16.mxu0 0
      %4040 = vmatpush1.bf16.msra.mxu0 %v2884
      %4041 = vmatprep.subr.bf16.mxu0 0
      %4042 = vmatpush1.bf16.msra.mxu0 %v2885
      %4043 = vmatprep.subr.bf16.mxu0 0
      %4044 = vmatpush1.bf16.msra.mxu0 %v2886
      %4045 = vmatprep.subr.bf16.mxu0 0
      %4046 = vmatpush1.bf16.msra.mxu0 %v2887
      %4047 = vmatprep.subr.bf16.mxu0 0
      %4048 = vmatpush1.bf16.msra.mxu0 %v2888
      %4049 = vmatprep.subr.bf16.mxu0 0
      %4050 = vmatpush1.bf16.msra.mxu0 %v2889
      %4051 = vmatprep.subr.bf16.mxu0 0
      %4052 = vmatpush1.bf16.msra.mxu0 %v2890
      %4053 = vmatprep.mubr.bf16.mxu0 %v1574
      %4054 = vmatmul.mubr.bf16.gmra.mrb[0].mxu0 %v1573
      %v4055 = vpop.f32.mrb[0].mxu0
      %v4056 = vadd.f32 %v3959, %v4055
      %v4057 = vpop.f32.mrb[0].mxu0
      %v4058 = vpop.f32.mrb[0].mxu0
      %v4059 = vadd.f32 %v3962, %v4058
      %v4060 = vpop.f32.mrb[0].mxu0
      %4061 = vmatprep.mubr.bf16.mxu0 %v1599
      %4062 = vmatmul.mubr.bf16.gmra.mrb[0].mxu0 %v1598
      %v4063 = vpop.f32.mrb[0].mxu0
      %v4064 = vadd.f32 %v3967, %v4063
      %v4065 = vpop.f32.mrb[0].mxu0
      %v4066 = vpop.f32.mrb[0].mxu0
      %v4067 = vadd.f32 %v3970, %v4066
      %v4068 = vpop.f32.mrb[0].mxu0
      %4069 = vmatprep.mubr.bf16.mxu0 %v1624
      %4070 = vmatmul.mubr.bf16.gmra.mrb[0].mxu0 %v1623
      %v4071 = vpop.f32.mrb[0].mxu0
      %v4072 = vadd.f32 %v3975, %v4071
      %v4073 = vpop.f32.mrb[0].mxu0
      %v4074 = vpop.f32.mrb[0].mxu0
      %v4075 = vadd.f32 %v3978, %v4074
      %v4076 = vpop.f32.mrb[0].mxu0
      %4077 = vmatprep.mubr.bf16.mxu0 %v1649
      %4078 = vmatmul.mubr.bf16.gmra.mrb[0].mxu0 %v1648
      %v4079 = vpop.f32.mrb[0].mxu0
      %v4080 = vadd.f32 %v3983, %v4079
      %v4081 = vpop.f32.mrb[0].mxu0
      %v4082 = vpop.f32.mrb[0].mxu0
      %v4083 = vadd.f32 %v3986, %v4082
      %v4084 = vpop.f32.mrb[0].mxu0
      %4085 = vmatprep.mubr.bf16.mxu0 %v1674
      %4086 = vmatmul.mubr.bf16.gmra.mrb[0].mxu0 %v1673
      %v4087 = vpop.f32.mrb[0].mxu0
      %v4088 = vadd.f32 %v3991, %v4087
      %v4089 = vpop.f32.mrb[0].mxu0
      %v4090 = vpop.f32.mrb[0].mxu0
      %v4091 = vadd.f32 %v3994, %v4090
      %v4092 = vpop.f32.mrb[0].mxu0
      %4093 = vmatprep.mubr.bf16.mxu0 %v1699
      %4094 = vmatmul.mubr.bf16.gmra.mrb[0].mxu0 %v1698
      %v4095 = vpop.f32.mrb[0].mxu0
      %v4096 = vadd.f32 %v3999, %v4095
      %v4097 = vpop.f32.mrb[0].mxu0
      %v4098 = vpop.f32.mrb[0].mxu0
      %v4099 = vadd.f32 %v4002, %v4098
      %v4100 = vpop.f32.mrb[0].mxu0
      %4101 = vmatprep.mubr.bf16.mxu0 %v1724
      %4102 = vmatmul.mubr.bf16.gmra.mrb[0].mxu0 %v1723
      %v4103 = vpop.f32.mrb[0].mxu0
      %v4104 = vadd.f32 %v4007, %v4103
      %v4105 = vpop.f32.mrb[0].mxu0
      %v4106 = vpop.f32.mrb[0].mxu0
      %v4107 = vadd.f32 %v4010, %v4106
      %v4108 = vpop.f32.mrb[0].mxu0
      %4109 = vmatprep.mubr.bf16.mxu0 %v1749
      %4110 = vmatmul.mubr.bf16.gmra.mrb[0].mxu0 %v1748
      %v4111 = vpop.f32.mrb[0].mxu0
      %v4112 = vadd.f32 %v4015, %v4111
      %v4113 = vpop.f32.mrb[0].mxu0
      %v4114 = vpop.f32.mrb[0].mxu0
      %v4115 = vadd.f32 %v4018, %v4114
      %v4116 = vpop.f32.mrb[0].mxu0
      %4117 = vdwg.mxu0
      %4118 = vmatprep.subr.bf16.mxu0 0
      %4119 = vmatpush1.bf16.msra.mxu0 %v2891
      %4120 = vmatprep.subr.bf16.mxu0 0
      %4121 = vmatpush1.bf16.msra.mxu0 %v2892
      %4122 = vmatprep.subr.bf16.mxu0 0
      %4123 = vmatpush1.bf16.msra.mxu0 %v2893
      %4124 = vmatprep.subr.bf16.mxu0 0
      %4125 = vmatpush1.bf16.msra.mxu0 %v2894
      %4126 = vmatprep.subr.bf16.mxu0 0
      %4127 = vmatpush1.bf16.msra.mxu0 %v2895
      %4128 = vmatprep.subr.bf16.mxu0 0
      %4129 = vmatpush1.bf16.msra.mxu0 %v2896
      %4130 = vmatprep.subr.bf16.mxu0 0
      %4131 = vmatpush1.bf16.msra.mxu0 %v2897
      %4132 = vmatprep.subr.bf16.mxu0 0
      %4133 = vmatpush1.bf16.msra.mxu0 %v2898
      %4134 = vmatprep.subr.bf16.mxu0 0
      %4135 = vmatpush1.bf16.msra.mxu0 %v2899
      %4136 = vmatprep.subr.bf16.mxu0 0
      %4137 = vmatpush1.bf16.msra.mxu0 %v2900
      %4138 = vmatprep.subr.bf16.mxu0 0
      %4139 = vmatpush1.bf16.msra.mxu0 %v2901
      %4140 = vmatprep.subr.bf16.mxu0 0
      %4141 = vmatpush1.bf16.msra.mxu0 %v2902
      %4142 = vmatprep.subr.bf16.mxu0 0
      %4143 = vmatpush1.bf16.msra.mxu0 %v2903
      %4144 = vmatprep.subr.bf16.mxu0 0
      %4145 = vmatpush1.bf16.msra.mxu0 %v2904
      %4146 = vmatprep.subr.bf16.mxu0 0
      %4147 = vmatpush1.bf16.msra.mxu0 %v2905
      %4148 = vmatprep.subr.bf16.mxu0 0
      %4149 = vmatpush1.bf16.msra.mxu0 %v2906
      %4150 = vmatprep.mubr.bf16.mxu0 %v1576
      %4151 = vmatmul.mubr.bf16.gmra.mrb[0].mxu0 %v1575
      %v4152 = vpop.f32.mrb[0].mxu0
      %v4153 = vadd.f32 %v4056, %v4152
      %v4154 = vpop.f32.mrb[0].mxu0
      %v4155 = vpop.f32.mrb[0].mxu0
      %v4156 = vadd.f32 %v4059, %v4155
      %v4157 = vpop.f32.mrb[0].mxu0
      %4158 = vmatprep.mubr.bf16.mxu0 %v1601
      %4159 = vmatmul.mubr.bf16.gmra.mrb[0].mxu0 %v1600
      %v4160 = vpop.f32.mrb[0].mxu0
      %v4161 = vadd.f32 %v4064, %v4160
      %v4162 = vpop.f32.mrb[0].mxu0
      %v4163 = vpop.f32.mrb[0].mxu0
      %v4164 = vadd.f32 %v4067, %v4163
      %v4165 = vpop.f32.mrb[0].mxu0
      %4166 = vmatprep.mubr.bf16.mxu0 %v1626
      %4167 = vmatmul.mubr.bf16.gmra.mrb[0].mxu0 %v1625
      %v4168 = vpop.f32.mrb[0].mxu0
      %v4169 = vadd.f32 %v4072, %v4168
      %v4170 = vpop.f32.mrb[0].mxu0
      %v4171 = vpop.f32.mrb[0].mxu0
      %v4172 = vadd.f32 %v4075, %v4171
      %v4173 = vpop.f32.mrb[0].mxu0
      %4174 = vmatprep.mubr.bf16.mxu0 %v1651
      %4175 = vmatmul.mubr.bf16.gmra.mrb[0].mxu0 %v1650
      %v4176 = vpop.f32.mrb[0].mxu0
      %v4177 = vadd.f32 %v4080, %v4176
      %v4178 = vpop.f32.mrb[0].mxu0
      %v4179 = vpop.f32.mrb[0].mxu0
      %v4180 = vadd.f32 %v4083, %v4179
      %v4181 = vpop.f32.mrb[0].mxu0
      %4182 = vmatprep.mubr.bf16.mxu0 %v1676
      %4183 = vmatmul.mubr.bf16.gmra.mrb[0].mxu0 %v1675
      %v4184 = vpop.f32.mrb[0].mxu0
      %v4185 = vadd.f32 %v4088, %v4184
      %v4186 = vpop.f32.mrb[0].mxu0
      %v4187 = vpop.f32.mrb[0].mxu0
      %v4188 = vadd.f32 %v4091, %v4187
      %v4189 = vpop.f32.mrb[0].mxu0
      %4190 = vmatprep.mubr.bf16.mxu0 %v1701
      %4191 = vmatmul.mubr.bf16.gmra.mrb[0].mxu0 %v1700
      %v4192 = vpop.f32.mrb[0].mxu0
      %v4193 = vadd.f32 %v4096, %v4192
      %v4194 = vpop.f32.mrb[0].mxu0
      %v4195 = vpop.f32.mrb[0].mxu0
      %v4196 = vadd.f32 %v4099, %v4195
      %v4197 = vpop.f32.mrb[0].mxu0
      %4198 = vmatprep.mubr.bf16.mxu0 %v1726
      %4199 = vmatmul.mubr.bf16.gmra.mrb[0].mxu0 %v1725
      %v4200 = vpop.f32.mrb[0].mxu0
      %v4201 = vadd.f32 %v4104, %v4200
      %v4202 = vpop.f32.mrb[0].mxu0
      %v4203 = vpop.f32.mrb[0].mxu0
      %v4204 = vadd.f32 %v4107, %v4203
      %v4205 = vpop.f32.mrb[0].mxu0
      %4206 = vmatprep.mubr.bf16.mxu0 %v1751
      %4207 = vmatmul.mubr.bf16.gmra.mrb[0].mxu0 %v1750
      %v4208 = vpop.f32.mrb[0].mxu0
      %v4209 = vadd.f32 %v4112, %v4208
      %v4210 = vpop.f32.mrb[0].mxu0
      %v4211 = vpop.f32.mrb[0].mxu0
      %v4212 = vadd.f32 %v4115, %v4211
      %v4213 = vpop.f32.mrb[0].mxu0
      %4214 = vdwg.mxu0
      %4215 = vmatprep.subr.bf16.mxu0 0
      %4216 = vmatpush1.bf16.msra.mxu0 %v2907
      %4217 = vmatprep.subr.bf16.mxu0 0
      %4218 = vmatpush1.bf16.msra.mxu0 %v2908
      %4219 = vmatprep.subr.bf16.mxu0 0
      %4220 = vmatpush1.bf16.msra.mxu0 %v2909
      %4221 = vmatprep.subr.bf16.mxu0 0
      %4222 = vmatpush1.bf16.msra.mxu0 %v2910
      %4223 = vmatprep.subr.bf16.mxu0 0
      %4224 = vmatpush1.bf16.msra.mxu0 %v2911
      %4225 = vmatprep.subr.bf16.mxu0 0
      %4226 = vmatpush1.bf16.msra.mxu0 %v2912
      %4227 = vmatprep.subr.bf16.mxu0 0
      %4228 = vmatpush1.bf16.msra.mxu0 %v2913
      %4229 = vmatprep.subr.bf16.mxu0 0
      %4230 = vmatpush1.bf16.msra.mxu0 %v2914
      %4231 = vmatprep.subr.bf16.mxu0 0
      %4232 = vmatpush1.bf16.msra.mxu0 %v2915
      %4233 = vmatprep.subr.bf16.mxu0 0
      %4234 = vmatpush1.bf16.msra.mxu0 %v2916
      %4235 = vmatprep.subr.bf16.mxu0 0
      %4236 = vmatpush1.bf16.msra.mxu0 %v2917
      %4237 = vmatprep.subr.bf16.mxu0 0
      %4238 = vmatpush1.bf16.msra.mxu0 %v2918
      %4239 = vmatprep.subr.bf16.mxu0 0
      %4240 = vmatpush1.bf16.msra.mxu0 %v2919
      %4241 = vmatprep.subr.bf16.mxu0 0
      %4242 = vmatpush1.bf16.msra.mxu0 %v2920
      %4243 = vmatprep.subr.bf16.mxu0 0
      %4244 = vmatpush1.bf16.msra.mxu0 %v2921
      %4245 = vmatprep.subr.bf16.mxu0 0
      %4246 = vmatpush1.bf16.msra.mxu0 %v2922
      %4247 = vmatprep.mubr.bf16.mxu0 %v1578
      %4248 = vmatmul.mubr.bf16.gmra.mrb[0].mxu0 %v1577
      %v4249 = vpop.f32.mrb[0].mxu0
      %v4250 = vadd.f32 %v4153, %v4249
      %v4251 = vpop.f32.mrb[0].mxu0
      %v4252 = vpop.f32.mrb[0].mxu0
      %v4253 = vadd.f32 %v4156, %v4252
      %v4254 = vpop.f32.mrb[0].mxu0
      %4255 = vmatprep.mubr.bf16.mxu0 %v1603
      %4256 = vmatmul.mubr.bf16.gmra.mrb[0].mxu0 %v1602
      %v4257 = vpop.f32.mrb[0].mxu0
      %v4258 = vadd.f32 %v4161, %v4257
      %v4259 = vpop.f32.mrb[0].mxu0
      %v4260 = vpop.f32.mrb[0].mxu0
      %v4261 = vadd.f32 %v4164, %v4260
      %v4262 = vpop.f32.mrb[0].mxu0
      %4263 = vmatprep.mubr.bf16.mxu0 %v1628
      %4264 = vmatmul.mubr.bf16.gmra.mrb[0].mxu0 %v1627
      %v4265 = vpop.f32.mrb[0].mxu0
      %v4266 = vadd.f32 %v4169, %v4265
      %v4267 = vpop.f32.mrb[0].mxu0
      %v4268 = vpop.f32.mrb[0].mxu0
      %v4269 = vadd.f32 %v4172, %v4268
      %v4270 = vpop.f32.mrb[0].mxu0
      %4271 = vmatprep.mubr.bf16.mxu0 %v1653
      %4272 = vmatmul.mubr.bf16.gmra.mrb[0].mxu0 %v1652
      %v4273 = vpop.f32.mrb[0].mxu0
      %v4274 = vadd.f32 %v4177, %v4273
      %v4275 = vpop.f32.mrb[0].mxu0
      %v4276 = vpop.f32.mrb[0].mxu0
      %v4277 = vadd.f32 %v4180, %v4276
      %v4278 = vpop.f32.mrb[0].mxu0
      %4279 = vmatprep.mubr.bf16.mxu0 %v1678
      %4280 = vmatmul.mubr.bf16.gmra.mrb[0].mxu0 %v1677
      %v4281 = vpop.f32.mrb[0].mxu0
      %v4282 = vadd.f32 %v4185, %v4281
      %v4283 = vpop.f32.mrb[0].mxu0
      %v4284 = vpop.f32.mrb[0].mxu0
      %v4285 = vadd.f32 %v4188, %v4284
      %v4286 = vpop.f32.mrb[0].mxu0
      %4287 = vmatprep.mubr.bf16.mxu0 %v1703
      %4288 = vmatmul.mubr.bf16.gmra.mrb[0].mxu0 %v1702
      %v4289 = vpop.f32.mrb[0].mxu0
      %v4290 = vadd.f32 %v4193, %v4289
      %v4291 = vpop.f32.mrb[0].mxu0
      %v4292 = vpop.f32.mrb[0].mxu0
      %v4293 = vadd.f32 %v4196, %v4292
      %v4294 = vpop.f32.mrb[0].mxu0
      %4295 = vmatprep.mubr.bf16.mxu0 %v1728
      %4296 = vmatmul.mubr.bf16.gmra.mrb[0].mxu0 %v1727
      %v4297 = vpop.f32.mrb[0].mxu0
      %v4298 = vadd.f32 %v4201, %v4297
      %v4299 = vpop.f32.mrb[0].mxu0
      %v4300 = vpop.f32.mrb[0].mxu0
      %v4301 = vadd.f32 %v4204, %v4300
      %v4302 = vpop.f32.mrb[0].mxu0
      %4303 = vmatprep.mubr.bf16.mxu0 %v1753
      %4304 = vmatmul.mubr.bf16.gmra.mrb[0].mxu0 %v1752
      %v4305 = vpop.f32.mrb[0].mxu0
      %v4306 = vadd.f32 %v4209, %v4305
      %v4307 = vpop.f32.mrb[0].mxu0
      %v4308 = vpop.f32.mrb[0].mxu0
      %v4309 = vadd.f32 %v4212, %v4308
      %v4310 = vpop.f32.mrb[0].mxu0
      %4311 = vdwg.mxu0
      %4312 = vmatprep.subr.bf16.mxu0 0
      %4313 = vmatpush1.bf16.msra.mxu0 %v2923
      %4314 = vmatprep.subr.bf16.mxu0 0
      %4315 = vmatpush1.bf16.msra.mxu0 %v2924
      %4316 = vmatprep.subr.bf16.mxu0 0
      %4317 = vmatpush1.bf16.msra.mxu0 %v2925
      %4318 = vmatprep.subr.bf16.mxu0 0
      %4319 = vmatpush1.bf16.msra.mxu0 %v2926
      %4320 = vmatprep.subr.bf16.mxu0 0
      %4321 = vmatpush1.bf16.msra.mxu0 0
      %4322 = vmatprep.subr.bf16.mxu0 0
      %4323 = vmatpush1.bf16.msra.mxu0 0
      %4324 = vmatprep.subr.bf16.mxu0 0
      %4325 = vmatpush1.bf16.msra.mxu0 0
      %4326 = vmatprep.subr.bf16.mxu0 0
      %4327 = vmatpush1.bf16.msra.mxu0 0
      %4328 = vmatprep.subr.bf16.mxu0 0
      %4329 = vmatpush1.bf16.msra.mxu0 0
      %4330 = vmatprep.subr.bf16.mxu0 0
      %4331 = vmatpush1.bf16.msra.mxu0 0
      %4332 = vmatprep.subr.bf16.mxu0 0
      %4333 = vmatpush1.bf16.msra.mxu0 0
      %4334 = vmatprep.subr.bf16.mxu0 0
      %4335 = vmatpush1.bf16.msra.mxu0 0
      %4336 = vmatprep.subr.bf16.mxu0 0
      %4337 = vmatpush1.bf16.msra.mxu0 0
      %4338 = vmatprep.subr.bf16.mxu0 0
      %4339 = vmatpush1.bf16.msra.mxu0 0
      %4340 = vmatprep.subr.bf16.mxu0 0
      %4341 = vmatpush1.bf16.msra.mxu0 0
      %4342 = vmatprep.subr.bf16.mxu0 0
      %4343 = vmatpush1.bf16.msra.mxu0 0
      %4344 = vmatprep.mubr.bf16.mxu0 0
      %4345 = vmatmul.mubr.bf16.gmra.mrb[0].mxu0 %v3125
      %v4346 = vpop.f32.mrb[0].mxu0
      %v4347 = vadd.f32 %v4250, %v4346
      %v4348 = vpop.f32.mrb[0].mxu0
      %v4349 = vpop.f32.mrb[0].mxu0
      %v4350 = vadd.f32 %v4253, %v4349
      %v4351 = vpop.f32.mrb[0].mxu0
      %4352 = vmatprep.mubr.bf16.mxu0 0
      %4353 = vmatmul.mubr.bf16.gmra.mrb[0].mxu0 %v3128
      %v4354 = vpop.f32.mrb[0].mxu0
      %v4355 = vadd.f32 %v4258, %v4354
      %v4356 = vpop.f32.mrb[0].mxu0
      %v4357 = vpop.f32.mrb[0].mxu0
      %v4358 = vadd.f32 %v4261, %v4357
      %v4359 = vpop.f32.mrb[0].mxu0
      %4360 = vmatprep.mubr.bf16.mxu0 0
      %4361 = vmatmul.mubr.bf16.gmra.mrb[0].mxu0 %v3131
      %v4362 = vpop.f32.mrb[0].mxu0
      %v4363 = vadd.f32 %v4266, %v4362
      %v4364 = vpop.f32.mrb[0].mxu0
      %v4365 = vpop.f32.mrb[0].mxu0
      %v4366 = vadd.f32 %v4269, %v4365
      %v4367 = vpop.f32.mrb[0].mxu0
      %4368 = vmatprep.mubr.bf16.mxu0 0
      %4369 = vmatmul.mubr.bf16.gmra.mrb[0].mxu0 %v3134
      %v4370 = vpop.f32.mrb[0].mxu0
      %v4371 = vadd.f32 %v4274, %v4370
      %v4372 = vpop.f32.mrb[0].mxu0
      %v4373 = vpop.f32.mrb[0].mxu0
      %v4374 = vadd.f32 %v4277, %v4373
      %v4375 = vpop.f32.mrb[0].mxu0
      %4376 = vmatprep.mubr.bf16.mxu0 0
      %4377 = vmatmul.mubr.bf16.gmra.mrb[0].mxu0 %v3137
      %v4378 = vpop.f32.mrb[0].mxu0
      %v4379 = vadd.f32 %v4282, %v4378
      %v4380 = vpop.f32.mrb[0].mxu0
      %v4381 = vpop.f32.mrb[0].mxu0
      %v4382 = vadd.f32 %v4285, %v4381
      %v4383 = vpop.f32.mrb[0].mxu0
      %4384 = vmatprep.mubr.bf16.mxu0 0
      %4385 = vmatmul.mubr.bf16.gmra.mrb[0].mxu0 %v3140
      %v4386 = vpop.f32.mrb[0].mxu0
      %v4387 = vadd.f32 %v4290, %v4386
      %v4388 = vpop.f32.mrb[0].mxu0
      %v4389 = vpop.f32.mrb[0].mxu0
      %v4390 = vadd.f32 %v4293, %v4389
      %v4391 = vpop.f32.mrb[0].mxu0
      %4392 = vmatprep.mubr.bf16.mxu0 0
      %4393 = vmatmul.mubr.bf16.gmra.mrb[0].mxu0 %v3143
      %v4394 = vpop.f32.mrb[0].mxu0
      %v4395 = vadd.f32 %v4298, %v4394
      %v4396 = vpop.f32.mrb[0].mxu0
      %v4397 = vpop.f32.mrb[0].mxu0
      %v4398 = vadd.f32 %v4301, %v4397
      %v4399 = vpop.f32.mrb[0].mxu0
      %4400 = vmatprep.mubr.bf16.mxu0 0
      %4401 = vmatmul.mubr.bf16.gmra.mrb[0].mxu0 %v3146
      %v4402 = vpop.f32.mrb[0].mxu0
      %v4403 = vadd.f32 %v4306, %v4402
      %v4404 = vpop.f32.mrb[0].mxu0
      %v4405 = vpop.f32.mrb[0].mxu0
      %v4406 = vadd.f32 %v4309, %v4405
      %v4407 = vpop.f32.mrb[0].mxu0
      %4408 = vdwg.mxu0
      %v4409 = vmax.f32 %v4347, 0.0
      %v4410 = vmax.f32 %v4350, 0.0
      %v4411 = vmax.f32 %v4355, 0.0
      %v4412 = vmax.f32 %v4358, 0.0
      %v4413 = vmax.f32 %v4363, 0.0
      %v4414 = vmax.f32 %v4366, 0.0
      %v4415 = vmax.f32 %v4371, 0.0
      %v4416 = vmax.f32 %v4374, 0.0
      %v4417 = vmax.f32 %v4379, 0.0
      %v4418 = vmax.f32 %v4382, 0.0
      %v4419 = vmax.f32 %v4387, 0.0
      %v4420 = vmax.f32 %v4390, 0.0
      %v4421 = vmax.f32 %v4395, 0.0
      %v4422 = vmax.f32 %v4398, 0.0
      %v4423 = vmax.f32 %v4403, 0.0
      %v4424 = vmax.f32 %v4406, 0.0
      %v4425 = vld [vmem:[%s3] sm:$0xff]
      %v4426 = vld [vmem:[%s3 + $0x8] sm:$0xff]
      %v4427 = vld [vmem:[%s3 + $0x10] sm:$0xff]
      %v4428 = vld [vmem:[%s3 + $0x18] sm:$0xff]
      %v4429 = vld [vmem:[%s4] sm:$0x1]
      %v4431 = vlaneseq
      %v4432 = vshrl.u32 %v4431, 7
      %v4433 = vsub.s32 0, %v4432
      %v4434 = vrot.slane %v4429, %v4433
      %vm4436 = vcmask 261120
      %v4438 = vsel %vm4436, %v4409, 0
      %v4441 = vsel %vm4436, %v4410, 0
      %v4444 = vsel %vm4436, %v4411, 0
      %v4447 = vsel %vm4436, %v4412, 0
      %v4450 = vsel %vm4436, %v4413, 0
      %v4453 = vsel %vm4436, %v4414, 0
      %v4456 = vsel %vm4436, %v4415, 0
      %v4459 = vsel %vm4436, %v4416, 0
      %v4462 = vsel %vm4436, %v4417, 0
      %v4465 = vsel %vm4436, %v4418, 0
      %v4468 = vsel %vm4436, %v4419, 0
      %v4471 = vsel %vm4436, %v4420, 0
      %v4474 = vsel %vm4436, %v4421, 0
      %v4477 = vsel %vm4436, %v4422, 0
      %v4480 = vsel %vm4436, %v4423, 0
      %v4483 = vsel %vm4436, %v4424, 0
      %4485 = vmatprep.subr.mxu0 0.0
      %4486 = vmatpush1.msra.mxu0 %v4425
      %4487 = vmatprep.subr.mxu0 0.0
      %4488 = vmatpush1.msra.mxu0 %v4426
      %4489 = vmatprep.subr.mxu0 0.0
      %4490 = vmatpush1.msra.mxu0 %v4427
      %4491 = vmatprep.subr.mxu0 0.0
      %4492 = vmatpush1.msra.mxu0 %v4428
      %4493 = vmatprep.subr.mxu0 0.0
      %4494 = vmatpush1.msra.mxu0 0.0
      %4495 = vmatprep.subr.mxu0 0.0
      %4496 = vmatpush1.msra.mxu0 0.0
      %4497 = vmatprep.subr.mxu0 0.0
      %4498 = vmatpush1.msra.mxu0 0.0
      %4499 = vmatprep.subr.mxu0 0.0
      %4500 = vmatpush1.msra.mxu0 0.0
      %4501 = vmatprep.subr.mxu0 0.0
      %4502 = vmatpush1.msra.mxu0 0.0
      %4503 = vmatprep.subr.mxu0 0.0
      %4504 = vmatpush1.msra.mxu0 0.0
      %4505 = vmatprep.subr.mxu0 0.0
      %4506 = vmatpush1.msra.mxu0 0.0
      %4507 = vmatprep.subr.mxu0 0.0
      %4508 = vmatpush1.msra.mxu0 0.0
      %4509 = vmatprep.subr.mxu0 0.0
      %4510 = vmatpush1.msra.mxu0 0.0
      %4511 = vmatprep.subr.mxu0 0.0
      %4512 = vmatpush1.msra.mxu0 0.0
      %4513 = vmatprep.subr.mxu0 0.0
      %4514 = vmatpush1.msra.mxu0 0.0
      %4515 = vmatprep.subr.mxu0 0.0
      %4516 = vmatpush1.msra.mxu0 0.0
      %4517 = vmatprep.subr.mxu0 0.0
      %4518 = vmatpush1.msra.mxu0 0.0
      %4519 = vmatprep.subr.mxu0 0.0
      %4520 = vmatpush1.msra.mxu0 0.0
      %4521 = vmatprep.subr.mxu0 0.0
      %4522 = vmatpush1.msra.mxu0 0.0
      %4523 = vmatprep.subr.mxu0 0.0
      %4524 = vmatpush1.msra.mxu0 0.0
      %4525 = vmatprep.subr.mxu0 0.0
      %4526 = vmatpush1.msra.mxu0 0.0
      %4527 = vmatprep.subr.mxu0 0.0
      %4528 = vmatpush1.msra.mxu0 0.0
      %4529 = vmatprep.subr.mxu0 0.0
      %4530 = vmatpush1.msra.mxu0 0.0
      %4531 = vmatprep.subr.mxu0 0.0
      %4532 = vmatpush1.msra.mxu0 0.0
      %4533 = vmatprep.subr.mxu0 0.0
      %4534 = vmatpush1.msra.mxu0 0.0
      %4535 = vmatprep.subr.mxu0 0.0
      %4536 = vmatpush1.msra.mxu0 0.0
      %4537 = vmatprep.subr.mxu0 0.0
      %4538 = vmatpush1.msra.mxu0 0.0
      %4539 = vmatprep.subr.mxu0 0.0
      %4540 = vmatpush1.msra.mxu0 0.0
      %4541 = vmatprep.subr.mxu0 0.0
      %4542 = vmatpush1.msra.mxu0 0.0
      %4543 = vmatprep.subr.mxu0 0.0
      %4544 = vmatpush1.msra.mxu0 0.0
      %4545 = vmatprep.subr.mxu0 0.0
      %4546 = vmatpush1.msra.mxu0 0.0
      %4547 = vmatprep.subr.mxu0 0.0
      %4548 = vmatpush1.msra.mxu0 0.0
      %4549 = vmatprep.mubr.f32.mxu0 0.0
      %4550 = vmatmul.mubr.f32.gmra.mrb[0].mxu0 %v4438
      %v4551 = vpop.f32.mrb[0].mxu0
      %v4552 = vadd.f32 %v4434, %v4551
      %v4553 = vpop.f32.mrb[0].mxu0
      %4554 = vmatprep.mubr.f32.mxu0 0.0
      %4555 = vmatmul.mubr.f32.gmra.mrb[0].mxu0 %v4441
      %v4556 = vpop.f32.mrb[0].mxu0
      %v4557 = vadd.f32 %v4434, %v4556
      %v4558 = vpop.f32.mrb[0].mxu0
      %4559 = vmatprep.mubr.f32.mxu0 0.0
      %4560 = vmatmul.mubr.f32.gmra.mrb[0].mxu0 %v4444
      %v4561 = vpop.f32.mrb[0].mxu0
      %v4562 = vadd.f32 %v4434, %v4561
      %v4563 = vpop.f32.mrb[0].mxu0
      %4564 = vmatprep.mubr.f32.mxu0 0.0
      %4565 = vmatmul.mubr.f32.gmra.mrb[0].mxu0 %v4447
      %v4566 = vpop.f32.mrb[0].mxu0
      %v4567 = vadd.f32 %v4434, %v4566
      %v4568 = vpop.f32.mrb[0].mxu0
      %4569 = vmatprep.mubr.f32.mxu0 0.0
      %4570 = vmatmul.mubr.f32.gmra.mrb[0].mxu0 %v4450
      %v4571 = vpop.f32.mrb[0].mxu0
      %v4572 = vadd.f32 %v4434, %v4571
      %v4573 = vpop.f32.mrb[0].mxu0
      %4574 = vmatprep.mubr.f32.mxu0 0.0
      %4575 = vmatmul.mubr.f32.gmra.mrb[0].mxu0 %v4453
      %v4576 = vpop.f32.mrb[0].mxu0
      %v4577 = vadd.f32 %v4434, %v4576
      %v4578 = vpop.f32.mrb[0].mxu0
      %4579 = vmatprep.mubr.f32.mxu0 0.0
      %4580 = vmatmul.mubr.f32.gmra.mrb[0].mxu0 %v4456
      %v4581 = vpop.f32.mrb[0].mxu0
      %v4582 = vadd.f32 %v4434, %v4581
      %v4583 = vpop.f32.mrb[0].mxu0
      %4584 = vmatprep.mubr.f32.mxu0 0.0
      %4585 = vmatmul.mubr.f32.gmra.mrb[0].mxu0 %v4459
      %v4586 = vpop.f32.mrb[0].mxu0
      %v4587 = vadd.f32 %v4434, %v4586
      %v4588 = vpop.f32.mrb[0].mxu0
      %4589 = vmatprep.mubr.f32.mxu0 0.0
      %4590 = vmatmul.mubr.f32.gmra.mrb[0].mxu0 %v4462
      %v4591 = vpop.f32.mrb[0].mxu0
      %v4592 = vadd.f32 %v4434, %v4591
      %v4593 = vpop.f32.mrb[0].mxu0
      %4594 = vmatprep.mubr.f32.mxu0 0.0
      %4595 = vmatmul.mubr.f32.gmra.mrb[0].mxu0 %v4465
      %v4596 = vpop.f32.mrb[0].mxu0
      %v4597 = vadd.f32 %v4434, %v4596
      %v4598 = vpop.f32.mrb[0].mxu0
      %4599 = vmatprep.mubr.f32.mxu0 0.0
      %4600 = vmatmul.mubr.f32.gmra.mrb[0].mxu0 %v4468
      %v4601 = vpop.f32.mrb[0].mxu0
      %v4602 = vadd.f32 %v4434, %v4601
      %v4603 = vpop.f32.mrb[0].mxu0
      %4604 = vmatprep.mubr.f32.mxu0 0.0
      %4605 = vmatmul.mubr.f32.gmra.mrb[0].mxu0 %v4471
      %v4606 = vpop.f32.mrb[0].mxu0
      %v4607 = vadd.f32 %v4434, %v4606
      %v4608 = vpop.f32.mrb[0].mxu0
      %4609 = vmatprep.mubr.f32.mxu0 0.0
      %4610 = vmatmul.mubr.f32.gmra.mrb[0].mxu0 %v4474
      %v4611 = vpop.f32.mrb[0].mxu0
      %v4612 = vadd.f32 %v4434, %v4611
      %v4613 = vpop.f32.mrb[0].mxu0
      %4614 = vmatprep.mubr.f32.mxu0 0.0
      %4615 = vmatmul.mubr.f32.gmra.mrb[0].mxu0 %v4477
      %v4616 = vpop.f32.mrb[0].mxu0
      %v4617 = vadd.f32 %v4434, %v4616
      %v4618 = vpop.f32.mrb[0].mxu0
      %4619 = vmatprep.mubr.f32.mxu0 0.0
      %4620 = vmatmul.mubr.f32.gmra.mrb[0].mxu0 %v4480
      %v4621 = vpop.f32.mrb[0].mxu0
      %v4622 = vadd.f32 %v4434, %v4621
      %v4623 = vpop.f32.mrb[0].mxu0
      %4624 = vmatprep.mubr.f32.mxu0 0.0
      %4625 = vmatmul.mubr.f32.gmra.mrb[0].mxu0 %v4483
      %v4626 = vpop.f32.mrb[0].mxu0
      %v4627 = vadd.f32 %v4434, %v4626
      %v4628 = vpop.f32.mrb[0].mxu0
      %4629 = vdwg.mxu0
      %v4630 = vmax.f32 %v4552, 0.0
      %v4631 = vmax.f32 %v4557, 0.0
      %v4632 = vmax.f32 %v4562, 0.0
      %v4633 = vmax.f32 %v4567, 0.0
      %v4634 = vmax.f32 %v4572, 0.0
      %v4635 = vmax.f32 %v4577, 0.0
      %v4636 = vmax.f32 %v4582, 0.0
      %v4637 = vmax.f32 %v4587, 0.0
      %v4638 = vmax.f32 %v4592, 0.0
      %v4639 = vmax.f32 %v4597, 0.0
      %v4640 = vmax.f32 %v4602, 0.0
      %v4641 = vmax.f32 %v4607, 0.0
      %v4642 = vmax.f32 %v4612, 0.0
      %v4643 = vmax.f32 %v4617, 0.0
      %v4644 = vmax.f32 %v4622, 0.0
      %v4645 = vmax.f32 %v4627, 0.0
      %v4646 = vld [vmem:[%s5] sm:$0xff]
      %v4647 = vld [vmem:[%s5 + $0x8] sm:$0xff]
      %v4648 = vld [vmem:[%s5 + $0x10] sm:$0xff]
      %v4649 = vld [vmem:[%s5 + $0x18] sm:$0xff]
      %v4650 = vld [vmem:[%s6] sm:$0x1]
      %v4652 = vlaneseq
      %v4653 = vshrl.u32 %v4652, 7
      %v4654 = vsub.s32 0, %v4653
      %v4655 = vrot.slane %v4650, %v4654
      %v4658 = vsel %vm4436, %v4630, 0
      %v4661 = vsel %vm4436, %v4631, 0
      %v4664 = vsel %vm4436, %v4632, 0
      %v4667 = vsel %vm4436, %v4633, 0
      %v4670 = vsel %vm4436, %v4634, 0
      %v4673 = vsel %vm4436, %v4635, 0
      %v4676 = vsel %vm4436, %v4636, 0
      %v4679 = vsel %vm4436, %v4637, 0
      %v4682 = vsel %vm4436, %v4638, 0
      %v4685 = vsel %vm4436, %v4639, 0
      %v4688 = vsel %vm4436, %v4640, 0
      %v4691 = vsel %vm4436, %v4641, 0
      %v4694 = vsel %vm4436, %v4642, 0
      %v4697 = vsel %vm4436, %v4643, 0
      %v4700 = vsel %vm4436, %v4644, 0
      %v4703 = vsel %vm4436, %v4645, 0
      %4705 = vmatprep.subr.mxu0 0.0
      %4706 = vmatpush1.msra.mxu0 %v4646
      %4707 = vmatprep.subr.mxu0 0.0
      %4708 = vmatpush1.msra.mxu0 %v4647
      %4709 = vmatprep.subr.mxu0 0.0
      %4710 = vmatpush1.msra.mxu0 %v4648
      %4711 = vmatprep.subr.mxu0 0.0
      %4712 = vmatpush1.msra.mxu0 %v4649
      %4713 = vmatprep.subr.mxu0 0.0
      %4714 = vmatpush1.msra.mxu0 0.0
      %4715 = vmatprep.subr.mxu0 0.0
      %4716 = vmatpush1.msra.mxu0 0.0
      %4717 = vmatprep.subr.mxu0 0.0
      %4718 = vmatpush1.msra.mxu0 0.0
      %4719 = vmatprep.subr.mxu0 0.0
      %4720 = vmatpush1.msra.mxu0 0.0
      %4721 = vmatprep.subr.mxu0 0.0
      %4722 = vmatpush1.msra.mxu0 0.0
      %4723 = vmatprep.subr.mxu0 0.0
      %4724 = vmatpush1.msra.mxu0 0.0
      %4725 = vmatprep.subr.mxu0 0.0
      %4726 = vmatpush1.msra.mxu0 0.0
      %4727 = vmatprep.subr.mxu0 0.0
      %4728 = vmatpush1.msra.mxu0 0.0
      %4729 = vmatprep.subr.mxu0 0.0
      %4730 = vmatpush1.msra.mxu0 0.0
      %4731 = vmatprep.subr.mxu0 0.0
      %4732 = vmatpush1.msra.mxu0 0.0
      %4733 = vmatprep.subr.mxu0 0.0
      %4734 = vmatpush1.msra.mxu0 0.0
      %4735 = vmatprep.subr.mxu0 0.0
      %4736 = vmatpush1.msra.mxu0 0.0
      %4737 = vmatprep.subr.mxu0 0.0
      %4738 = vmatpush1.msra.mxu0 0.0
      %4739 = vmatprep.subr.mxu0 0.0
      %4740 = vmatpush1.msra.mxu0 0.0
      %4741 = vmatprep.subr.mxu0 0.0
      %4742 = vmatpush1.msra.mxu0 0.0
      %4743 = vmatprep.subr.mxu0 0.0
      %4744 = vmatpush1.msra.mxu0 0.0
      %4745 = vmatprep.subr.mxu0 0.0
      %4746 = vmatpush1.msra.mxu0 0.0
      %4747 = vmatprep.subr.mxu0 0.0
      %4748 = vmatpush1.msra.mxu0 0.0
      %4749 = vmatprep.subr.mxu0 0.0
      %4750 = vmatpush1.msra.mxu0 0.0
      %4751 = vmatprep.subr.mxu0 0.0
      %4752 = vmatpush1.msra.mxu0 0.0
      %4753 = vmatprep.subr.mxu0 0.0
      %4754 = vmatpush1.msra.mxu0 0.0
      %4755 = vmatprep.subr.mxu0 0.0
      %4756 = vmatpush1.msra.mxu0 0.0
      %4757 = vmatprep.subr.mxu0 0.0
      %4758 = vmatpush1.msra.mxu0 0.0
      %4759 = vmatprep.subr.mxu0 0.0
      %4760 = vmatpush1.msra.mxu0 0.0
      %4761 = vmatprep.subr.mxu0 0.0
      %4762 = vmatpush1.msra.mxu0 0.0
      %4763 = vmatprep.subr.mxu0 0.0
      %4764 = vmatpush1.msra.mxu0 0.0
      %4765 = vmatprep.subr.mxu0 0.0
      %4766 = vmatpush1.msra.mxu0 0.0
      %4767 = vmatprep.subr.mxu0 0.0
      %4768 = vmatpush1.msra.mxu0 0.0
      %4769 = vmatprep.mubr.f32.mxu0 0.0
      %4770 = vmatmul.mubr.f32.gmra.mrb[0].mxu0 %v4658
      %v4771 = vpop.f32.mrb[0].mxu0
      %v4772 = vadd.f32 %v4655, %v4771
      %v4773 = vpop.f32.mrb[0].mxu0
      %4774 = vmatprep.mubr.f32.mxu0 0.0
      %4775 = vmatmul.mubr.f32.gmra.mrb[0].mxu0 %v4661
      %v4776 = vpop.f32.mrb[0].mxu0
      %v4777 = vadd.f32 %v4655, %v4776
      %v4778 = vpop.f32.mrb[0].mxu0
      %4779 = vmatprep.mubr.f32.mxu0 0.0
      %4780 = vmatmul.mubr.f32.gmra.mrb[0].mxu0 %v4664
      %v4781 = vpop.f32.mrb[0].mxu0
      %v4782 = vadd.f32 %v4655, %v4781
      %v4783 = vpop.f32.mrb[0].mxu0
      %4784 = vmatprep.mubr.f32.mxu0 0.0
      %4785 = vmatmul.mubr.f32.gmra.mrb[0].mxu0 %v4667
      %v4786 = vpop.f32.mrb[0].mxu0
      %v4787 = vadd.f32 %v4655, %v4786
      %v4788 = vpop.f32.mrb[0].mxu0
      %4789 = vmatprep.mubr.f32.mxu0 0.0
      %4790 = vmatmul.mubr.f32.gmra.mrb[0].mxu0 %v4670
      %v4791 = vpop.f32.mrb[0].mxu0
      %v4792 = vadd.f32 %v4655, %v4791
      %v4793 = vpop.f32.mrb[0].mxu0
      %4794 = vmatprep.mubr.f32.mxu0 0.0
      %4795 = vmatmul.mubr.f32.gmra.mrb[0].mxu0 %v4673
      %v4796 = vpop.f32.mrb[0].mxu0
      %v4797 = vadd.f32 %v4655, %v4796
      %v4798 = vpop.f32.mrb[0].mxu0
      %4799 = vmatprep.mubr.f32.mxu0 0.0
      %4800 = vmatmul.mubr.f32.gmra.mrb[0].mxu0 %v4676
      %v4801 = vpop.f32.mrb[0].mxu0
      %v4802 = vadd.f32 %v4655, %v4801
      %v4803 = vpop.f32.mrb[0].mxu0
      %4804 = vmatprep.mubr.f32.mxu0 0.0
      %4805 = vmatmul.mubr.f32.gmra.mrb[0].mxu0 %v4679
      %v4806 = vpop.f32.mrb[0].mxu0
      %v4807 = vadd.f32 %v4655, %v4806
      %v4808 = vpop.f32.mrb[0].mxu0
      %4809 = vmatprep.mubr.f32.mxu0 0.0
      %4810 = vmatmul.mubr.f32.gmra.mrb[0].mxu0 %v4682
      %v4811 = vpop.f32.mrb[0].mxu0
      %v4812 = vadd.f32 %v4655, %v4811
      %v4813 = vpop.f32.mrb[0].mxu0
      %4814 = vmatprep.mubr.f32.mxu0 0.0
      %4815 = vmatmul.mubr.f32.gmra.mrb[0].mxu0 %v4685
      %v4816 = vpop.f32.mrb[0].mxu0
      %v4817 = vadd.f32 %v4655, %v4816
      %v4818 = vpop.f32.mrb[0].mxu0
      %4819 = vmatprep.mubr.f32.mxu0 0.0
      %4820 = vmatmul.mubr.f32.gmra.mrb[0].mxu0 %v4688
      %v4821 = vpop.f32.mrb[0].mxu0
      %v4822 = vadd.f32 %v4655, %v4821
      %v4823 = vpop.f32.mrb[0].mxu0
      %4824 = vmatprep.mubr.f32.mxu0 0.0
      %4825 = vmatmul.mubr.f32.gmra.mrb[0].mxu0 %v4691
      %v4826 = vpop.f32.mrb[0].mxu0
      %v4827 = vadd.f32 %v4655, %v4826
      %v4828 = vpop.f32.mrb[0].mxu0
      %4829 = vmatprep.mubr.f32.mxu0 0.0
      %4830 = vmatmul.mubr.f32.gmra.mrb[0].mxu0 %v4694
      %v4831 = vpop.f32.mrb[0].mxu0
      %v4832 = vadd.f32 %v4655, %v4831
      %v4833 = vpop.f32.mrb[0].mxu0
      %4834 = vmatprep.mubr.f32.mxu0 0.0
      %4835 = vmatmul.mubr.f32.gmra.mrb[0].mxu0 %v4697
      %v4836 = vpop.f32.mrb[0].mxu0
      %v4837 = vadd.f32 %v4655, %v4836
      %v4838 = vpop.f32.mrb[0].mxu0
      %4839 = vmatprep.mubr.f32.mxu0 0.0
      %4840 = vmatmul.mubr.f32.gmra.mrb[0].mxu0 %v4700
      %v4841 = vpop.f32.mrb[0].mxu0
      %v4842 = vadd.f32 %v4655, %v4841
      %v4843 = vpop.f32.mrb[0].mxu0
      %4844 = vmatprep.mubr.f32.mxu0 0.0
      %4845 = vmatmul.mubr.f32.gmra.mrb[0].mxu0 %v4703
      %v4846 = vpop.f32.mrb[0].mxu0
      %v4847 = vadd.f32 %v4655, %v4846
      %v4848 = vpop.f32.mrb[0].mxu0
      %4849 = vdwg.mxu0
      %v4850 = vmax.f32 %v4772, 0.0
      %v4851 = vmax.f32 %v4777, 0.0
      %v4852 = vmax.f32 %v4782, 0.0
      %v4853 = vmax.f32 %v4787, 0.0
      %v4854 = vmax.f32 %v4792, 0.0
      %v4855 = vmax.f32 %v4797, 0.0
      %v4856 = vmax.f32 %v4802, 0.0
      %v4857 = vmax.f32 %v4807, 0.0
      %v4858 = vmax.f32 %v4812, 0.0
      %v4859 = vmax.f32 %v4817, 0.0
      %v4860 = vmax.f32 %v4822, 0.0
      %v4861 = vmax.f32 %v4827, 0.0
      %v4862 = vmax.f32 %v4832, 0.0
      %v4863 = vmax.f32 %v4837, 0.0
      %v4864 = vmax.f32 %v4842, 0.0
      %v4865 = vmax.f32 %v4847, 0.0
      %v4866 = vld [vmem:[%s7] sm:$0xff]
      %v4867 = vld [vmem:[%s7 + $0x8] sm:$0xff]
      %v4868 = vld [vmem:[%s7 + $0x10] sm:$0xff]
      %v4869 = vld [vmem:[%s7 + $0x18] sm:$0xff]
      %v4870 = vld [vmem:[%s7 + $0x20] sm:$0xff]
      %v4871 = vld [vmem:[%s7 + $0x28] sm:$0xff]
      %v4872 = vld [vmem:[%s7 + $0x30] sm:$0xff]
      %v4873 = vld [vmem:[%s7 + $0x38] sm:$0xff]
      %v4874 = vld [vmem:[%s8] sm:$0x1]
      %v4876 = vlaneseq
      %v4877 = vshrl.u32 %v4876, 7
      %v4878 = vsub.s32 0, %v4877
      %v4879 = vrot.slane %v4874, %v4878
      %v4882 = vsel %vm3123, %v4850, 0
      %v4885 = vsel %vm3123, %v4851, 0
      %v4888 = vsel %vm3123, %v4852, 0
      %v4891 = vsel %vm3123, %v4853, 0
      %v4894 = vsel %vm3123, %v4854, 0
      %v4897 = vsel %vm3123, %v4855, 0
      %v4900 = vsel %vm3123, %v4856, 0
      %v4903 = vsel %vm3123, %v4857, 0
      %v4906 = vsel %vm3123, %v4858, 0
      %v4909 = vsel %vm3123, %v4859, 0
      %v4912 = vsel %vm3123, %v4860, 0
      %v4915 = vsel %vm3123, %v4861, 0
      %v4918 = vsel %vm3123, %v4862, 0
      %v4921 = vsel %vm3123, %v4863, 0
      %v4924 = vsel %vm3123, %v4864, 0
      %v4927 = vsel %vm3123, %v4865, 0
      %4929 = vmatprep.subr.mxu0 0.0
      %4930 = vmatpush1.msra.mxu0 %v4866
      %4931 = vmatprep.subr.mxu0 0.0
      %4932 = vmatpush1.msra.mxu0 %v4867
      %4933 = vmatprep.subr.mxu0 0.0
      %4934 = vmatpush1.msra.mxu0 %v4868
      %4935 = vmatprep.subr.mxu0 0.0
      %4936 = vmatpush1.msra.mxu0 %v4869
      %4937 = vmatprep.subr.mxu0 0.0
      %4938 = vmatpush1.msra.mxu0 %v4870
      %4939 = vmatprep.subr.mxu0 0.0
      %4940 = vmatpush1.msra.mxu0 %v4871
      %4941 = vmatprep.subr.mxu0 0.0
      %4942 = vmatpush1.msra.mxu0 %v4872
      %4943 = vmatprep.subr.mxu0 0.0
      %4944 = vmatpush1.msra.mxu0 %v4873
      %4945 = vmatprep.subr.mxu0 0.0
      %4946 = vmatpush1.msra.mxu0 0.0
      %4947 = vmatprep.subr.mxu0 0.0
      %4948 = vmatpush1.msra.mxu0 0.0
      %4949 = vmatprep.subr.mxu0 0.0
      %4950 = vmatpush1.msra.mxu0 0.0
      %4951 = vmatprep.subr.mxu0 0.0
      %4952 = vmatpush1.msra.mxu0 0.0
      %4953 = vmatprep.subr.mxu0 0.0
      %4954 = vmatpush1.msra.mxu0 0.0
      %4955 = vmatprep.subr.mxu0 0.0
      %4956 = vmatpush1.msra.mxu0 0.0
      %4957 = vmatprep.subr.mxu0 0.0
      %4958 = vmatpush1.msra.mxu0 0.0
      %4959 = vmatprep.subr.mxu0 0.0
      %4960 = vmatpush1.msra.mxu0 0.0
      %4961 = vmatprep.subr.mxu0 0.0
      %4962 = vmatpush1.msra.mxu0 0.0
      %4963 = vmatprep.subr.mxu0 0.0
      %4964 = vmatpush1.msra.mxu0 0.0
      %4965 = vmatprep.subr.mxu0 0.0
      %4966 = vmatpush1.msra.mxu0 0.0
      %4967 = vmatprep.subr.mxu0 0.0
      %4968 = vmatpush1.msra.mxu0 0.0
      %4969 = vmatprep.subr.mxu0 0.0
      %4970 = vmatpush1.msra.mxu0 0.0
      %4971 = vmatprep.subr.mxu0 0.0
      %4972 = vmatpush1.msra.mxu0 0.0
      %4973 = vmatprep.subr.mxu0 0.0
      %4974 = vmatpush1.msra.mxu0 0.0
      %4975 = vmatprep.subr.mxu0 0.0
      %4976 = vmatpush1.msra.mxu0 0.0
      %4977 = vmatprep.subr.mxu0 0.0
      %4978 = vmatpush1.msra.mxu0 0.0
      %4979 = vmatprep.subr.mxu0 0.0
      %4980 = vmatpush1.msra.mxu0 0.0
      %4981 = vmatprep.subr.mxu0 0.0
      %4982 = vmatpush1.msra.mxu0 0.0
      %4983 = vmatprep.subr.mxu0 0.0
      %4984 = vmatpush1.msra.mxu0 0.0
      %4985 = vmatprep.subr.mxu0 0.0
      %4986 = vmatpush1.msra.mxu0 0.0
      %4987 = vmatprep.subr.mxu0 0.0
      %4988 = vmatpush1.msra.mxu0 0.0
      %4989 = vmatprep.subr.mxu0 0.0
      %4990 = vmatpush1.msra.mxu0 0.0
      %4991 = vmatprep.subr.mxu0 0.0
      %4992 = vmatpush1.msra.mxu0 0.0
      %4993 = vmatprep.mubr.f32.mxu0 0.0
      %4994 = vmatmul.mubr.f32.gmra.mrb[0].mxu0 %v4882
      %v4995 = vpop.f32.mrb[0].mxu0
      %v4996 = vadd.f32 %v4879, %v4995
      %v4997 = vpop.f32.mrb[0].mxu0
      %4998 = vmatprep.mubr.f32.mxu0 0.0
      %4999 = vmatmul.mubr.f32.gmra.mrb[0].mxu0 %v4885
      %v5000 = vpop.f32.mrb[0].mxu0
      %v5001 = vadd.f32 %v4879, %v5000
      %v5002 = vpop.f32.mrb[0].mxu0
      %5003 = vmatprep.mubr.f32.mxu0 0.0
      %5004 = vmatmul.mubr.f32.gmra.mrb[0].mxu0 %v4888
      %v5005 = vpop.f32.mrb[0].mxu0
      %v5006 = vadd.f32 %v4879, %v5005
      %v5007 = vpop.f32.mrb[0].mxu0
      %5008 = vmatprep.mubr.f32.mxu0 0.0
      %5009 = vmatmul.mubr.f32.gmra.mrb[0].mxu0 %v4891
      %v5010 = vpop.f32.mrb[0].mxu0
      %v5011 = vadd.f32 %v4879, %v5010
      %v5012 = vpop.f32.mrb[0].mxu0
      %5013 = vmatprep.mubr.f32.mxu0 0.0
      %5014 = vmatmul.mubr.f32.gmra.mrb[0].mxu0 %v4894
      %v5015 = vpop.f32.mrb[0].mxu0
      %v5016 = vadd.f32 %v4879, %v5015
      %v5017 = vpop.f32.mrb[0].mxu0
      %5018 = vmatprep.mubr.f32.mxu0 0.0
      %5019 = vmatmul.mubr.f32.gmra.mrb[0].mxu0 %v4897
      %v5020 = vpop.f32.mrb[0].mxu0
      %v5021 = vadd.f32 %v4879, %v5020
      %v5022 = vpop.f32.mrb[0].mxu0
      %5023 = vmatprep.mubr.f32.mxu0 0.0
      %5024 = vmatmul.mubr.f32.gmra.mrb[0].mxu0 %v4900
      %v5025 = vpop.f32.mrb[0].mxu0
      %v5026 = vadd.f32 %v4879, %v5025
      %v5027 = vpop.f32.mrb[0].mxu0
      %5028 = vmatprep.mubr.f32.mxu0 0.0
      %5029 = vmatmul.mubr.f32.gmra.mrb[0].mxu0 %v4903
      %v5030 = vpop.f32.mrb[0].mxu0
      %v5031 = vadd.f32 %v4879, %v5030
      %v5032 = vpop.f32.mrb[0].mxu0
      %5033 = vmatprep.mubr.f32.mxu0 0.0
      %5034 = vmatmul.mubr.f32.gmra.mrb[0].mxu0 %v4906
      %v5035 = vpop.f32.mrb[0].mxu0
      %v5036 = vadd.f32 %v4879, %v5035
      %v5037 = vpop.f32.mrb[0].mxu0
      %5038 = vmatprep.mubr.f32.mxu0 0.0
      %5039 = vmatmul.mubr.f32.gmra.mrb[0].mxu0 %v4909
      %v5040 = vpop.f32.mrb[0].mxu0
      %v5041 = vadd.f32 %v4879, %v5040
      %v5042 = vpop.f32.mrb[0].mxu0
      %5043 = vmatprep.mubr.f32.mxu0 0.0
      %5044 = vmatmul.mubr.f32.gmra.mrb[0].mxu0 %v4912
      %v5045 = vpop.f32.mrb[0].mxu0
      %v5046 = vadd.f32 %v4879, %v5045
      %v5047 = vpop.f32.mrb[0].mxu0
      %5048 = vmatprep.mubr.f32.mxu0 0.0
      %5049 = vmatmul.mubr.f32.gmra.mrb[0].mxu0 %v4915
      %v5050 = vpop.f32.mrb[0].mxu0
      %v5051 = vadd.f32 %v4879, %v5050
      %v5052 = vpop.f32.mrb[0].mxu0
      %5053 = vmatprep.mubr.f32.mxu0 0.0
      %5054 = vmatmul.mubr.f32.gmra.mrb[0].mxu0 %v4918
      %v5055 = vpop.f32.mrb[0].mxu0
      %v5056 = vadd.f32 %v4879, %v5055
      %v5057 = vpop.f32.mrb[0].mxu0
      %5058 = vmatprep.mubr.f32.mxu0 0.0
      %5059 = vmatmul.mubr.f32.gmra.mrb[0].mxu0 %v4921
      %v5060 = vpop.f32.mrb[0].mxu0
      %v5061 = vadd.f32 %v4879, %v5060
      %v5062 = vpop.f32.mrb[0].mxu0
      %5063 = vmatprep.mubr.f32.mxu0 0.0
      %5064 = vmatmul.mubr.f32.gmra.mrb[0].mxu0 %v4924
      %v5065 = vpop.f32.mrb[0].mxu0
      %v5066 = vadd.f32 %v4879, %v5065
      %v5067 = vpop.f32.mrb[0].mxu0
      %5068 = vmatprep.mubr.f32.mxu0 0.0
      %5069 = vmatmul.mubr.f32.gmra.mrb[0].mxu0 %v4927
      %v5070 = vpop.f32.mrb[0].mxu0
      %v5071 = vadd.f32 %v4879, %v5070
      %v5072 = vpop.f32.mrb[0].mxu0
      %5073 = vdwg.mxu0
      %5074 = vst [vmem:[%s337] sm:$0xff] %v4996
      %5075 = vst [vmem:[%s337 + $0x8] sm:$0xff] %v5001
      %5076 = vst [vmem:[%s337 + $0x10] sm:$0xff] %v5006
      %5077 = vst [vmem:[%s337 + $0x18] sm:$0xff] %v5011
      %5078 = vst [vmem:[%s337 + $0x20] sm:$0xff] %v5016
      %5079 = vst [vmem:[%s337 + $0x28] sm:$0xff] %v5021
      %5080 = vst [vmem:[%s337 + $0x30] sm:$0xff] %v5026
      %5081 = vst [vmem:[%s337 + $0x38] sm:$0xff] %v5031
      %5082 = vst [vmem:[%s337 + $0x40] sm:$0xff] %v5036
      %5083 = vst [vmem:[%s337 + $0x48] sm:$0xff] %v5041
      %5084 = vst [vmem:[%s337 + $0x50] sm:$0xff] %v5046
      %5085 = vst [vmem:[%s337 + $0x58] sm:$0xff] %v5051
      %5086 = vst [vmem:[%s337 + $0x60] sm:$0xff] %v5056
      %5087 = vst [vmem:[%s337 + $0x68] sm:$0xff] %v5061
      %5088 = vst [vmem:[%s337 + $0x70] sm:$0xff] %v5066
      %5089 = vst [vmem:[%s337 + $0x78] sm:$0xff] %v5071
      %s5090 = smul.u32 16, %s20
      %p5091 = scmp.lt.s32.totalorder %s5090, 31
      %s5092 = scalar_select %p5091, %s5090, 31
      %s5093 = smul.addr %s5092, 8
      %s5094 = scalar_lea.vmem %s9, %s5093
      // Predicated region
      $region57: #{cnn_forward.1} parent=55 // pred_check
        %p5095 = pneg %p232
      $region58: #{cnn_forward.1} parent=55 // pred_check_branch
        %5097 = sbr.rel (%p5095) target = $region60
      $region59: #{cnn_forward.1} parent=55 // pred_region
        %s5098 = smul.u32 16, %s20
      $region60: #{cnn_forward.1} parent=55 // pred_fallthru
        _
    $region56: #{cnn_forward.1} parent=5 // pred_fallthru
      _
    %p5099 = scmp.le.s32.totalorder 2, %s15
    // Predicated region
    $region61: #{cnn_forward.1} parent=5 // pred_check
      %p5100 = pneg %p5099
    $region62: #{cnn_forward.1} parent=5 // pred_check_branch
      %5102 = sbr.rel (%p5100) target = $region64
    $region63: #{cnn_forward.1} parent=5 // pred_region
      %s5103 = ssub.s32 %s15, 2
      // Predicated region
      $region65: #{cnn_forward.1} parent=63 // pred_check
        %p5104 = pneg %p238
      $region66: #{cnn_forward.1} parent=63 // pred_check_branch
        %5106 = sbr.rel (%p5104) target = $region68
      $region67: #{cnn_forward.1} parent=63 // pred_region
        %s5107 = smul.u32 16, %s21
        %p5108 = scmp.lt.s32.totalorder %s5107, 31
        %s5109 = scalar_select %p5108, %s5107, 31
        %s5110 = smul.addr %s5109, 8
        %s5111 = scalar_lea.vmem %s9, %s5110
      $region68: #{cnn_forward.1} parent=63 // pred_fallthru
        _
    $region64: #{cnn_forward.1} parent=5 // pred_fallthru
      _
  $region6: #{cnn_forward.1} parent=0 // loop_footer
    %s19 = sadd.s32 1, %s15
  $region7: #{cnn_forward.1} parent=0 // loop_footer_branch
    %14 = sbr.rel target = $region3
  $region8: #{cnn_forward.1} parent=0 // loop_exit
    _

</llo_original>
